<compile_context>
chip_gen: v7x
topology: tpu7x:2x2x1
jax: 0.10.0
libtpu: 0.0.40
codegen_flags: <defaults>
</compile_context>

<pallas_src>
import numpy as np
import jax
import jax.numpy as jnp
from jax.experimental import pallas as pl
from jax.experimental.pallas import tpu as pltpu


# ------------------------------------------------------------------
# Graph construction (host-side numpy glue).
# ------------------------------------------------------------------
def build_normalized_grid_adj(H, W):
    """Dense A_hat — used only by the pure-JAX reference."""
    N = H * W
    idx = np.arange(N).reshape(H, W)
    A = np.zeros((N, N), dtype=np.float64)
    for i in range(H):
        for j in range(W):
            for di in (-1, 0, 1):
                for dj in (-1, 0, 1):
                    ii, jj = i + di, j + dj
                    if 0 <= ii < H and 0 <= jj < W:
                        A[idx[i, j], idx[ii, jj]] = 1.0
    deg = A.sum(axis=1)
    dinv = 1.0 / np.sqrt(deg)
    A_hat = dinv[:, None] * A * dinv[None, :]
    return A_hat.astype(np.float32)


def build_grid_stencil(H, W):
    """9-point stencil form of A_hat.

    coef[k, n] = A_hat[n, n + shifts[k]]  (0 where the neighbor is invalid),
    so  (A_hat @ h)[n] == sum_k coef[k, n] * h[n + shifts[k]].
    Wrapped (circular) reads in the kernel are always masked by coef == 0.
    """
    N = H * W
    offsets = [(di, dj) for di in (-1, 0, 1) for dj in (-1, 0, 1)]
    deg = np.zeros((H, W), dtype=np.float64)
    for di, dj in offsets:
        i0, i1 = max(0, -di), min(H, H - di)
        j0, j1 = max(0, -dj), min(W, W - dj)
        deg[i0:i1, j0:j1] += 1.0
    dinv = 1.0 / np.sqrt(deg)
    coef = np.zeros((len(offsets), N), dtype=np.float32)
    shifts = []
    for k, (di, dj) in enumerate(offsets):
        shifts.append(di * W + dj)
        i0, i1 = max(0, -di), min(H, H - di)
        j0, j1 = max(0, -dj), min(W, W - dj)
        c = np.zeros((H, W), dtype=np.float64)
        c[i0:i1, j0:j1] = (dinv[i0:i1, j0:j1] *
                           dinv[i0 + di:i1 + di, j0 + dj:j1 + dj])
        coef[k] = c.reshape(-1)
    return coef, tuple(int(s) for s in shifts)


# ------------------------------------------------------------------
# Pallas kernel: one batch element per grid step (parallel axis).
# All tensors use feature-in-sublane / node-in-lane layout.
# ------------------------------------------------------------------
def make_gnn_kernel(num_layers, shifts):
    center = shifts.index(0)

    def gnn_kernel(x_ref, coef_ref, wint_ref, bin_ref, wgt_ref, bg_ref,
                   wout_ref, bout_ref, out_ref):
        # x_ref:    (1, C, N)     input channels for this batch element
        # coef_ref: (9, N)        stencil coefficients (encode A_hat)
        # wint_ref: (HD, C)       padded input-projection weight (transposed)
        # bin_ref:  (HD, 1)       padded input-projection bias
        # wgt_ref:  (L, HD, HD)   padded, transposed GCN weights
        # bg_ref:   (L, HD, 1)    padded GCN biases
        # wout_ref: (C, HD)       padded output-projection weight (transposed)
        # bout_ref: (C, 1)        output-projection bias
        # out_ref:  (1, C, N)
        c_in = x_ref.shape[1]

        x = x_ref[0]                       # (C, N)
        coef = coef_ref[...]               # (9, N)
        # Hoist the per-tap coefficient rows (reused by every layer).
        taps = [coef[k:k + 1, :] for k in range(len(shifts))]
        wint = wint_ref[...]               # (HD, C)

        # ---- input projection on the VPU (contraction dim 3: skip the MXU),
        #      bias folded into the first FMA ----
        h = wint[:, 0:1] * x[0:1, :] + bin_ref[...]          # (HD, N)
        for c in range(1, c_in):
            h = h + wint[:, c:c + 1] * x[c:c + 1, :]

        # ---- GCN layers: h <- relu( stencil(W_l^T @ h) + b_l ) ----
        # (Static Python loop is fine at L=2; switch to lax.fori_loop with
        #  dynamic wgt_ref[l] indexing for much larger L.)
        for l in range(num_layers):
            hw = jnp.dot(wgt_ref[l], h,
                         preferred_element_type=jnp.float32)  # (HD, N) on MXU
            # 9-neighbor stencil == right-multiply by (symmetric) A_hat.
            # Center tap seeds the accumulator together with the layer bias.
            y = taps[center] * hw + bg_ref[l]
            for k, s in enumerate(shifts):
                if s == 0:
                    continue
                # Static-shift lane rotation; wrap-around lanes are masked by
                # the zero coefficients at image boundaries.
                y = y + taps[k] * jnp.roll(hw, -s, axis=1)
            h = jnp.maximum(y, 0.0)
            # TODO(synk): dropout is identity in eval mode; training-mode
            # stochastic dropout is intentionally not implemented.

        # ---- output projection: (C, HD) @ (HD, N) -> lane-dense (C, N) ----
        out = jnp.dot(wout_ref[...], h,
                      preferred_element_type=jnp.float32) + bout_ref[...]
        out_ref[0] = out

    return gnn_kernel


def gnn_forward(x_nchw, coef, shifts, w_in, b_in, w_g, b_g, w_out, b_out):
    B, C, H, W = x_nchw.shape
    N = H * W
    Hd = w_in.shape[1]
    L = w_g.shape[0]
    n_tap = coef.shape[0]

    # Pad the hidden dim to the 128-wide MXU tile (zero rows/cols are inert).
    HD = max(128, ((Hd + 127) // 128) * 128)
    ph = HD - Hd

    # Host-side (XLA) weight repacking into the transposed/padded layout.
    w_in_t = jnp.pad(w_in.T, ((0, ph), (0, 0)))                        # (HD, C)
    b_in_p = jnp.pad(b_in.reshape(Hd, 1), ((0, ph), (0, 0)))            # (HD, 1)
    w_g_t = jnp.pad(jnp.transpose(w_g, (0, 2, 1)),
                    ((0, 0), (0, ph), (0, ph)))                         # (L, HD, HD)
    b_g_p = jnp.pad(b_g.reshape(L, Hd, 1), ((0, 0), (0, ph), (0, 0)))   # (L, HD, 1)
    w_out_t = jnp.pad(w_out.T, ((0, 0), (0, ph)))                       # (C, HD)
    b_out_p = b_out.reshape(C, 1)                                       # (C, 1)

    # NCHW -> (B, C, N): a free reshape (no HBM transpose). Nodes sit in the
    # lane axis inside the kernel, so loads/stores are lane-dense.
    x_nodes = x_nchw.reshape(B, C, N)

    kernel = make_gnn_kernel(L, tuple(int(s) for s in shifts))

    out_nodes = pl.pallas_call(
        kernel,
        out_shape=jax.ShapeDtypeStruct((B, C, N), jnp.float32),
        grid_spec=pltpu.PrefetchScalarGridSpec(
            num_scalar_prefetch=0,
            grid=(B,),                       # batch axis: parallel (2 TCs on v7x)
            in_specs=[
                pl.BlockSpec((1, C, N), lambda b: (b, 0, 0)),        # x
                pl.BlockSpec((n_tap, N), lambda b: (0, 0)),          # stencil coef
                pl.BlockSpec((HD, C), lambda b: (0, 0)),             # w_in^T
                pl.BlockSpec((HD, 1), lambda b: (0, 0)),             # b_in
                pl.BlockSpec((L, HD, HD), lambda b: (0, 0, 0)),      # w_g^T
                pl.BlockSpec((L, HD, 1), lambda b: (0, 0, 0)),       # b_g
                pl.BlockSpec((C, HD), lambda b: (0, 0)),             # w_out^T
                pl.BlockSpec((C, 1), lambda b: (0, 0)),              # b_out
            ],
            out_specs=pl.BlockSpec((1, C, N), lambda b: (b, 0, 0)),
        ),
        compiler_params=pltpu.CompilerParams(
            dimension_semantics=("parallel",)),
    )(x_nodes, coef, w_in_t, b_in_p, w_g_t, b_g_p, w_out_t, b_out_p)

    # (B, C, N) -> (B, C, H, W): free reshape, no transpose needed.
    return out_nodes.reshape(B, C, H, W)


# ------------------------------------------------------------------
# Pure-JAX reference (dense normalized adjacency, original layout).
# ------------------------------------------------------------------
def reference_forward(x_nchw, adj, w_in, b_in, w_g, b_g, w_out, b_out):
    B, C, H, W = x_nchw.shape
    N = H * W
    h = jnp.transpose(x_nchw.reshape(B, C, N), (0, 2, 1)) @ w_in + b_in
    for l in range(w_g.shape[0]):
        h = jnp.einsum("nm,bmh->bnh", adj, h @ w_g[l]) + b_g[l]
        h = jnp.maximum(h, 0.0)
    out = h @ w_out + b_out
    return jnp.transpose(out, (0, 2, 1)).reshape(B, C, H, W)


if __name__ == "__main__":
    # Small, deterministic config. N = H*W = 256 is a multiple of 128
    # (lane-dense node axis).
    B, C = 2, 3
    H = W = 16
    N = H * W
    HIDDEN = 32
    NUM_LAYERS = 2

    key = jax.random.PRNGKey(0)
    k = jax.random.split(key, 8)

    x = jax.random.normal(k[0], (B, C, H, W), dtype=jnp.float32)

    # Deterministic parameter init (synthetic; shapes from the module).
    w_in = 0.2 * jax.random.normal(k[1], (C, HIDDEN), dtype=jnp.float32)
    b_in = 0.1 * jax.random.normal(k[2], (1, HIDDEN), dtype=jnp.float32)
    w_g = 0.2 * jax.random.normal(k[3], (NUM_LAYERS, HIDDEN, HIDDEN),
                                  dtype=jnp.float32)
    b_g = 0.1 * jax.random.normal(k[4], (NUM_LAYERS, 1, HIDDEN),
                                  dtype=jnp.float32)
    w_out = 0.2 * jax.random.normal(k[5], (HIDDEN, C), dtype=jnp.float32)
    b_out = 0.1 * jax.random.normal(k[6], (1, C), dtype=jnp.float32)

    coef_np, shifts = build_grid_stencil(H, W)
    coef = jnp.asarray(coef_np)

    out = gnn_forward(x, coef, shifts, w_in, b_in, w_g, b_g, w_out, b_out)
    out = jax.block_until_ready(out)

    adj = jnp.asarray(build_normalized_grid_adj(H, W))
    ref = reference_forward(x, adj, w_in, b_in, w_g, b_g, w_out, b_out)
    assert out.shape == (B, C, H, W)
    np.testing.assert_allclose(np.asarray(out), np.asarray(ref),
                               rtol=1e-5, atol=2e-5)

    print("KERNEL_OK")
</pallas_src>

<mosaic_0001>
module attributes {stable_mosaic.version = 11 : i64} {
  func.func @gnn_kernel(%arg0: i32, %arg1: memref<1x3x256xf32, #tpu.memory_space<vmem>>, %arg2: memref<9x256xf32, #tpu.memory_space<vmem>>, %arg3: memref<128x3xf32, #tpu.memory_space<vmem>>, %arg4: memref<128x1xf32, #tpu.memory_space<vmem>>, %arg5: memref<2x128x128xf32, #tpu.memory_space<vmem>>, %arg6: memref<2x128x1xf32, #tpu.memory_space<vmem>>, %arg7: memref<3x128xf32, #tpu.memory_space<vmem>>, %arg8: memref<3x1xf32, #tpu.memory_space<vmem>>, %arg9: memref<1x3x256xf32, #tpu.memory_space<vmem>>) attributes {dimension_semantics = [#tpu.dimension_semantics<parallel>], iteration_bounds = array<i64: 2>, scalar_prefetch = 0 : i64, scratch_operands = 0 : i64, tpu.core_type = #tpu.core_type<tc>, window_params = [{transform_indices = @transform_0, window_bounds = array<i64: 1, 3, 256>}, {pipeline_mode = #tpu.pipeline_mode<synchronous>, transform_indices = @transform_1, window_bounds = array<i64: 9, 256>}, {pipeline_mode = #tpu.pipeline_mode<synchronous>, transform_indices = @transform_2, window_bounds = array<i64: 128, 3>}, {pipeline_mode = #tpu.pipeline_mode<synchronous>, transform_indices = @transform_3, window_bounds = array<i64: 128, 1>}, {pipeline_mode = #tpu.pipeline_mode<synchronous>, transform_indices = @transform_4, window_bounds = array<i64: 2, 128, 128>}, {pipeline_mode = #tpu.pipeline_mode<synchronous>, transform_indices = @transform_5, window_bounds = array<i64: 2, 128, 1>}, {pipeline_mode = #tpu.pipeline_mode<synchronous>, transform_indices = @transform_6, window_bounds = array<i64: 3, 128>}, {pipeline_mode = #tpu.pipeline_mode<synchronous>, transform_indices = @transform_7, window_bounds = array<i64: 3, 1>}, {transform_indices = @transform_8, window_bounds = array<i64: 1, 3, 256>}]} {
    %c0 = arith.constant 0 : index
    %c0_0 = arith.constant 0 : index
    %c0_1 = arith.constant 0 : index
    %0 = vector.load %arg1[%c0, %c0_0, %c0_1] : memref<1x3x256xf32, #tpu.memory_space<vmem>>, vector<1x3x256xf32>
    %1 = vector.shape_cast %0 : vector<1x3x256xf32> to vector<3x256xf32>
    %c0_2 = arith.constant 0 : index
    %c0_3 = arith.constant 0 : index
    %2 = vector.load %arg2[%c0_2, %c0_3] : memref<9x256xf32, #tpu.memory_space<vmem>>, vector<9x256xf32>
    %3 = vector.extract_strided_slice %2 {offsets = [0, 0], sizes = [1, 256], strides = [1, 1]} : vector<9x256xf32> to vector<1x256xf32>
    %4 = vector.extract_strided_slice %2 {offsets = [1, 0], sizes = [1, 256], strides = [1, 1]} : vector<9x256xf32> to vector<1x256xf32>
    %5 = vector.extract_strided_slice %2 {offsets = [2, 0], sizes = [1, 256], strides = [1, 1]} : vector<9x256xf32> to vector<1x256xf32>
    %6 = vector.extract_strided_slice %2 {offsets = [3, 0], sizes = [1, 256], strides = [1, 1]} : vector<9x256xf32> to vector<1x256xf32>
    %7 = vector.extract_strided_slice %2 {offsets = [4, 0], sizes = [1, 256], strides = [1, 1]} : vector<9x256xf32> to vector<1x256xf32>
    %8 = vector.extract_strided_slice %2 {offsets = [5, 0], sizes = [1, 256], strides = [1, 1]} : vector<9x256xf32> to vector<1x256xf32>
    %9 = vector.extract_strided_slice %2 {offsets = [6, 0], sizes = [1, 256], strides = [1, 1]} : vector<9x256xf32> to vector<1x256xf32>
    %10 = vector.extract_strided_slice %2 {offsets = [7, 0], sizes = [1, 256], strides = [1, 1]} : vector<9x256xf32> to vector<1x256xf32>
    %11 = vector.extract_strided_slice %2 {offsets = [8, 0], sizes = [1, 256], strides = [1, 1]} : vector<9x256xf32> to vector<1x256xf32>
    %c0_4 = arith.constant 0 : index
    %c0_5 = arith.constant 0 : index
    %12 = vector.load %arg3[%c0_4, %c0_5] : memref<128x3xf32, #tpu.memory_space<vmem>>, vector<128x3xf32>
    %13 = vector.extract_strided_slice %12 {offsets = [0, 0], sizes = [128, 1], strides = [1, 1]} : vector<128x3xf32> to vector<128x1xf32>
    %14 = vector.extract_strided_slice %1 {offsets = [0, 0], sizes = [1, 256], strides = [1, 1]} : vector<3x256xf32> to vector<1x256xf32>
    %15 = vector.broadcast %13 : vector<128x1xf32> to vector<128x256xf32>
    %16 = vector.broadcast %14 : vector<1x256xf32> to vector<128x256xf32>
    %17 = arith.mulf %15, %16 : vector<128x256xf32>
    %c0_6 = arith.constant 0 : index
    %c0_7 = arith.constant 0 : index
    %18 = vector.load %arg4[%c0_6, %c0_7] : memref<128x1xf32, #tpu.memory_space<vmem>>, vector<128x1xf32>
    %19 = vector.broadcast %18 : vector<128x1xf32> to vector<128x256xf32>
    %20 = arith.addf %17, %19 : vector<128x256xf32>
    %21 = vector.extract_strided_slice %12 {offsets = [0, 1], sizes = [128, 1], strides = [1, 1]} : vector<128x3xf32> to vector<128x1xf32>
    %22 = vector.extract_strided_slice %1 {offsets = [1, 0], sizes = [1, 256], strides = [1, 1]} : vector<3x256xf32> to vector<1x256xf32>
    %23 = vector.broadcast %21 : vector<128x1xf32> to vector<128x256xf32>
    %24 = vector.broadcast %22 : vector<1x256xf32> to vector<128x256xf32>
    %25 = arith.mulf %23, %24 : vector<128x256xf32>
    %26 = arith.addf %20, %25 : vector<128x256xf32>
    %27 = vector.extract_strided_slice %12 {offsets = [0, 2], sizes = [128, 1], strides = [1, 1]} : vector<128x3xf32> to vector<128x1xf32>
    %28 = vector.extract_strided_slice %1 {offsets = [2, 0], sizes = [1, 256], strides = [1, 1]} : vector<3x256xf32> to vector<1x256xf32>
    %29 = vector.broadcast %27 : vector<128x1xf32> to vector<128x256xf32>
    %30 = vector.broadcast %28 : vector<1x256xf32> to vector<128x256xf32>
    %31 = arith.mulf %29, %30 : vector<128x256xf32>
    %32 = arith.addf %26, %31 : vector<128x256xf32>
    %c0_8 = arith.constant 0 : index
    %c0_9 = arith.constant 0 : index
    %c0_10 = arith.constant 0 : index
    %33 = vector.load %arg5[%c0_8, %c0_9, %c0_10] : memref<2x128x128xf32, #tpu.memory_space<vmem>>, vector<1x128x128xf32>
    %34 = vector.shape_cast %33 : vector<1x128x128xf32> to vector<128x128xf32>
    %cst = arith.constant dense<0.000000e+00> : vector<128x256xf32>
    %35 = tpu.matmul %34, %32, %cst {dimension_numbers = #tpu.dot_dimension_numbers<[1], [0], [0], [1], [0, 0, 1, 1], [], []>} : vector<128x128xf32>, vector<128x256xf32>, vector<128x256xf32> -> vector<128x256xf32>
    %36 = vector.broadcast %7 : vector<1x256xf32> to vector<128x256xf32>
    %37 = arith.mulf %36, %35 : vector<128x256xf32>
    %c0_11 = arith.constant 0 : index
    %c0_12 = arith.constant 0 : index
    %c0_13 = arith.constant 0 : index
    %38 = vector.load %arg6[%c0_11, %c0_12, %c0_13] : memref<2x128x1xf32, #tpu.memory_space<vmem>>, vector<1x128x1xf32>
    %39 = vector.shape_cast %38 : vector<1x128x1xf32> to vector<128x1xf32>
    %40 = vector.broadcast %39 : vector<128x1xf32> to vector<128x256xf32>
    %41 = arith.addf %37, %40 : vector<128x256xf32>
    %42 = vector.extract_strided_slice %35 {offsets = [0, 239], sizes = [128, 17], strides = [1, 1]} : vector<128x256xf32> to vector<128x17xf32>
    %43 = vector.extract_strided_slice %35 {offsets = [0, 0], sizes = [128, 239], strides = [1, 1]} : vector<128x256xf32> to vector<128x239xf32>
    %44 = tpu.concatenate %42, %43 in 1 : vector<128x17xf32>, vector<128x239xf32> -> vector<128x256xf32>
    %45 = vector.broadcast %3 : vector<1x256xf32> to vector<128x256xf32>
    %46 = arith.mulf %45, %44 : vector<128x256xf32>
    %47 = arith.addf %41, %46 : vector<128x256xf32>
    %48 = vector.extract_strided_slice %35 {offsets = [0, 240], sizes = [128, 16], strides = [1, 1]} : vector<128x256xf32> to vector<128x16xf32>
    %49 = vector.extract_strided_slice %35 {offsets = [0, 0], sizes = [128, 240], strides = [1, 1]} : vector<128x256xf32> to vector<128x240xf32>
    %50 = tpu.concatenate %48, %49 in 1 : vector<128x16xf32>, vector<128x240xf32> -> vector<128x256xf32>
    %51 = vector.broadcast %4 : vector<1x256xf32> to vector<128x256xf32>
    %52 = arith.mulf %51, %50 : vector<128x256xf32>
    %53 = arith.addf %47, %52 : vector<128x256xf32>
    %54 = vector.extract_strided_slice %35 {offsets = [0, 241], sizes = [128, 15], strides = [1, 1]} : vector<128x256xf32> to vector<128x15xf32>
    %55 = vector.extract_strided_slice %35 {offsets = [0, 0], sizes = [128, 241], strides = [1, 1]} : vector<128x256xf32> to vector<128x241xf32>
    %56 = tpu.concatenate %54, %55 in 1 : vector<128x15xf32>, vector<128x241xf32> -> vector<128x256xf32>
    %57 = vector.broadcast %5 : vector<1x256xf32> to vector<128x256xf32>
    %58 = arith.mulf %57, %56 : vector<128x256xf32>
    %59 = arith.addf %53, %58 : vector<128x256xf32>
    %60 = vector.extract_strided_slice %35 {offsets = [0, 255], sizes = [128, 1], strides = [1, 1]} : vector<128x256xf32> to vector<128x1xf32>
    %61 = vector.extract_strided_slice %35 {offsets = [0, 0], sizes = [128, 255], strides = [1, 1]} : vector<128x256xf32> to vector<128x255xf32>
    %62 = tpu.concatenate %60, %61 in 1 : vector<128x1xf32>, vector<128x255xf32> -> vector<128x256xf32>
    %63 = vector.broadcast %6 : vector<1x256xf32> to vector<128x256xf32>
    %64 = arith.mulf %63, %62 : vector<128x256xf32>
    %65 = arith.addf %59, %64 : vector<128x256xf32>
    %66 = vector.extract_strided_slice %35 {offsets = [0, 1], sizes = [128, 255], strides = [1, 1]} : vector<128x256xf32> to vector<128x255xf32>
    %67 = vector.extract_strided_slice %35 {offsets = [0, 0], sizes = [128, 1], strides = [1, 1]} : vector<128x256xf32> to vector<128x1xf32>
    %68 = tpu.concatenate %66, %67 in 1 : vector<128x255xf32>, vector<128x1xf32> -> vector<128x256xf32>
    %69 = vector.broadcast %8 : vector<1x256xf32> to vector<128x256xf32>
    %70 = arith.mulf %69, %68 : vector<128x256xf32>
    %71 = arith.addf %65, %70 : vector<128x256xf32>
    %72 = vector.extract_strided_slice %35 {offsets = [0, 15], sizes = [128, 241], strides = [1, 1]} : vector<128x256xf32> to vector<128x241xf32>
    %73 = vector.extract_strided_slice %35 {offsets = [0, 0], sizes = [128, 15], strides = [1, 1]} : vector<128x256xf32> to vector<128x15xf32>
    %74 = tpu.concatenate %72, %73 in 1 : vector<128x241xf32>, vector<128x15xf32> -> vector<128x256xf32>
    %75 = vector.broadcast %9 : vector<1x256xf32> to vector<128x256xf32>
    %76 = arith.mulf %75, %74 : vector<128x256xf32>
    %77 = arith.addf %71, %76 : vector<128x256xf32>
    %78 = vector.extract_strided_slice %35 {offsets = [0, 16], sizes = [128, 240], strides = [1, 1]} : vector<128x256xf32> to vector<128x240xf32>
    %79 = vector.extract_strided_slice %35 {offsets = [0, 0], sizes = [128, 16], strides = [1, 1]} : vector<128x256xf32> to vector<128x16xf32>
    %80 = tpu.concatenate %78, %79 in 1 : vector<128x240xf32>, vector<128x16xf32> -> vector<128x256xf32>
    %81 = vector.broadcast %10 : vector<1x256xf32> to vector<128x256xf32>
    %82 = arith.mulf %81, %80 : vector<128x256xf32>
    %83 = arith.addf %77, %82 : vector<128x256xf32>
    %84 = vector.extract_strided_slice %35 {offsets = [0, 17], sizes = [128, 239], strides = [1, 1]} : vector<128x256xf32> to vector<128x239xf32>
    %85 = vector.extract_strided_slice %35 {offsets = [0, 0], sizes = [128, 17], strides = [1, 1]} : vector<128x256xf32> to vector<128x17xf32>
    %86 = tpu.concatenate %84, %85 in 1 : vector<128x239xf32>, vector<128x17xf32> -> vector<128x256xf32>
    %87 = vector.broadcast %11 : vector<1x256xf32> to vector<128x256xf32>
    %88 = arith.mulf %87, %86 : vector<128x256xf32>
    %89 = arith.addf %83, %88 : vector<128x256xf32>
    %cst_14 = arith.constant 0.000000e+00 : f32
    %90 = vector.broadcast %cst_14 : f32 to vector<128x256xf32>
    %91 = arith.maximumf %89, %90 : vector<128x256xf32>
    %c1 = arith.constant 1 : index
    %c0_15 = arith.constant 0 : index
    %c0_16 = arith.constant 0 : index
    %92 = vector.load %arg5[%c1, %c0_15, %c0_16] : memref<2x128x128xf32, #tpu.memory_space<vmem>>, vector<1x128x128xf32>
    %93 = vector.shape_cast %92 : vector<1x128x128xf32> to vector<128x128xf32>
    %cst_17 = arith.constant dense<0.000000e+00> : vector<128x256xf32>
    %94 = tpu.matmul %93, %91, %cst_17 {dimension_numbers = #tpu.dot_dimension_numbers<[1], [0], [0], [1], [0, 0, 1, 1], [], []>} : vector<128x128xf32>, vector<128x256xf32>, vector<128x256xf32> -> vector<128x256xf32>
    %95 = vector.broadcast %7 : vector<1x256xf32> to vector<128x256xf32>
    %96 = arith.mulf %95, %94 : vector<128x256xf32>
    %c1_18 = arith.constant 1 : index
    %c0_19 = arith.constant 0 : index
    %c0_20 = arith.constant 0 : index
    %97 = vector.load %arg6[%c1_18, %c0_19, %c0_20] : memref<2x128x1xf32, #tpu.memory_space<vmem>>, vector<1x128x1xf32>
    %98 = vector.shape_cast %97 : vector<1x128x1xf32> to vector<128x1xf32>
    %99 = vector.broadcast %98 : vector<128x1xf32> to vector<128x256xf32>
    %100 = arith.addf %96, %99 : vector<128x256xf32>
    %101 = vector.extract_strided_slice %94 {offsets = [0, 239], sizes = [128, 17], strides = [1, 1]} : vector<128x256xf32> to vector<128x17xf32>
    %102 = vector.extract_strided_slice %94 {offsets = [0, 0], sizes = [128, 239], strides = [1, 1]} : vector<128x256xf32> to vector<128x239xf32>
    %103 = tpu.concatenate %101, %102 in 1 : vector<128x17xf32>, vector<128x239xf32> -> vector<128x256xf32>
    %104 = vector.broadcast %3 : vector<1x256xf32> to vector<128x256xf32>
    %105 = arith.mulf %104, %103 : vector<128x256xf32>
    %106 = arith.addf %100, %105 : vector<128x256xf32>
    %107 = vector.extract_strided_slice %94 {offsets = [0, 240], sizes = [128, 16], strides = [1, 1]} : vector<128x256xf32> to vector<128x16xf32>
    %108 = vector.extract_strided_slice %94 {offsets = [0, 0], sizes = [128, 240], strides = [1, 1]} : vector<128x256xf32> to vector<128x240xf32>
    %109 = tpu.concatenate %107, %108 in 1 : vector<128x16xf32>, vector<128x240xf32> -> vector<128x256xf32>
    %110 = vector.broadcast %4 : vector<1x256xf32> to vector<128x256xf32>
    %111 = arith.mulf %110, %109 : vector<128x256xf32>
    %112 = arith.addf %106, %111 : vector<128x256xf32>
    %113 = vector.extract_strided_slice %94 {offsets = [0, 241], sizes = [128, 15], strides = [1, 1]} : vector<128x256xf32> to vector<128x15xf32>
    %114 = vector.extract_strided_slice %94 {offsets = [0, 0], sizes = [128, 241], strides = [1, 1]} : vector<128x256xf32> to vector<128x241xf32>
    %115 = tpu.concatenate %113, %114 in 1 : vector<128x15xf32>, vector<128x241xf32> -> vector<128x256xf32>
    %116 = vector.broadcast %5 : vector<1x256xf32> to vector<128x256xf32>
    %117 = arith.mulf %116, %115 : vector<128x256xf32>
    %118 = arith.addf %112, %117 : vector<128x256xf32>
    %119 = vector.extract_strided_slice %94 {offsets = [0, 255], sizes = [128, 1], strides = [1, 1]} : vector<128x256xf32> to vector<128x1xf32>
    %120 = vector.extract_strided_slice %94 {offsets = [0, 0], sizes = [128, 255], strides = [1, 1]} : vector<128x256xf32> to vector<128x255xf32>
    %121 = tpu.concatenate %119, %120 in 1 : vector<128x1xf32>, vector<128x255xf32> -> vector<128x256xf32>
    %122 = vector.broadcast %6 : vector<1x256xf32> to vector<128x256xf32>
    %123 = arith.mulf %122, %121 : vector<128x256xf32>
    %124 = arith.addf %118, %123 : vector<128x256xf32>
    %125 = vector.extract_strided_slice %94 {offsets = [0, 1], sizes = [128, 255], strides = [1, 1]} : vector<128x256xf32> to vector<128x255xf32>
    %126 = vector.extract_strided_slice %94 {offsets = [0, 0], sizes = [128, 1], strides = [1, 1]} : vector<128x256xf32> to vector<128x1xf32>
    %127 = tpu.concatenate %125, %126 in 1 : vector<128x255xf32>, vector<128x1xf32> -> vector<128x256xf32>
    %128 = vector.broadcast %8 : vector<1x256xf32> to vector<128x256xf32>
    %129 = arith.mulf %128, %127 : vector<128x256xf32>
    %130 = arith.addf %124, %129 : vector<128x256xf32>
    %131 = vector.extract_strided_slice %94 {offsets = [0, 15], sizes = [128, 241], strides = [1, 1]} : vector<128x256xf32> to vector<128x241xf32>
    %132 = vector.extract_strided_slice %94 {offsets = [0, 0], sizes = [128, 15], strides = [1, 1]} : vector<128x256xf32> to vector<128x15xf32>
    %133 = tpu.concatenate %131, %132 in 1 : vector<128x241xf32>, vector<128x15xf32> -> vector<128x256xf32>
    %134 = vector.broadcast %9 : vector<1x256xf32> to vector<128x256xf32>
    %135 = arith.mulf %134, %133 : vector<128x256xf32>
    %136 = arith.addf %130, %135 : vector<128x256xf32>
    %137 = vector.extract_strided_slice %94 {offsets = [0, 16], sizes = [128, 240], strides = [1, 1]} : vector<128x256xf32> to vector<128x240xf32>
    %138 = vector.extract_strided_slice %94 {offsets = [0, 0], sizes = [128, 16], strides = [1, 1]} : vector<128x256xf32> to vector<128x16xf32>
    %139 = tpu.concatenate %137, %138 in 1 : vector<128x240xf32>, vector<128x16xf32> -> vector<128x256xf32>
    %140 = vector.broadcast %10 : vector<1x256xf32> to vector<128x256xf32>
    %141 = arith.mulf %140, %139 : vector<128x256xf32>
    %142 = arith.addf %136, %141 : vector<128x256xf32>
    %143 = vector.extract_strided_slice %94 {offsets = [0, 17], sizes = [128, 239], strides = [1, 1]} : vector<128x256xf32> to vector<128x239xf32>
    %144 = vector.extract_strided_slice %94 {offsets = [0, 0], sizes = [128, 17], strides = [1, 1]} : vector<128x256xf32> to vector<128x17xf32>
    %145 = tpu.concatenate %143, %144 in 1 : vector<128x239xf32>, vector<128x17xf32> -> vector<128x256xf32>
    %146 = vector.broadcast %11 : vector<1x256xf32> to vector<128x256xf32>
    %147 = arith.mulf %146, %145 : vector<128x256xf32>
    %148 = arith.addf %142, %147 : vector<128x256xf32>
    %cst_21 = arith.constant 0.000000e+00 : f32
    %149 = vector.broadcast %cst_21 : f32 to vector<128x256xf32>
    %150 = arith.maximumf %148, %149 : vector<128x256xf32>
    %c0_22 = arith.constant 0 : index
    %c0_23 = arith.constant 0 : index
    %151 = vector.load %arg7[%c0_22, %c0_23] : memref<3x128xf32, #tpu.memory_space<vmem>>, vector<3x128xf32>
    %cst_24 = arith.constant dense<0.000000e+00> : vector<3x256xf32>
    %152 = tpu.matmul %151, %150, %cst_24 {dimension_numbers = #tpu.dot_dimension_numbers<[1], [0], [0], [1], [0, 0, 1, 1], [], []>} : vector<3x128xf32>, vector<128x256xf32>, vector<3x256xf32> -> vector<3x256xf32>
    %c0_25 = arith.constant 0 : index
    %c0_26 = arith.constant 0 : index
    %153 = vector.load %arg8[%c0_25, %c0_26] : memref<3x1xf32, #tpu.memory_space<vmem>>, vector<3x1xf32>
    %154 = vector.broadcast %153 : vector<3x1xf32> to vector<3x256xf32>
    %155 = arith.addf %152, %154 : vector<3x256xf32>
    %c0_27 = arith.constant 0 : index
    %c0_28 = arith.constant 0 : index
    %c0_29 = arith.constant 0 : index
    %156 = vector.load %arg9[%c0_27, %c0_28, %c0_29] : memref<1x3x256xf32, #tpu.memory_space<vmem>>, vector<1x3x256xf32>
    %157 = vector.shape_cast %156 : vector<1x3x256xf32> to vector<3x256xf32>
    %158 = vector.shape_cast %155 : vector<3x256xf32> to vector<1x3x256xf32>
    tpu.vector_store %arg9[%c0_27, %c0_28, %c0_29], %158 {strides = array<i32>} : memref<1x3x256xf32, #tpu.memory_space<vmem>>, vector<1x3x256xf32>,
    return
  }
  func.func @transform_0(%arg0: i32) -> (i32, i32, i32) {
    %c0_i32 = arith.constant 0 : i32
    %c0_i32_0 = arith.constant 0 : i32
    %c0_i32_1 = arith.constant 0 : i32
    return %arg0, %c0_i32, %c0_i32_0 : i32, i32, i32
  }
  func.func @transform_1(%arg0: i32) -> (i32, i32) {
    %c0_i32 = arith.constant 0 : i32
    %c0_i32_0 = arith.constant 0 : i32
    %c0_i32_1 = arith.constant 0 : i32
    return %c0_i32, %c0_i32_0 : i32, i32
  }
  func.func @transform_2(%arg0: i32) -> (i32, i32) {
    %c0_i32 = arith.constant 0 : i32
    %c0_i32_0 = arith.constant 0 : i32
    %c0_i32_1 = arith.constant 0 : i32
    return %c0_i32, %c0_i32_0 : i32, i32
  }
  func.func @transform_3(%arg0: i32) -> (i32, i32) {
    %c0_i32 = arith.constant 0 : i32
    %c0_i32_0 = arith.constant 0 : i32
    %c0_i32_1 = arith.constant 0 : i32
    return %c0_i32, %c0_i32_0 : i32, i32
  }
  func.func @transform_4(%arg0: i32) -> (i32, i32, i32) {
    %c0_i32 = arith.constant 0 : i32
    %c0_i32_0 = arith.constant 0 : i32
    %c0_i32_1 = arith.constant 0 : i32
    %c0_i32_2 = arith.constant 0 : i32
    return %c0_i32, %c0_i32_0, %c0_i32_1 : i32, i32, i32
  }
  func.func @transform_5(%arg0: i32) -> (i32, i32, i32) {
    %c0_i32 = arith.constant 0 : i32
    %c0_i32_0 = arith.constant 0 : i32
    %c0_i32_1 = arith.constant 0 : i32
    %c0_i32_2 = arith.constant 0 : i32
    return %c0_i32, %c0_i32_0, %c0_i32_1 : i32, i32, i32
  }
  func.func @transform_6(%arg0: i32) -> (i32, i32) {
    %c0_i32 = arith.constant 0 : i32
    %c0_i32_0 = arith.constant 0 : i32
    %c0_i32_1 = arith.constant 0 : i32
    return %c0_i32, %c0_i32_0 : i32, i32
  }
  func.func @transform_7(%arg0: i32) -> (i32, i32) {
    %c0_i32 = arith.constant 0 : i32
    %c0_i32_0 = arith.constant 0 : i32
    %c0_i32_1 = arith.constant 0 : i32
    return %c0_i32, %c0_i32_0 : i32, i32
  }
  func.func @transform_8(%arg0: i32) -> (i32, i32, i32) {
    %c0_i32 = arith.constant 0 : i32
    %c0_i32_0 = arith.constant 0 : i32
    %c0_i32_1 = arith.constant 0 : i32
    return %arg0, %c0_i32, %c0_i32_0 : i32, i32, i32
  }
}

</mosaic_0001>

<llo_original>
// kernel: tpu_custom_call.1
$region0: #{tpu_custom_call.1}
  #allocation0 [shape = 'u32[]', space=smem, size = 0x4, offset = 0x4, fixed_abs, tag = 'smem constant byte address 0x4 - core index']
  #allocation1 [shape = 'u32[144,128]{1,0:T(1,128)}', space=vmem, size = 0x12000, scoped, tag = 'internal scratch']
  %s0 = inlined_call_operand.vmem [shape: f32[2,3,256], index: 0, kind: input, shape index: {}]
  %s1 = inlined_call_operand.vmem [shape: f32[9,256], index: 1, kind: input, shape index: {}]
  %s2 = inlined_call_operand.vmem [shape: f32[128,3], index: 2, kind: input, shape index: {}]
  %s3 = inlined_call_operand.vmem [shape: f32[128,1], index: 3, kind: input, shape index: {}]
  %s4 = inlined_call_operand.vmem [shape: f32[2,128,128], index: 4, kind: input, shape index: {}]
  %s5 = inlined_call_operand.vmem [shape: f32[2,128,1], index: 5, kind: input, shape index: {}]
  %s6 = inlined_call_operand.vmem [shape: f32[3,128], index: 6, kind: input, shape index: {}]
  %s7 = inlined_call_operand.vmem [shape: f32[3,1], index: 7, kind: input, shape index: {}]
  %s8 = inlined_call_operand.vmem [shape: f32[2,3,256], index: 8, kind: output, shape index: {}]
  %s9 = sld [smem:[#allocation0]]
  $region65: #{tpu_custom_call.1} parent=0
    _
  %s11 = ssub.s32 1, %s9
  %s12 = scalar_select 0, %s11, %s9
  loop: start=0, step=1, limit=4
  $region2: #{tpu_custom_call.1} parent=0 // loop_pre_header
    _
  $region3: #{tpu_custom_call.1} parent=0 // loop_header
    %s14 = sphi 0, %s18
    %p15 = scmp.ge.s32.totalorder %s14, 4
    %s24 = sphi 0, %s26
    %s27 = sphi 0, %s24
    %s28 = sphi 0, %s27
    %s44 = sphi 0, %s28
    %s48 = sphi 0, %s48
    %s50 = sphi 0, %s48
    %s51 = sphi 0, %s50
    %s65 = sphi 0, %s51
    %s69 = sphi 0, %s69
    %s71 = sphi 0, %s69
    %s72 = sphi 0, %s71
    %s86 = sphi 0, %s72
    %s90 = sphi 0, %s90
    %s92 = sphi 0, %s90
    %s93 = sphi 0, %s92
    %s107 = sphi 0, %s93
    %s111 = sphi 0, %s111
    %s113 = sphi 0, %s111
    %s114 = sphi 0, %s113
    %s128 = sphi 0, %s114
    %s132 = sphi 0, %s132
    %s134 = sphi 0, %s132
    %s135 = sphi 0, %s134
    %s149 = sphi 0, %s135
    %s153 = sphi 0, %s153
    %s155 = sphi 0, %s153
    %s156 = sphi 0, %s155
    %s170 = sphi 0, %s156
    %s174 = sphi 0, %s174
    %s176 = sphi 0, %s174
    %s177 = sphi 0, %s176
    %s191 = sphi 0, %s177
    %s197 = sphi 0, %s199
    %s200 = sphi 0, %s197
    %s201 = sphi 0, %s200
    %s217 = sphi 0, %s201
  $region4: #{tpu_custom_call.1} parent=0 // loop_header_branch
    %17 = sbr.rel (%p15) target = $region8
  $region5: #{tpu_custom_call.1} parent=0 // loop_body
    %s19 = ssub.s32 %s14, 1
    %s20 = ssub.s32 %s14, 2
    %s21 = sadd.s32 %s14, 1
    %s22 = ssub.s32 %s14, %s21
    %p23 = scmp.eq.s32.totalorder %s22, 0
    %s25 = sadd.s32 %s24, 1
    %s26 = scalar_select %p23, %s24, %s25
    %p29 = pneg %p23
    %p30 = scmp.eq.s32.totalorder %s14, 1
    %p31 = por %p29, %p30
    %p32 = scmp.ne.s32.totalorder %s24, %s27
    %p33 = scmp.eq.s32.totalorder %s14, 0
    %p34 = por %p32, %p33
    %p35 = scmp.ne.s32.totalorder %s24, %s27
    %p36 = scmp.eq.s32.totalorder %s19, 1
    %p37 = por %p35, %p36
    %p38 = scmp.ne.s32.totalorder %s27, %s28
    %p39 = scmp.eq.s32.totalorder %s19, 0
    %p40 = por %p38, %p39
    %p41 = scmp.ne.s32.totalorder %s27, %s28
    %p42 = scmp.eq.s32.totalorder %s20, 1
    %p43 = por %p41, %p42
    %p45 = scmp.ne.s32.totalorder %s28, %s44
    %p46 = scmp.eq.s32.totalorder %s20, 0
    %p47 = por %p45, %p46
    %s49 = sadd.s32 %s48, 1
    %p52 = scmp.eq.s32.totalorder %s14, 1
    %p53 = scmp.ne.s32.totalorder %s48, %s50
    %p54 = scmp.eq.s32.totalorder %s14, 0
    %p55 = por %p53, %p54
    %p56 = scmp.ne.s32.totalorder %s48, %s50
    %p57 = scmp.eq.s32.totalorder %s19, 1
    %p58 = por %p56, %p57
    %p59 = scmp.ne.s32.totalorder %s50, %s51
    %p60 = scmp.eq.s32.totalorder %s19, 0
    %p61 = por %p59, %p60
    %p62 = scmp.ne.s32.totalorder %s50, %s51
    %p63 = scmp.eq.s32.totalorder %s20, 1
    %p64 = por %p62, %p63
    %p66 = scmp.ne.s32.totalorder %s51, %s65
    %p67 = scmp.eq.s32.totalorder %s20, 0
    %p68 = por %p66, %p67
    %s70 = sadd.s32 %s69, 1
    %p73 = scmp.eq.s32.totalorder %s14, 1
    %p74 = scmp.ne.s32.totalorder %s69, %s71
    %p75 = scmp.eq.s32.totalorder %s14, 0
    %p76 = por %p74, %p75
    %p77 = scmp.ne.s32.totalorder %s69, %s71
    %p78 = scmp.eq.s32.totalorder %s19, 1
    %p79 = por %p77, %p78
    %p80 = scmp.ne.s32.totalorder %s71, %s72
    %p81 = scmp.eq.s32.totalorder %s19, 0
    %p82 = por %p80, %p81
    %p83 = scmp.ne.s32.totalorder %s71, %s72
    %p84 = scmp.eq.s32.totalorder %s20, 1
    %p85 = por %p83, %p84
    %p87 = scmp.ne.s32.totalorder %s72, %s86
    %p88 = scmp.eq.s32.totalorder %s20, 0
    %p89 = por %p87, %p88
    %s91 = sadd.s32 %s90, 1
    %p94 = scmp.eq.s32.totalorder %s14, 1
    %p95 = scmp.ne.s32.totalorder %s90, %s92
    %p96 = scmp.eq.s32.totalorder %s14, 0
    %p97 = por %p95, %p96
    %p98 = scmp.ne.s32.totalorder %s90, %s92
    %p99 = scmp.eq.s32.totalorder %s19, 1
    %p100 = por %p98, %p99
    %p101 = scmp.ne.s32.totalorder %s92, %s93
    %p102 = scmp.eq.s32.totalorder %s19, 0
    %p103 = por %p101, %p102
    %p104 = scmp.ne.s32.totalorder %s92, %s93
    %p105 = scmp.eq.s32.totalorder %s20, 1
    %p106 = por %p104, %p105
    %p108 = scmp.ne.s32.totalorder %s93, %s107
    %p109 = scmp.eq.s32.totalorder %s20, 0
    %p110 = por %p108, %p109
    %s112 = sadd.s32 %s111, 1
    %p115 = scmp.eq.s32.totalorder %s14, 1
    %p116 = scmp.ne.s32.totalorder %s111, %s113
    %p117 = scmp.eq.s32.totalorder %s14, 0
    %p118 = por %p116, %p117
    %p119 = scmp.ne.s32.totalorder %s111, %s113
    %p120 = scmp.eq.s32.totalorder %s19, 1
    %p121 = por %p119, %p120
    %p122 = scmp.ne.s32.totalorder %s113, %s114
    %p123 = scmp.eq.s32.totalorder %s19, 0
    %p124 = por %p122, %p123
    %p125 = scmp.ne.s32.totalorder %s113, %s114
    %p126 = scmp.eq.s32.totalorder %s20, 1
    %p127 = por %p125, %p126
    %p129 = scmp.ne.s32.totalorder %s114, %s128
    %p130 = scmp.eq.s32.totalorder %s20, 0
    %p131 = por %p129, %p130
    %s133 = sadd.s32 %s132, 1
    %p136 = scmp.eq.s32.totalorder %s14, 1
    %p137 = scmp.ne.s32.totalorder %s132, %s134
    %p138 = scmp.eq.s32.totalorder %s14, 0
    %p139 = por %p137, %p138
    %p140 = scmp.ne.s32.totalorder %s132, %s134
    %p141 = scmp.eq.s32.totalorder %s19, 1
    %p142 = por %p140, %p141
    %p143 = scmp.ne.s32.totalorder %s134, %s135
    %p144 = scmp.eq.s32.totalorder %s19, 0
    %p145 = por %p143, %p144
    %p146 = scmp.ne.s32.totalorder %s134, %s135
    %p147 = scmp.eq.s32.totalorder %s20, 1
    %p148 = por %p146, %p147
    %p150 = scmp.ne.s32.totalorder %s135, %s149
    %p151 = scmp.eq.s32.totalorder %s20, 0
    %p152 = por %p150, %p151
    %s154 = sadd.s32 %s153, 1
    %p157 = scmp.eq.s32.totalorder %s14, 1
    %p158 = scmp.ne.s32.totalorder %s153, %s155
    %p159 = scmp.eq.s32.totalorder %s14, 0
    %p160 = por %p158, %p159
    %p161 = scmp.ne.s32.totalorder %s153, %s155
    %p162 = scmp.eq.s32.totalorder %s19, 1
    %p163 = por %p161, %p162
    %p164 = scmp.ne.s32.totalorder %s155, %s156
    %p165 = scmp.eq.s32.totalorder %s19, 0
    %p166 = por %p164, %p165
    %p167 = scmp.ne.s32.totalorder %s155, %s156
    %p168 = scmp.eq.s32.totalorder %s20, 1
    %p169 = por %p167, %p168
    %p171 = scmp.ne.s32.totalorder %s156, %s170
    %p172 = scmp.eq.s32.totalorder %s20, 0
    %p173 = por %p171, %p172
    %s175 = sadd.s32 %s174, 1
    %p178 = scmp.eq.s32.totalorder %s14, 1
    %p179 = scmp.ne.s32.totalorder %s174, %s176
    %p180 = scmp.eq.s32.totalorder %s14, 0
    %p181 = por %p179, %p180
    %p182 = scmp.ne.s32.totalorder %s174, %s176
    %p183 = scmp.eq.s32.totalorder %s19, 1
    %p184 = por %p182, %p183
    %p185 = scmp.ne.s32.totalorder %s176, %s177
    %p186 = scmp.eq.s32.totalorder %s19, 0
    %p187 = por %p185, %p186
    %p188 = scmp.ne.s32.totalorder %s176, %s177
    %p189 = scmp.eq.s32.totalorder %s20, 1
    %p190 = por %p188, %p189
    %p192 = scmp.ne.s32.totalorder %s177, %s191
    %p193 = scmp.eq.s32.totalorder %s20, 0
    %p194 = por %p192, %p193
    %s195 = ssub.s32 %s14, %s21
    %p196 = scmp.eq.s32.totalorder %s195, 0
    %s198 = sadd.s32 %s197, 1
    %s199 = scalar_select %p196, %s197, %s198
    %p202 = pneg %p196
    %p203 = scmp.eq.s32.totalorder %s14, 1
    %p204 = por %p202, %p203
    %p205 = scmp.ne.s32.totalorder %s197, %s200
    %p206 = scmp.eq.s32.totalorder %s14, 0
    %p207 = por %p205, %p206
    %p208 = scmp.ne.s32.totalorder %s197, %s200
    %p209 = scmp.eq.s32.totalorder %s19, 1
    %p210 = por %p208, %p209
    %p211 = scmp.ne.s32.totalorder %s200, %s201
    %p212 = scmp.eq.s32.totalorder %s19, 0
    %p213 = por %p211, %p212
    %p214 = scmp.ne.s32.totalorder %s200, %s201
    %p215 = scmp.eq.s32.totalorder %s20, 1
    %p216 = por %p214, %p215
    %p218 = scmp.ne.s32.totalorder %s201, %s217
    %p219 = scmp.eq.s32.totalorder %s20, 0
    %p220 = por %p218, %p219
    %p221 = scmp.le.s32.totalorder 1, %s14
    %p222 = scmp.lt.s32.totalorder %s14, 3
    %p223 = pnand %p221, %p222
    %p224 = pneg %p223
    // Predicated region
    $region9: #{tpu_custom_call.1} parent=5 // pred_check
      _
    $region10: #{tpu_custom_call.1} parent=5 // pred_check_branch
      %226 = sbr.rel (%p223) target = $region12
    $region11: #{tpu_custom_call.1} parent=5 // pred_region
      %s227 = ssub.s32 %s14, 1
      // Predicated region
      $region13: #{tpu_custom_call.1} parent=11 // pred_check
        %p228 = pneg %p61
      $region14: #{tpu_custom_call.1} parent=11 // pred_check_branch
        %230 = sbr.rel (%p228) target = $region16
      $region15: #{tpu_custom_call.1} parent=11 // pred_region
        _
      $region16: #{tpu_custom_call.1} parent=11 // pred_fallthru
        _
      // Predicated region
      $region17: #{tpu_custom_call.1} parent=11 // pred_check
        %p231 = pneg %p82
      $region18: #{tpu_custom_call.1} parent=11 // pred_check_branch
        %233 = sbr.rel (%p231) target = $region20
      $region19: #{tpu_custom_call.1} parent=11 // pred_region
        _
      $region20: #{tpu_custom_call.1} parent=11 // pred_fallthru
        _
      // Predicated region
      $region21: #{tpu_custom_call.1} parent=11 // pred_check
        %p234 = pneg %p103
      $region22: #{tpu_custom_call.1} parent=11 // pred_check_branch
        %236 = sbr.rel (%p234) target = $region24
      $region23: #{tpu_custom_call.1} parent=11 // pred_region
        _
      $region24: #{tpu_custom_call.1} parent=11 // pred_fallthru
        _
      // Predicated region
      $region25: #{tpu_custom_call.1} parent=11 // pred_check
        %p237 = pneg %p124
      $region26: #{tpu_custom_call.1} parent=11 // pred_check_branch
        %239 = sbr.rel (%p237) target = $region28
      $region27: #{tpu_custom_call.1} parent=11 // pred_region
        _
      $region28: #{tpu_custom_call.1} parent=11 // pred_fallthru
        _
      // Predicated region
      $region29: #{tpu_custom_call.1} parent=11 // pred_check
        %p240 = pneg %p145
      $region30: #{tpu_custom_call.1} parent=11 // pred_check_branch
        %242 = sbr.rel (%p240) target = $region32
      $region31: #{tpu_custom_call.1} parent=11 // pred_region
        _
      $region32: #{tpu_custom_call.1} parent=11 // pred_fallthru
        _
      // Predicated region
      $region33: #{tpu_custom_call.1} parent=11 // pred_check
        %p243 = pneg %p166
      $region34: #{tpu_custom_call.1} parent=11 // pred_check_branch
        %245 = sbr.rel (%p243) target = $region36
      $region35: #{tpu_custom_call.1} parent=11 // pred_region
        _
      $region36: #{tpu_custom_call.1} parent=11 // pred_fallthru
        _
      // Predicated region
      $region37: #{tpu_custom_call.1} parent=11 // pred_check
        %p246 = pneg %p187
      $region38: #{tpu_custom_call.1} parent=11 // pred_check_branch
        %248 = sbr.rel (%p246) target = $region40
      $region39: #{tpu_custom_call.1} parent=11 // pred_region
        _
      $region40: #{tpu_custom_call.1} parent=11 // pred_fallthru
        _
    $region12: #{tpu_custom_call.1} parent=5 // pred_fallthru
      _
    %p249 = scmp.lt.s32.totalorder %s14, 2
    // Predicated region
    $region41: #{tpu_custom_call.1} parent=5 // pred_check
      %p250 = pneg %p249
    $region42: #{tpu_custom_call.1} parent=5 // pred_check_branch
      %252 = sbr.rel (%p250) target = $region44
    $region43: #{tpu_custom_call.1} parent=5 // pred_region
      // Predicated region
      $region45: #{tpu_custom_call.1} parent=43 // pred_check
        %p253 = pneg %p34
      $region46: #{tpu_custom_call.1} parent=43 // pred_check_branch
        %255 = sbr.rel (%p253) target = $region48
      $region47: #{tpu_custom_call.1} parent=43 // pred_region
        %p256 = scmp.lt.s32.totalorder %s14, 1
        %s257 = scalar_select %p256, %s14, 1
        %s258 = smul.addr %s257, 2
        %s259 = smul.addr %s258, 4
        %s260 = scalar_lea.vmem %s0, %s259
      $region48: #{tpu_custom_call.1} parent=43 // pred_fallthru
        _
    $region44: #{tpu_custom_call.1} parent=5 // pred_fallthru
      _
    %p261 = scmp.le.s32.totalorder 1, %s14
    %p262 = scmp.lt.s32.totalorder %s14, 3
    %p263 = pnand %p261, %p262
    %p264 = pneg %p263
    // Predicated region
    $region49: #{tpu_custom_call.1} parent=5 // pred_check
      _
    $region50: #{tpu_custom_call.1} parent=5 // pred_check_branch
      %266 = sbr.rel (%p263) target = $region52
    $region51: #{tpu_custom_call.1} parent=5 // pred_region
      %s267 = ssub.s32 %s14, 1
      %p268 = scmp.lt.s32.totalorder %s19, 1
      %s269 = scalar_select %p268, %s19, 1
      %s270 = smul.addr %s269, 2
      %s271 = smul.addr %s270, 4
      %s272 = scalar_lea.vmem %s0, %s271
      %p273 = pneg %p40
      %p274 = pneg %p37
      %p275 = pneg %p61
      %p276 = pneg %p58
      %p277 = pneg %p82
      %p278 = pneg %p79
      %p279 = pneg %p103
      %p280 = pneg %p100
      %p281 = pneg %p124
      %p282 = pneg %p121
      %p283 = pneg %p145
      %p284 = pneg %p142
      %p285 = pneg %p166
      %p286 = pneg %p163
      %p287 = pneg %p187
      %p288 = pneg %p184
      %p289 = pneg %p213
      %p290 = pneg %p210
      %p291 = scmp.lt.s32.totalorder %s19, 1
      %s292 = scalar_select %p291, %s19, 1
      %s293 = smul.addr %s292, 2
      %s294 = smul.addr %s293, 4
      %s295 = scalar_lea.vmem %s8, %s294
      %p296 = scmp.lt.s32.totalorder %s19, 1
      %s297 = scalar_select %p296, %s19, 1
      %s298 = smul.addr %s297, 2
      %s299 = smul.addr %s298, 4
      %s300 = scalar_lea.vmem %s0, %s299
      %p301 = scmp.lt.s32.totalorder %s19, 1
      %s302 = scalar_select %p301, %s19, 1
      %s303 = smul.addr %s302, 2
      %s304 = smul.addr %s303, 4
      %s305 = scalar_lea.vmem %s8, %s304
      %v306 = vld [vmem:[%s300] sm:$0x77]
      %v307 = vld [vmem:[%s1] sm:$0xff]
      %v308 = vld [vmem:[%s1 + $0x8] sm:$0xff]
      %v309 = vld [vmem:[%s1 + $0x10] sm:$0x1]
      %v310 = vld [vmem:[%s1 + $0x18] sm:$0x1]
      %v311 = vld [vmem:[%s2] sm:$0xff]
      %v312 = vld [vmem:[%s2 + $0x8] sm:$0xff]
      %v313 = vld [vmem:[%s2 + $0x10] sm:$0xff]
      %v314 = vld [vmem:[%s2 + $0x18] sm:$0xff]
      %v315 = vld [vmem:[%s2 + $0x20] sm:$0xff]
      %v316 = vld [vmem:[%s2 + $0x28] sm:$0xff]
      %v317 = vld [vmem:[%s2 + $0x30] sm:$0xff]
      %v318 = vld [vmem:[%s2 + $0x38] sm:$0xff]
      %v319 = vld [vmem:[%s2 + $0x40] sm:$0xff]
      %v320 = vld [vmem:[%s2 + $0x48] sm:$0xff]
      %v321 = vld [vmem:[%s2 + $0x50] sm:$0xff]
      %v322 = vld [vmem:[%s2 + $0x58] sm:$0xff]
      %v323 = vld [vmem:[%s2 + $0x60] sm:$0xff]
      %v324 = vld [vmem:[%s2 + $0x68] sm:$0xff]
      %v325 = vld [vmem:[%s2 + $0x70] sm:$0xff]
      %v326 = vld [vmem:[%s2 + $0x78] sm:$0xff]
      %328 = vset.pattern.permute.xlu0 0
      %329 = vperm.xlu0 %328, %v311
      %v330 = vpop.permute.xlu0 %329
      %333 = vset.pattern.permute.xlu0 0
      %334 = vperm.xlu0 %333, %v312
      %v335 = vpop.permute.xlu0 %334
      %338 = vset.pattern.permute.xlu0 0
      %339 = vperm.xlu0 %338, %v313
      %v340 = vpop.permute.xlu0 %339
      %343 = vset.pattern.permute.xlu0 0
      %344 = vperm.xlu0 %343, %v314
      %v345 = vpop.permute.xlu0 %344
      %348 = vset.pattern.permute.xlu0 0
      %349 = vperm.xlu0 %348, %v315
      %v350 = vpop.permute.xlu0 %349
      %353 = vset.pattern.permute.xlu0 0
      %354 = vperm.xlu0 %353, %v316
      %v355 = vpop.permute.xlu0 %354
      %358 = vset.pattern.permute.xlu0 0
      %359 = vperm.xlu0 %358, %v317
      %v360 = vpop.permute.xlu0 %359
      %363 = vset.pattern.permute.xlu0 0
      %364 = vperm.xlu0 %363, %v318
      %v365 = vpop.permute.xlu0 %364
      %368 = vset.pattern.permute.xlu0 0
      %369 = vperm.xlu0 %368, %v319
      %v370 = vpop.permute.xlu0 %369
      %373 = vset.pattern.permute.xlu0 0
      %374 = vperm.xlu0 %373, %v320
      %v375 = vpop.permute.xlu0 %374
      %378 = vset.pattern.permute.xlu0 0
      %379 = vperm.xlu0 %378, %v321
      %v380 = vpop.permute.xlu0 %379
      %383 = vset.pattern.permute.xlu0 0
      %384 = vperm.xlu0 %383, %v322
      %v385 = vpop.permute.xlu0 %384
      %388 = vset.pattern.permute.xlu0 0
      %389 = vperm.xlu0 %388, %v323
      %v390 = vpop.permute.xlu0 %389
      %393 = vset.pattern.permute.xlu0 0
      %394 = vperm.xlu0 %393, %v324
      %v395 = vpop.permute.xlu0 %394
      %398 = vset.pattern.permute.xlu0 0
      %399 = vperm.xlu0 %398, %v325
      %v400 = vpop.permute.xlu0 %399
      %403 = vset.pattern.permute.xlu0 0
      %404 = vperm.xlu0 %403, %v326
      %v405 = vpop.permute.xlu0 %404
      %v408 = vlaneseq
      %v409 = vshrl.u32 %v408, 7
      %v410 = vsub.s32 0, %v409
      %v411 = vrot.slane %v306, %v410
      %v412 = vlaneseq
      %v413 = vshrl.u32 %v412, 7
      %v414 = vsub.s32 4, %v413
      %v415 = vrot.slane %v306, %v414
      %v418 = vlaneseq
      %v419 = vshrl.u32 %v418, 7
      %v420 = vsub.s32 0, %v419
      %v421 = vrot.slane %v411, %v420
      %v422 = vlaneseq
      %v423 = vshrl.u32 %v422, 7
      %v424 = vsub.s32 0, %v423
      %v425 = vrot.slane %v415, %v424
      %v426 = vmul.f32 %v330, %v421
      %v427 = vmul.f32 %v330, %v425
      %v428 = vmul.f32 %v335, %v421
      %v429 = vmul.f32 %v335, %v425
      %v430 = vmul.f32 %v340, %v421
      %v431 = vmul.f32 %v340, %v425
      %v432 = vmul.f32 %v345, %v421
      %v433 = vmul.f32 %v345, %v425
      %v434 = vmul.f32 %v350, %v421
      %v435 = vmul.f32 %v350, %v425
      %v436 = vmul.f32 %v355, %v421
      %v437 = vmul.f32 %v355, %v425
      %v438 = vmul.f32 %v360, %v421
      %v439 = vmul.f32 %v360, %v425
      %v440 = vmul.f32 %v365, %v421
      %v441 = vmul.f32 %v365, %v425
      %v442 = vmul.f32 %v370, %v421
      %v443 = vmul.f32 %v370, %v425
      %v444 = vmul.f32 %v375, %v421
      %v445 = vmul.f32 %v375, %v425
      %v446 = vmul.f32 %v380, %v421
      %v447 = vmul.f32 %v380, %v425
      %v448 = vmul.f32 %v385, %v421
      %v449 = vmul.f32 %v385, %v425
      %v450 = vmul.f32 %v390, %v421
      %v451 = vmul.f32 %v390, %v425
      %v452 = vmul.f32 %v395, %v421
      %v453 = vmul.f32 %v395, %v425
      %v454 = vmul.f32 %v400, %v421
      %v455 = vmul.f32 %v400, %v425
      %v456 = vmul.f32 %v405, %v421
      %v457 = vmul.f32 %v405, %v425
      %v458 = vld [vmem:[%s3] sm:$0xff]
      %v459 = vld [vmem:[%s3 + $0x8] sm:$0xff]
      %v460 = vld [vmem:[%s3 + $0x10] sm:$0xff]
      %v461 = vld [vmem:[%s3 + $0x18] sm:$0xff]
      %v462 = vld [vmem:[%s3 + $0x20] sm:$0xff]
      %v463 = vld [vmem:[%s3 + $0x28] sm:$0xff]
      %v464 = vld [vmem:[%s3 + $0x30] sm:$0xff]
      %v465 = vld [vmem:[%s3 + $0x38] sm:$0xff]
      %v466 = vld [vmem:[%s3 + $0x40] sm:$0xff]
      %v467 = vld [vmem:[%s3 + $0x48] sm:$0xff]
      %v468 = vld [vmem:[%s3 + $0x50] sm:$0xff]
      %v469 = vld [vmem:[%s3 + $0x58] sm:$0xff]
      %v470 = vld [vmem:[%s3 + $0x60] sm:$0xff]
      %v471 = vld [vmem:[%s3 + $0x68] sm:$0xff]
      %v472 = vld [vmem:[%s3 + $0x70] sm:$0xff]
      %v473 = vld [vmem:[%s3 + $0x78] sm:$0xff]
      %475 = vset.pattern.permute.xlu0 0
      %476 = vperm.xlu0 %475, %v458
      %v477 = vpop.permute.xlu0 %476
      %480 = vset.pattern.permute.xlu0 0
      %481 = vperm.xlu0 %480, %v459
      %v482 = vpop.permute.xlu0 %481
      %485 = vset.pattern.permute.xlu0 0
      %486 = vperm.xlu0 %485, %v460
      %v487 = vpop.permute.xlu0 %486
      %490 = vset.pattern.permute.xlu0 0
      %491 = vperm.xlu0 %490, %v461
      %v492 = vpop.permute.xlu0 %491
      %495 = vset.pattern.permute.xlu0 0
      %496 = vperm.xlu0 %495, %v462
      %v497 = vpop.permute.xlu0 %496
      %500 = vset.pattern.permute.xlu0 0
      %501 = vperm.xlu0 %500, %v463
      %v502 = vpop.permute.xlu0 %501
      %505 = vset.pattern.permute.xlu0 0
      %506 = vperm.xlu0 %505, %v464
      %v507 = vpop.permute.xlu0 %506
      %510 = vset.pattern.permute.xlu0 0
      %511 = vperm.xlu0 %510, %v465
      %v512 = vpop.permute.xlu0 %511
      %515 = vset.pattern.permute.xlu0 0
      %516 = vperm.xlu0 %515, %v466
      %v517 = vpop.permute.xlu0 %516
      %520 = vset.pattern.permute.xlu0 0
      %521 = vperm.xlu0 %520, %v467
      %v522 = vpop.permute.xlu0 %521
      %525 = vset.pattern.permute.xlu0 0
      %526 = vperm.xlu0 %525, %v468
      %v527 = vpop.permute.xlu0 %526
      %530 = vset.pattern.permute.xlu0 0
      %531 = vperm.xlu0 %530, %v469
      %v532 = vpop.permute.xlu0 %531
      %535 = vset.pattern.permute.xlu0 0
      %536 = vperm.xlu0 %535, %v470
      %v537 = vpop.permute.xlu0 %536
      %540 = vset.pattern.permute.xlu0 0
      %541 = vperm.xlu0 %540, %v471
      %v542 = vpop.permute.xlu0 %541
      %545 = vset.pattern.permute.xlu0 0
      %546 = vperm.xlu0 %545, %v472
      %v547 = vpop.permute.xlu0 %546
      %550 = vset.pattern.permute.xlu0 0
      %551 = vperm.xlu0 %550, %v473
      %v552 = vpop.permute.xlu0 %551
      %v554 = vadd.f32 %v426, %v477
      %v555 = vadd.f32 %v427, %v477
      %v556 = vadd.f32 %v428, %v482
      %v557 = vadd.f32 %v429, %v482
      %v558 = vadd.f32 %v430, %v487
      %v559 = vadd.f32 %v431, %v487
      %v560 = vadd.f32 %v432, %v492
      %v561 = vadd.f32 %v433, %v492
      %v562 = vadd.f32 %v434, %v497
      %v563 = vadd.f32 %v435, %v497
      %v564 = vadd.f32 %v436, %v502
      %v565 = vadd.f32 %v437, %v502
      %v566 = vadd.f32 %v438, %v507
      %v567 = vadd.f32 %v439, %v507
      %v568 = vadd.f32 %v440, %v512
      %v569 = vadd.f32 %v441, %v512
      %v570 = vadd.f32 %v442, %v517
      %v571 = vadd.f32 %v443, %v517
      %v572 = vadd.f32 %v444, %v522
      %v573 = vadd.f32 %v445, %v522
      %v574 = vadd.f32 %v446, %v527
      %v575 = vadd.f32 %v447, %v527
      %v576 = vadd.f32 %v448, %v532
      %v577 = vadd.f32 %v449, %v532
      %v578 = vadd.f32 %v450, %v537
      %v579 = vadd.f32 %v451, %v537
      %v580 = vadd.f32 %v452, %v542
      %v581 = vadd.f32 %v453, %v542
      %v582 = vadd.f32 %v454, %v547
      %v583 = vadd.f32 %v455, %v547
      %v584 = vadd.f32 %v456, %v552
      %v585 = vadd.f32 %v457, %v552
      %586 = vset.pattern.permute.xlu0 1
      %587 = vperm.xlu0 %586, %v311
      %v588 = vpop.permute.xlu0 %587
      %590 = vset.pattern.permute.xlu0 1
      %591 = vperm.xlu0 %590, %v312
      %v592 = vpop.permute.xlu0 %591
      %594 = vset.pattern.permute.xlu0 1
      %595 = vperm.xlu0 %594, %v313
      %v596 = vpop.permute.xlu0 %595
      %598 = vset.pattern.permute.xlu0 1
      %599 = vperm.xlu0 %598, %v314
      %v600 = vpop.permute.xlu0 %599
      %602 = vset.pattern.permute.xlu0 1
      %603 = vperm.xlu0 %602, %v315
      %v604 = vpop.permute.xlu0 %603
      %606 = vset.pattern.permute.xlu0 1
      %607 = vperm.xlu0 %606, %v316
      %v608 = vpop.permute.xlu0 %607
      %610 = vset.pattern.permute.xlu0 1
      %611 = vperm.xlu0 %610, %v317
      %v612 = vpop.permute.xlu0 %611
      %614 = vset.pattern.permute.xlu0 1
      %615 = vperm.xlu0 %614, %v318
      %v616 = vpop.permute.xlu0 %615
      %618 = vset.pattern.permute.xlu0 1
      %619 = vperm.xlu0 %618, %v319
      %v620 = vpop.permute.xlu0 %619
      %622 = vset.pattern.permute.xlu0 1
      %623 = vperm.xlu0 %622, %v320
      %v624 = vpop.permute.xlu0 %623
      %626 = vset.pattern.permute.xlu0 1
      %627 = vperm.xlu0 %626, %v321
      %v628 = vpop.permute.xlu0 %627
      %630 = vset.pattern.permute.xlu0 1
      %631 = vperm.xlu0 %630, %v322
      %v632 = vpop.permute.xlu0 %631
      %634 = vset.pattern.permute.xlu0 1
      %635 = vperm.xlu0 %634, %v323
      %v636 = vpop.permute.xlu0 %635
      %638 = vset.pattern.permute.xlu0 1
      %639 = vperm.xlu0 %638, %v324
      %v640 = vpop.permute.xlu0 %639
      %642 = vset.pattern.permute.xlu0 1
      %643 = vperm.xlu0 %642, %v325
      %v644 = vpop.permute.xlu0 %643
      %646 = vset.pattern.permute.xlu0 1
      %647 = vperm.xlu0 %646, %v326
      %v648 = vpop.permute.xlu0 %647
      %v650 = vlaneseq
      %v651 = vshrl.u32 %v650, 7
      %v652 = vsub.s32 1, %v651
      %v653 = vrot.slane %v306, %v652
      %v654 = vlaneseq
      %v655 = vshrl.u32 %v654, 7
      %v656 = vsub.s32 5, %v655
      %v657 = vrot.slane %v306, %v656
      %v660 = vlaneseq
      %v661 = vshrl.u32 %v660, 7
      %v662 = vsub.s32 1, %v661
      %v663 = vrot.slane %v653, %v662
      %v664 = vlaneseq
      %v665 = vshrl.u32 %v664, 7
      %v666 = vsub.s32 1, %v665
      %v667 = vrot.slane %v657, %v666
      %v668 = vmul.f32 %v588, %v663
      %v669 = vmul.f32 %v588, %v667
      %v670 = vmul.f32 %v592, %v663
      %v671 = vmul.f32 %v592, %v667
      %v672 = vmul.f32 %v596, %v663
      %v673 = vmul.f32 %v596, %v667
      %v674 = vmul.f32 %v600, %v663
      %v675 = vmul.f32 %v600, %v667
      %v676 = vmul.f32 %v604, %v663
      %v677 = vmul.f32 %v604, %v667
      %v678 = vmul.f32 %v608, %v663
      %v679 = vmul.f32 %v608, %v667
      %v680 = vmul.f32 %v612, %v663
      %v681 = vmul.f32 %v612, %v667
      %v682 = vmul.f32 %v616, %v663
      %v683 = vmul.f32 %v616, %v667
      %v684 = vmul.f32 %v620, %v663
      %v685 = vmul.f32 %v620, %v667
      %v686 = vmul.f32 %v624, %v663
      %v687 = vmul.f32 %v624, %v667
      %v688 = vmul.f32 %v628, %v663
      %v689 = vmul.f32 %v628, %v667
      %v690 = vmul.f32 %v632, %v663
      %v691 = vmul.f32 %v632, %v667
      %v692 = vmul.f32 %v636, %v663
      %v693 = vmul.f32 %v636, %v667
      %v694 = vmul.f32 %v640, %v663
      %v695 = vmul.f32 %v640, %v667
      %v696 = vmul.f32 %v644, %v663
      %v697 = vmul.f32 %v644, %v667
      %v698 = vmul.f32 %v648, %v663
      %v699 = vmul.f32 %v648, %v667
      %v700 = vadd.f32 %v554, %v668
      %v701 = vadd.f32 %v555, %v669
      %v702 = vadd.f32 %v556, %v670
      %v703 = vadd.f32 %v557, %v671
      %v704 = vadd.f32 %v558, %v672
      %v705 = vadd.f32 %v559, %v673
      %v706 = vadd.f32 %v560, %v674
      %v707 = vadd.f32 %v561, %v675
      %v708 = vadd.f32 %v562, %v676
      %v709 = vadd.f32 %v563, %v677
      %v710 = vadd.f32 %v564, %v678
      %v711 = vadd.f32 %v565, %v679
      %v712 = vadd.f32 %v566, %v680
      %v713 = vadd.f32 %v567, %v681
      %v714 = vadd.f32 %v568, %v682
      %v715 = vadd.f32 %v569, %v683
      %v716 = vadd.f32 %v570, %v684
      %v717 = vadd.f32 %v571, %v685
      %v718 = vadd.f32 %v572, %v686
      %v719 = vadd.f32 %v573, %v687
      %v720 = vadd.f32 %v574, %v688
      %v721 = vadd.f32 %v575, %v689
      %v722 = vadd.f32 %v576, %v690
      %v723 = vadd.f32 %v577, %v691
      %v724 = vadd.f32 %v578, %v692
      %v725 = vadd.f32 %v579, %v693
      %v726 = vadd.f32 %v580, %v694
      %v727 = vadd.f32 %v581, %v695
      %v728 = vadd.f32 %v582, %v696
      %v729 = vadd.f32 %v583, %v697
      %v730 = vadd.f32 %v584, %v698
      %v731 = vadd.f32 %v585, %v699
      %732 = vset.pattern.permute.xlu0 2
      %733 = vperm.xlu0 %732, %v311
      %v734 = vpop.permute.xlu0 %733
      %736 = vset.pattern.permute.xlu0 2
      %737 = vperm.xlu0 %736, %v312
      %v738 = vpop.permute.xlu0 %737
      %740 = vset.pattern.permute.xlu0 2
      %741 = vperm.xlu0 %740, %v313
      %v742 = vpop.permute.xlu0 %741
      %744 = vset.pattern.permute.xlu0 2
      %745 = vperm.xlu0 %744, %v314
      %v746 = vpop.permute.xlu0 %745
      %748 = vset.pattern.permute.xlu0 2
      %749 = vperm.xlu0 %748, %v315
      %v750 = vpop.permute.xlu0 %749
      %752 = vset.pattern.permute.xlu0 2
      %753 = vperm.xlu0 %752, %v316
      %v754 = vpop.permute.xlu0 %753
      %756 = vset.pattern.permute.xlu0 2
      %757 = vperm.xlu0 %756, %v317
      %v758 = vpop.permute.xlu0 %757
      %760 = vset.pattern.permute.xlu0 2
      %761 = vperm.xlu0 %760, %v318
      %v762 = vpop.permute.xlu0 %761
      %764 = vset.pattern.permute.xlu0 2
      %765 = vperm.xlu0 %764, %v319
      %v766 = vpop.permute.xlu0 %765
      %768 = vset.pattern.permute.xlu0 2
      %769 = vperm.xlu0 %768, %v320
      %v770 = vpop.permute.xlu0 %769
      %772 = vset.pattern.permute.xlu0 2
      %773 = vperm.xlu0 %772, %v321
      %v774 = vpop.permute.xlu0 %773
      %776 = vset.pattern.permute.xlu0 2
      %777 = vperm.xlu0 %776, %v322
      %v778 = vpop.permute.xlu0 %777
      %780 = vset.pattern.permute.xlu0 2
      %781 = vperm.xlu0 %780, %v323
      %v782 = vpop.permute.xlu0 %781
      %784 = vset.pattern.permute.xlu0 2
      %785 = vperm.xlu0 %784, %v324
      %v786 = vpop.permute.xlu0 %785
      %788 = vset.pattern.permute.xlu0 2
      %789 = vperm.xlu0 %788, %v325
      %v790 = vpop.permute.xlu0 %789
      %792 = vset.pattern.permute.xlu0 2
      %793 = vperm.xlu0 %792, %v326
      %v794 = vpop.permute.xlu0 %793
      %v796 = vlaneseq
      %v797 = vshrl.u32 %v796, 7
      %v798 = vsub.s32 2, %v797
      %v799 = vrot.slane %v306, %v798
      %v800 = vlaneseq
      %v801 = vshrl.u32 %v800, 7
      %v802 = vsub.s32 6, %v801
      %v803 = vrot.slane %v306, %v802
      %v806 = vlaneseq
      %v807 = vshrl.u32 %v806, 7
      %v808 = vsub.s32 2, %v807
      %v809 = vrot.slane %v799, %v808
      %v810 = vlaneseq
      %v811 = vshrl.u32 %v810, 7
      %v812 = vsub.s32 2, %v811
      %v813 = vrot.slane %v803, %v812
      %v814 = vmul.f32 %v734, %v809
      %v815 = vmul.f32 %v734, %v813
      %v816 = vmul.f32 %v738, %v809
      %v817 = vmul.f32 %v738, %v813
      %v818 = vmul.f32 %v742, %v809
      %v819 = vmul.f32 %v742, %v813
      %v820 = vmul.f32 %v746, %v809
      %v821 = vmul.f32 %v746, %v813
      %v822 = vmul.f32 %v750, %v809
      %v823 = vmul.f32 %v750, %v813
      %v824 = vmul.f32 %v754, %v809
      %v825 = vmul.f32 %v754, %v813
      %v826 = vmul.f32 %v758, %v809
      %v827 = vmul.f32 %v758, %v813
      %v828 = vmul.f32 %v762, %v809
      %v829 = vmul.f32 %v762, %v813
      %v830 = vmul.f32 %v766, %v809
      %v831 = vmul.f32 %v766, %v813
      %v832 = vmul.f32 %v770, %v809
      %v833 = vmul.f32 %v770, %v813
      %v834 = vmul.f32 %v774, %v809
      %v835 = vmul.f32 %v774, %v813
      %v836 = vmul.f32 %v778, %v809
      %v837 = vmul.f32 %v778, %v813
      %v838 = vmul.f32 %v782, %v809
      %v839 = vmul.f32 %v782, %v813
      %v840 = vmul.f32 %v786, %v809
      %v841 = vmul.f32 %v786, %v813
      %v842 = vmul.f32 %v790, %v809
      %v843 = vmul.f32 %v790, %v813
      %v844 = vmul.f32 %v794, %v809
      %v845 = vmul.f32 %v794, %v813
      %v846 = vadd.f32 %v700, %v814
      %v847 = vadd.f32 %v701, %v815
      %v848 = vadd.f32 %v702, %v816
      %v849 = vadd.f32 %v703, %v817
      %v850 = vadd.f32 %v704, %v818
      %v851 = vadd.f32 %v705, %v819
      %v852 = vadd.f32 %v706, %v820
      %v853 = vadd.f32 %v707, %v821
      %v854 = vadd.f32 %v708, %v822
      %v855 = vadd.f32 %v709, %v823
      %v856 = vadd.f32 %v710, %v824
      %v857 = vadd.f32 %v711, %v825
      %v858 = vadd.f32 %v712, %v826
      %v859 = vadd.f32 %v713, %v827
      %v860 = vadd.f32 %v714, %v828
      %v861 = vadd.f32 %v715, %v829
      %v862 = vadd.f32 %v716, %v830
      %v863 = vadd.f32 %v717, %v831
      %v864 = vadd.f32 %v718, %v832
      %v865 = vadd.f32 %v719, %v833
      %v866 = vadd.f32 %v720, %v834
      %v867 = vadd.f32 %v721, %v835
      %v868 = vadd.f32 %v722, %v836
      %v869 = vadd.f32 %v723, %v837
      %v870 = vadd.f32 %v724, %v838
      %v871 = vadd.f32 %v725, %v839
      %v872 = vadd.f32 %v726, %v840
      %v873 = vadd.f32 %v727, %v841
      %v874 = vadd.f32 %v728, %v842
      %v875 = vadd.f32 %v729, %v843
      %v876 = vadd.f32 %v730, %v844
      %v877 = vadd.f32 %v731, %v845
      %v878 = vld [vmem:[%s4] sm:$0xff]
      %v879 = vld [vmem:[%s4 + $0x8] sm:$0xff]
      %v880 = vld [vmem:[%s4 + $0x10] sm:$0xff]
      %v881 = vld [vmem:[%s4 + $0x18] sm:$0xff]
      %v882 = vld [vmem:[%s4 + $0x20] sm:$0xff]
      %v883 = vld [vmem:[%s4 + $0x28] sm:$0xff]
      %v884 = vld [vmem:[%s4 + $0x30] sm:$0xff]
      %v885 = vld [vmem:[%s4 + $0x38] sm:$0xff]
      %v886 = vld [vmem:[%s4 + $0x40] sm:$0xff]
      %v887 = vld [vmem:[%s4 + $0x48] sm:$0xff]
      %v888 = vld [vmem:[%s4 + $0x50] sm:$0xff]
      %v889 = vld [vmem:[%s4 + $0x58] sm:$0xff]
      %v890 = vld [vmem:[%s4 + $0x60] sm:$0xff]
      %v891 = vld [vmem:[%s4 + $0x68] sm:$0xff]
      %v892 = vld [vmem:[%s4 + $0x70] sm:$0xff]
      %v893 = vld [vmem:[%s4 + $0x78] sm:$0xff]
      %894 = vmatprep.subr.mxu0 %v847
      %895 = vmatpush1.msra.mxu0 %v846
      %896 = vmatprep.subr.mxu0 %v849
      %897 = vmatpush1.msra.mxu0 %v848
      %898 = vmatprep.subr.mxu0 %v851
      %899 = vmatpush1.msra.mxu0 %v850
      %900 = vmatprep.subr.mxu0 %v853
      %901 = vmatpush1.msra.mxu0 %v852
      %902 = vmatprep.subr.mxu0 %v855
      %903 = vmatpush1.msra.mxu0 %v854
      %904 = vmatprep.subr.mxu0 %v857
      %905 = vmatpush1.msra.mxu0 %v856
      %906 = vmatprep.subr.mxu0 %v859
      %907 = vmatpush1.msra.mxu0 %v858
      %908 = vmatprep.subr.mxu0 %v861
      %909 = vmatpush1.msra.mxu0 %v860
      %910 = vmatprep.subr.mxu0 %v863
      %911 = vmatpush1.msra.mxu0 %v862
      %912 = vmatprep.subr.mxu0 %v865
      %913 = vmatpush1.msra.mxu0 %v864
      %914 = vmatprep.subr.mxu0 %v867
      %915 = vmatpush1.msra.mxu0 %v866
      %916 = vmatprep.subr.mxu0 %v869
      %917 = vmatpush1.msra.mxu0 %v868
      %918 = vmatprep.subr.mxu0 %v871
      %919 = vmatpush1.msra.mxu0 %v870
      %920 = vmatprep.subr.mxu0 %v873
      %921 = vmatpush1.msra.mxu0 %v872
      %922 = vmatprep.subr.mxu0 %v875
      %923 = vmatpush1.msra.mxu0 %v874
      %924 = vmatprep.subr.mxu0 %v877
      %925 = vmatpush1.msra.mxu0 %v876
      %926 = vmatprep.subr.mxu0 0.0
      %927 = vmatpush1.msra.mxu0 0.0
      %928 = vmatprep.subr.mxu0 0.0
      %929 = vmatpush1.msra.mxu0 0.0
      %930 = vmatprep.subr.mxu0 0.0
      %931 = vmatpush1.msra.mxu0 0.0
      %932 = vmatprep.subr.mxu0 0.0
      %933 = vmatpush1.msra.mxu0 0.0
      %934 = vmatprep.subr.mxu0 0.0
      %935 = vmatpush1.msra.mxu0 0.0
      %936 = vmatprep.subr.mxu0 0.0
      %937 = vmatpush1.msra.mxu0 0.0
      %938 = vmatprep.subr.mxu0 0.0
      %939 = vmatpush1.msra.mxu0 0.0
      %940 = vmatprep.subr.mxu0 0.0
      %941 = vmatpush1.msra.mxu0 0.0
      %942 = vmatprep.subr.mxu0 0.0
      %943 = vmatpush1.msra.mxu0 0.0
      %944 = vmatprep.subr.mxu0 0.0
      %945 = vmatpush1.msra.mxu0 0.0
      %946 = vmatprep.subr.mxu0 0.0
      %947 = vmatpush1.msra.mxu0 0.0
      %948 = vmatprep.subr.mxu0 0.0
      %949 = vmatpush1.msra.mxu0 0.0
      %950 = vmatprep.subr.mxu0 0.0
      %951 = vmatpush1.msra.mxu0 0.0
      %952 = vmatprep.subr.mxu0 0.0
      %953 = vmatpush1.msra.mxu0 0.0
      %954 = vmatprep.subr.mxu0 0.0
      %955 = vmatpush1.msra.mxu0 0.0
      %956 = vmatprep.subr.mxu0 0.0
      %957 = vmatpush1.msra.mxu0 0.0
      %958 = vmatprep.mubr.f32.mxu0 0.0
      %959 = vmatmul.mubr.f32.gmra.mrb[0].mxu0 %v878
      %v960 = vpop.f32.mrb[0].mxu0
      %v961 = vadd.f32 0.0, %v960
      %v962 = vpop.f32.mrb[0].mxu0
      %v963 = vadd.f32 0.0, %v962
      %964 = vmatprep.mubr.f32.mxu0 0.0
      %965 = vmatmul.mubr.f32.gmra.mrb[0].mxu0 %v879
      %v966 = vpop.f32.mrb[0].mxu0
      %v967 = vadd.f32 0.0, %v966
      %v968 = vpop.f32.mrb[0].mxu0
      %v969 = vadd.f32 0.0, %v968
      %970 = vmatprep.mubr.f32.mxu0 0.0
      %971 = vmatmul.mubr.f32.gmra.mrb[0].mxu0 %v880
      %v972 = vpop.f32.mrb[0].mxu0
      %v973 = vadd.f32 0.0, %v972
      %v974 = vpop.f32.mrb[0].mxu0
      %v975 = vadd.f32 0.0, %v974
      %976 = vmatprep.mubr.f32.mxu0 0.0
      %977 = vmatmul.mubr.f32.gmra.mrb[0].mxu0 %v881
      %v978 = vpop.f32.mrb[0].mxu0
      %v979 = vadd.f32 0.0, %v978
      %v980 = vpop.f32.mrb[0].mxu0
      %v981 = vadd.f32 0.0, %v980
      %982 = vmatprep.mubr.f32.mxu0 0.0
      %983 = vmatmul.mubr.f32.gmra.mrb[0].mxu0 %v882
      %v984 = vpop.f32.mrb[0].mxu0
      %v985 = vadd.f32 0.0, %v984
      %v986 = vpop.f32.mrb[0].mxu0
      %v987 = vadd.f32 0.0, %v986
      %988 = vmatprep.mubr.f32.mxu0 0.0
      %989 = vmatmul.mubr.f32.gmra.mrb[0].mxu0 %v883
      %v990 = vpop.f32.mrb[0].mxu0
      %v991 = vadd.f32 0.0, %v990
      %v992 = vpop.f32.mrb[0].mxu0
      %v993 = vadd.f32 0.0, %v992
      %994 = vmatprep.mubr.f32.mxu0 0.0
      %995 = vmatmul.mubr.f32.gmra.mrb[0].mxu0 %v884
      %v996 = vpop.f32.mrb[0].mxu0
      %v997 = vadd.f32 0.0, %v996
      %v998 = vpop.f32.mrb[0].mxu0
      %v999 = vadd.f32 0.0, %v998
      %1000 = vmatprep.mubr.f32.mxu0 0.0
      %1001 = vmatmul.mubr.f32.gmra.mrb[0].mxu0 %v885
      %v1002 = vpop.f32.mrb[0].mxu0
      %v1003 = vadd.f32 0.0, %v1002
      %v1004 = vpop.f32.mrb[0].mxu0
      %v1005 = vadd.f32 0.0, %v1004
      %1006 = vmatprep.mubr.f32.mxu0 0.0
      %1007 = vmatmul.mubr.f32.gmra.mrb[0].mxu0 %v886
      %v1008 = vpop.f32.mrb[0].mxu0
      %v1009 = vadd.f32 0.0, %v1008
      %v1010 = vpop.f32.mrb[0].mxu0
      %v1011 = vadd.f32 0.0, %v1010
      %1012 = vmatprep.mubr.f32.mxu0 0.0
      %1013 = vmatmul.mubr.f32.gmra.mrb[0].mxu0 %v887
      %v1014 = vpop.f32.mrb[0].mxu0
      %v1015 = vadd.f32 0.0, %v1014
      %v1016 = vpop.f32.mrb[0].mxu0
      %v1017 = vadd.f32 0.0, %v1016
      %1018 = vmatprep.mubr.f32.mxu0 0.0
      %1019 = vmatmul.mubr.f32.gmra.mrb[0].mxu0 %v888
      %v1020 = vpop.f32.mrb[0].mxu0
      %v1021 = vadd.f32 0.0, %v1020
      %v1022 = vpop.f32.mrb[0].mxu0
      %v1023 = vadd.f32 0.0, %v1022
      %1024 = vmatprep.mubr.f32.mxu0 0.0
      %1025 = vmatmul.mubr.f32.gmra.mrb[0].mxu0 %v889
      %v1026 = vpop.f32.mrb[0].mxu0
      %v1027 = vadd.f32 0.0, %v1026
      %v1028 = vpop.f32.mrb[0].mxu0
      %v1029 = vadd.f32 0.0, %v1028
      %1030 = vmatprep.mubr.f32.mxu0 0.0
      %1031 = vmatmul.mubr.f32.gmra.mrb[0].mxu0 %v890
      %v1032 = vpop.f32.mrb[0].mxu0
      %v1033 = vadd.f32 0.0, %v1032
      %v1034 = vpop.f32.mrb[0].mxu0
      %v1035 = vadd.f32 0.0, %v1034
      %1036 = vmatprep.mubr.f32.mxu0 0.0
      %1037 = vmatmul.mubr.f32.gmra.mrb[0].mxu0 %v891
      %v1038 = vpop.f32.mrb[0].mxu0
      %v1039 = vadd.f32 0.0, %v1038
      %v1040 = vpop.f32.mrb[0].mxu0
      %v1041 = vadd.f32 0.0, %v1040
      %1042 = vmatprep.mubr.f32.mxu0 0.0
      %1043 = vmatmul.mubr.f32.gmra.mrb[0].mxu0 %v892
      %v1044 = vpop.f32.mrb[0].mxu0
      %v1045 = vadd.f32 0.0, %v1044
      %v1046 = vpop.f32.mrb[0].mxu0
      %v1047 = vadd.f32 0.0, %v1046
      %1048 = vmatprep.mubr.f32.mxu0 0.0
      %1049 = vmatmul.mubr.f32.gmra.mrb[0].mxu0 %v893
      %v1050 = vpop.f32.mrb[0].mxu0
      %v1051 = vadd.f32 0.0, %v1050
      %v1052 = vpop.f32.mrb[0].mxu0
      %v1053 = vadd.f32 0.0, %v1052
      %1054 = vdwg.mxu0
      %v1055 = vlaneseq
      %v1056 = vshrl.u32 %v1055, 7
      %v1057 = vsub.s32 4, %v1056
      %v1058 = vrot.slane %v307, %v1057
      %v1059 = vlaneseq
      %v1060 = vshrl.u32 %v1059, 7
      %v1061 = vsub.s32 4, %v1060
      %v1062 = vrot.slane %v308, %v1061
      %v1063 = vmul.f32 %v1058, %v961
      %v1064 = vmul.f32 %v1062, %v963
      %v1065 = vmul.f32 %v1058, %v967
      %v1066 = vmul.f32 %v1062, %v969
      %v1067 = vmul.f32 %v1058, %v973
      %v1068 = vmul.f32 %v1062, %v975
      %v1069 = vmul.f32 %v1058, %v979
      %v1070 = vmul.f32 %v1062, %v981
      %v1071 = vmul.f32 %v1058, %v985
      %v1072 = vmul.f32 %v1062, %v987
      %v1073 = vmul.f32 %v1058, %v991
      %v1074 = vmul.f32 %v1062, %v993
      %v1075 = vmul.f32 %v1058, %v997
      %v1076 = vmul.f32 %v1062, %v999
      %v1077 = vmul.f32 %v1058, %v1003
      %v1078 = vmul.f32 %v1062, %v1005
      %v1079 = vmul.f32 %v1058, %v1009
      %v1080 = vmul.f32 %v1062, %v1011
      %v1081 = vmul.f32 %v1058, %v1015
      %v1082 = vmul.f32 %v1062, %v1017
      %v1083 = vmul.f32 %v1058, %v1021
      %v1084 = vmul.f32 %v1062, %v1023
      %v1085 = vmul.f32 %v1058, %v1027
      %v1086 = vmul.f32 %v1062, %v1029
      %v1087 = vmul.f32 %v1058, %v1033
      %v1088 = vmul.f32 %v1062, %v1035
      %v1089 = vmul.f32 %v1058, %v1039
      %v1090 = vmul.f32 %v1062, %v1041
      %v1091 = vmul.f32 %v1058, %v1045
      %v1092 = vmul.f32 %v1062, %v1047
      %v1093 = vmul.f32 %v1058, %v1051
      %v1094 = vmul.f32 %v1062, %v1053
      %v1095 = vld [vmem:[%s5] sm:$0xff]
      %v1096 = vld [vmem:[%s5 + $0x8] sm:$0xff]
      %v1097 = vld [vmem:[%s5 + $0x10] sm:$0xff]
      %v1098 = vld [vmem:[%s5 + $0x18] sm:$0xff]
      %v1099 = vld [vmem:[%s5 + $0x20] sm:$0xff]
      %v1100 = vld [vmem:[%s5 + $0x28] sm:$0xff]
      %v1101 = vld [vmem:[%s5 + $0x30] sm:$0xff]
      %v1102 = vld [vmem:[%s5 + $0x38] sm:$0xff]
      %v1103 = vld [vmem:[%s5 + $0x40] sm:$0xff]
      %v1104 = vld [vmem:[%s5 + $0x48] sm:$0xff]
      %v1105 = vld [vmem:[%s5 + $0x50] sm:$0xff]
      %v1106 = vld [vmem:[%s5 + $0x58] sm:$0xff]
      %v1107 = vld [vmem:[%s5 + $0x60] sm:$0xff]
      %v1108 = vld [vmem:[%s5 + $0x68] sm:$0xff]
      %v1109 = vld [vmem:[%s5 + $0x70] sm:$0xff]
      %v1110 = vld [vmem:[%s5 + $0x78] sm:$0xff]
      %1112 = vset.pattern.permute.xlu0 0
      %1113 = vperm.xlu0 %1112, %v1095
      %v1114 = vpop.permute.xlu0 %1113
      %1117 = vset.pattern.permute.xlu0 0
      %1118 = vperm.xlu0 %1117, %v1096
      %v1119 = vpop.permute.xlu0 %1118
      %1122 = vset.pattern.permute.xlu0 0
      %1123 = vperm.xlu0 %1122, %v1097
      %v1124 = vpop.permute.xlu0 %1123
      %1127 = vset.pattern.permute.xlu0 0
      %1128 = vperm.xlu0 %1127, %v1098
      %v1129 = vpop.permute.xlu0 %1128
      %1132 = vset.pattern.permute.xlu0 0
      %1133 = vperm.xlu0 %1132, %v1099
      %v1134 = vpop.permute.xlu0 %1133
      %1137 = vset.pattern.permute.xlu0 0
      %1138 = vperm.xlu0 %1137, %v1100
      %v1139 = vpop.permute.xlu0 %1138
      %1142 = vset.pattern.permute.xlu0 0
      %1143 = vperm.xlu0 %1142, %v1101
      %v1144 = vpop.permute.xlu0 %1143
      %1147 = vset.pattern.permute.xlu0 0
      %1148 = vperm.xlu0 %1147, %v1102
      %v1149 = vpop.permute.xlu0 %1148
      %1152 = vset.pattern.permute.xlu0 0
      %1153 = vperm.xlu0 %1152, %v1103
      %v1154 = vpop.permute.xlu0 %1153
      %1157 = vset.pattern.permute.xlu0 0
      %1158 = vperm.xlu0 %1157, %v1104
      %v1159 = vpop.permute.xlu0 %1158
      %1162 = vset.pattern.permute.xlu0 0
      %1163 = vperm.xlu0 %1162, %v1105
      %v1164 = vpop.permute.xlu0 %1163
      %1167 = vset.pattern.permute.xlu0 0
      %1168 = vperm.xlu0 %1167, %v1106
      %v1169 = vpop.permute.xlu0 %1168
      %1172 = vset.pattern.permute.xlu0 0
      %1173 = vperm.xlu0 %1172, %v1107
      %v1174 = vpop.permute.xlu0 %1173
      %1177 = vset.pattern.permute.xlu0 0
      %1178 = vperm.xlu0 %1177, %v1108
      %v1179 = vpop.permute.xlu0 %1178
      %1182 = vset.pattern.permute.xlu0 0
      %1183 = vperm.xlu0 %1182, %v1109
      %v1184 = vpop.permute.xlu0 %1183
      %1187 = vset.pattern.permute.xlu0 0
      %1188 = vperm.xlu0 %1187, %v1110
      %v1189 = vpop.permute.xlu0 %1188
      %v1191 = vadd.f32 %v1063, %v1114
      %v1192 = vadd.f32 %v1064, %v1114
      %v1193 = vadd.f32 %v1065, %v1119
      %v1194 = vadd.f32 %v1066, %v1119
      %v1195 = vadd.f32 %v1067, %v1124
      %v1196 = vadd.f32 %v1068, %v1124
      %v1197 = vadd.f32 %v1069, %v1129
      %v1198 = vadd.f32 %v1070, %v1129
      %v1199 = vadd.f32 %v1071, %v1134
      %v1200 = vadd.f32 %v1072, %v1134
      %v1201 = vadd.f32 %v1073, %v1139
      %v1202 = vadd.f32 %v1074, %v1139
      %v1203 = vadd.f32 %v1075, %v1144
      %v1204 = vadd.f32 %v1076, %v1144
      %v1205 = vadd.f32 %v1077, %v1149
      %v1206 = vadd.f32 %v1078, %v1149
      %v1207 = vadd.f32 %v1079, %v1154
      %v1208 = vadd.f32 %v1080, %v1154
      %v1209 = vadd.f32 %v1081, %v1159
      %v1210 = vadd.f32 %v1082, %v1159
      %v1211 = vadd.f32 %v1083, %v1164
      %v1212 = vadd.f32 %v1084, %v1164
      %v1213 = vadd.f32 %v1085, %v1169
      %v1214 = vadd.f32 %v1086, %v1169
      %v1215 = vadd.f32 %v1087, %v1174
      %v1216 = vadd.f32 %v1088, %v1174
      %v1217 = vadd.f32 %v1089, %v1179
      %v1218 = vadd.f32 %v1090, %v1179
      %v1219 = vadd.f32 %v1091, %v1184
      %v1220 = vadd.f32 %v1092, %v1184
      %v1221 = vadd.f32 %v1093, %v1189
      %v1222 = vadd.f32 %v1094, %v1189
      %1239 = vrot.lane.b32.xlu0 %v963, 17
      %v1240 = vpop.permute.xlu0 %1239
      %1241 = vrot.lane.b32.xlu0 %v969, 17
      %v1242 = vpop.permute.xlu0 %1241
      %1243 = vrot.lane.b32.xlu0 %v975, 17
      %v1244 = vpop.permute.xlu0 %1243
      %1245 = vrot.lane.b32.xlu0 %v981, 17
      %v1246 = vpop.permute.xlu0 %1245
      %1247 = vrot.lane.b32.xlu0 %v987, 17
      %v1248 = vpop.permute.xlu0 %1247
      %1249 = vrot.lane.b32.xlu0 %v993, 17
      %v1250 = vpop.permute.xlu0 %1249
      %1251 = vrot.lane.b32.xlu0 %v999, 17
      %v1252 = vpop.permute.xlu0 %1251
      %1253 = vrot.lane.b32.xlu0 %v1005, 17
      %v1254 = vpop.permute.xlu0 %1253
      %1255 = vrot.lane.b32.xlu0 %v1011, 17
      %v1256 = vpop.permute.xlu0 %1255
      %1257 = vrot.lane.b32.xlu0 %v1017, 17
      %v1258 = vpop.permute.xlu0 %1257
      %1259 = vrot.lane.b32.xlu0 %v1023, 17
      %v1260 = vpop.permute.xlu0 %1259
      %1261 = vrot.lane.b32.xlu0 %v1029, 17
      %v1262 = vpop.permute.xlu0 %1261
      %1263 = vrot.lane.b32.xlu0 %v1035, 17
      %v1264 = vpop.permute.xlu0 %1263
      %1265 = vrot.lane.b32.xlu0 %v1041, 17
      %v1266 = vpop.permute.xlu0 %1265
      %1267 = vrot.lane.b32.xlu0 %v1047, 17
      %v1268 = vpop.permute.xlu0 %1267
      %1269 = vrot.lane.b32.xlu0 %v1053, 17
      %v1270 = vpop.permute.xlu0 %1269
      %1303 = vrot.lane.b32.xlu0 %v961, 17
      %v1304 = vpop.permute.xlu0 %1303
      %1305 = vrot.lane.b32.xlu0 %v967, 17
      %v1306 = vpop.permute.xlu0 %1305
      %1307 = vrot.lane.b32.xlu0 %v973, 17
      %v1308 = vpop.permute.xlu0 %1307
      %1309 = vrot.lane.b32.xlu0 %v979, 17
      %v1310 = vpop.permute.xlu0 %1309
      %1311 = vrot.lane.b32.xlu0 %v985, 17
      %v1312 = vpop.permute.xlu0 %1311
      %1313 = vrot.lane.b32.xlu0 %v991, 17
      %v1314 = vpop.permute.xlu0 %1313
      %1315 = vrot.lane.b32.xlu0 %v997, 17
      %v1316 = vpop.permute.xlu0 %1315
      %1317 = vrot.lane.b32.xlu0 %v1003, 17
      %v1318 = vpop.permute.xlu0 %1317
      %1319 = vrot.lane.b32.xlu0 %v1009, 17
      %v1320 = vpop.permute.xlu0 %1319
      %1321 = vrot.lane.b32.xlu0 %v1015, 17
      %v1322 = vpop.permute.xlu0 %1321
      %1323 = vrot.lane.b32.xlu0 %v1021, 17
      %v1324 = vpop.permute.xlu0 %1323
      %1325 = vrot.lane.b32.xlu0 %v1027, 17
      %v1326 = vpop.permute.xlu0 %1325
      %1327 = vrot.lane.b32.xlu0 %v1033, 17
      %v1328 = vpop.permute.xlu0 %1327
      %1329 = vrot.lane.b32.xlu0 %v1039, 17
      %v1330 = vpop.permute.xlu0 %1329
      %1331 = vrot.lane.b32.xlu0 %v1045, 17
      %v1332 = vpop.permute.xlu0 %1331
      %1333 = vrot.lane.b32.xlu0 %v1051, 17
      %v1334 = vpop.permute.xlu0 %1333
      %vm1335 = vcmask 138240
      %v1336 = vsel %vm1335, %v1304, %v1240
      %v1337 = vsel %vm1335, %v1306, %v1242
      %v1338 = vsel %vm1335, %v1308, %v1244
      %v1339 = vsel %vm1335, %v1310, %v1246
      %v1340 = vsel %vm1335, %v1312, %v1248
      %v1341 = vsel %vm1335, %v1314, %v1250
      %v1342 = vsel %vm1335, %v1316, %v1252
      %v1343 = vsel %vm1335, %v1318, %v1254
      %v1344 = vsel %vm1335, %v1320, %v1256
      %v1345 = vsel %vm1335, %v1322, %v1258
      %v1346 = vsel %vm1335, %v1324, %v1260
      %v1347 = vsel %vm1335, %v1326, %v1262
      %v1348 = vsel %vm1335, %v1328, %v1264
      %v1349 = vsel %vm1335, %v1330, %v1266
      %v1350 = vsel %vm1335, %v1332, %v1268
      %v1351 = vsel %vm1335, %v1334, %v1270
      %v1384 = vsel %vm1335, %v1240, %v1304
      %v1385 = vsel %vm1335, %v1242, %v1306
      %v1386 = vsel %vm1335, %v1244, %v1308
      %v1387 = vsel %vm1335, %v1246, %v1310
      %v1388 = vsel %vm1335, %v1248, %v1312
      %v1389 = vsel %vm1335, %v1250, %v1314
      %v1390 = vsel %vm1335, %v1252, %v1316
      %v1391 = vsel %vm1335, %v1254, %v1318
      %v1392 = vsel %vm1335, %v1256, %v1320
      %v1393 = vsel %vm1335, %v1258, %v1322
      %v1394 = vsel %vm1335, %v1260, %v1324
      %v1395 = vsel %vm1335, %v1262, %v1326
      %v1396 = vsel %vm1335, %v1264, %v1328
      %v1397 = vsel %vm1335, %v1266, %v1330
      %v1398 = vsel %vm1335, %v1268, %v1332
      %v1399 = vsel %vm1335, %v1270, %v1334
      %v1400 = vlaneseq
      %v1401 = vshrl.u32 %v1400, 7
      %v1402 = vsub.s32 0, %v1401
      %v1403 = vrot.slane %v307, %v1402
      %v1404 = vlaneseq
      %v1405 = vshrl.u32 %v1404, 7
      %v1406 = vsub.s32 0, %v1405
      %v1407 = vrot.slane %v308, %v1406
      %v1408 = vmul.f32 %v1403, %v1384
      %v1409 = vmul.f32 %v1407, %v1336
      %v1410 = vmul.f32 %v1403, %v1385
      %v1411 = vmul.f32 %v1407, %v1337
      %v1412 = vmul.f32 %v1403, %v1386
      %v1413 = vmul.f32 %v1407, %v1338
      %v1414 = vmul.f32 %v1403, %v1387
      %v1415 = vmul.f32 %v1407, %v1339
      %v1416 = vmul.f32 %v1403, %v1388
      %v1417 = vmul.f32 %v1407, %v1340
      %v1418 = vmul.f32 %v1403, %v1389
      %v1419 = vmul.f32 %v1407, %v1341
      %v1420 = vmul.f32 %v1403, %v1390
      %v1421 = vmul.f32 %v1407, %v1342
      %v1422 = vmul.f32 %v1403, %v1391
      %v1423 = vmul.f32 %v1407, %v1343
      %v1424 = vmul.f32 %v1403, %v1392
      %v1425 = vmul.f32 %v1407, %v1344
      %v1426 = vmul.f32 %v1403, %v1393
      %v1427 = vmul.f32 %v1407, %v1345
      %v1428 = vmul.f32 %v1403, %v1394
      %v1429 = vmul.f32 %v1407, %v1346
      %v1430 = vmul.f32 %v1403, %v1395
      %v1431 = vmul.f32 %v1407, %v1347
      %v1432 = vmul.f32 %v1403, %v1396
      %v1433 = vmul.f32 %v1407, %v1348
      %v1434 = vmul.f32 %v1403, %v1397
      %v1435 = vmul.f32 %v1407, %v1349
      %v1436 = vmul.f32 %v1403, %v1398
      %v1437 = vmul.f32 %v1407, %v1350
      %v1438 = vmul.f32 %v1403, %v1399
      %v1439 = vmul.f32 %v1407, %v1351
      %v1440 = vadd.f32 %v1191, %v1408
      %v1441 = vadd.f32 %v1192, %v1409
      %v1442 = vadd.f32 %v1193, %v1410
      %v1443 = vadd.f32 %v1194, %v1411
      %v1444 = vadd.f32 %v1195, %v1412
      %v1445 = vadd.f32 %v1196, %v1413
      %v1446 = vadd.f32 %v1197, %v1414
      %v1447 = vadd.f32 %v1198, %v1415
      %v1448 = vadd.f32 %v1199, %v1416
      %v1449 = vadd.f32 %v1200, %v1417
      %v1450 = vadd.f32 %v1201, %v1418
      %v1451 = vadd.f32 %v1202, %v1419
      %v1452 = vadd.f32 %v1203, %v1420
      %v1453 = vadd.f32 %v1204, %v1421
      %v1454 = vadd.f32 %v1205, %v1422
      %v1455 = vadd.f32 %v1206, %v1423
      %v1456 = vadd.f32 %v1207, %v1424
      %v1457 = vadd.f32 %v1208, %v1425
      %v1458 = vadd.f32 %v1209, %v1426
      %v1459 = vadd.f32 %v1210, %v1427
      %v1460 = vadd.f32 %v1211, %v1428
      %v1461 = vadd.f32 %v1212, %v1429
      %v1462 = vadd.f32 %v1213, %v1430
      %v1463 = vadd.f32 %v1214, %v1431
      %v1464 = vadd.f32 %v1215, %v1432
      %v1465 = vadd.f32 %v1216, %v1433
      %v1466 = vadd.f32 %v1217, %v1434
      %v1467 = vadd.f32 %v1218, %v1435
      %v1468 = vadd.f32 %v1219, %v1436
      %v1469 = vadd.f32 %v1220, %v1437
      %v1470 = vadd.f32 %v1221, %v1438
      %v1471 = vadd.f32 %v1222, %v1439
      %1472 = vrot.lane.b32.xlu0 %v963, 16
      %v1473 = vpop.permute.xlu0 %1472
      %1474 = vrot.lane.b32.xlu0 %v969, 16
      %v1475 = vpop.permute.xlu0 %1474
      %1476 = vrot.lane.b32.xlu0 %v975, 16
      %v1477 = vpop.permute.xlu0 %1476
      %1478 = vrot.lane.b32.xlu0 %v981, 16
      %v1479 = vpop.permute.xlu0 %1478
      %1480 = vrot.lane.b32.xlu0 %v987, 16
      %v1481 = vpop.permute.xlu0 %1480
      %1482 = vrot.lane.b32.xlu0 %v993, 16
      %v1483 = vpop.permute.xlu0 %1482
      %1484 = vrot.lane.b32.xlu0 %v999, 16
      %v1485 = vpop.permute.xlu0 %1484
      %1486 = vrot.lane.b32.xlu0 %v1005, 16
      %v1487 = vpop.permute.xlu0 %1486
      %1488 = vrot.lane.b32.xlu0 %v1011, 16
      %v1489 = vpop.permute.xlu0 %1488
      %1490 = vrot.lane.b32.xlu0 %v1017, 16
      %v1491 = vpop.permute.xlu0 %1490
      %1492 = vrot.lane.b32.xlu0 %v1023, 16
      %v1493 = vpop.permute.xlu0 %1492
      %1494 = vrot.lane.b32.xlu0 %v1029, 16
      %v1495 = vpop.permute.xlu0 %1494
      %1496 = vrot.lane.b32.xlu0 %v1035, 16
      %v1497 = vpop.permute.xlu0 %1496
      %1498 = vrot.lane.b32.xlu0 %v1041, 16
      %v1499 = vpop.permute.xlu0 %1498
      %1500 = vrot.lane.b32.xlu0 %v1047, 16
      %v1501 = vpop.permute.xlu0 %1500
      %1502 = vrot.lane.b32.xlu0 %v1053, 16
      %v1503 = vpop.permute.xlu0 %1502
      %1520 = vrot.lane.b32.xlu0 %v961, 16
      %v1521 = vpop.permute.xlu0 %1520
      %1522 = vrot.lane.b32.xlu0 %v967, 16
      %v1523 = vpop.permute.xlu0 %1522
      %1524 = vrot.lane.b32.xlu0 %v973, 16
      %v1525 = vpop.permute.xlu0 %1524
      %1526 = vrot.lane.b32.xlu0 %v979, 16
      %v1527 = vpop.permute.xlu0 %1526
      %1528 = vrot.lane.b32.xlu0 %v985, 16
      %v1529 = vpop.permute.xlu0 %1528
      %1530 = vrot.lane.b32.xlu0 %v991, 16
      %v1531 = vpop.permute.xlu0 %1530
      %1532 = vrot.lane.b32.xlu0 %v997, 16
      %v1533 = vpop.permute.xlu0 %1532
      %1534 = vrot.lane.b32.xlu0 %v1003, 16
      %v1535 = vpop.permute.xlu0 %1534
      %1536 = vrot.lane.b32.xlu0 %v1009, 16
      %v1537 = vpop.permute.xlu0 %1536
      %1538 = vrot.lane.b32.xlu0 %v1015, 16
      %v1539 = vpop.permute.xlu0 %1538
      %1540 = vrot.lane.b32.xlu0 %v1021, 16
      %v1541 = vpop.permute.xlu0 %1540
      %1542 = vrot.lane.b32.xlu0 %v1027, 16
      %v1543 = vpop.permute.xlu0 %1542
      %1544 = vrot.lane.b32.xlu0 %v1033, 16
      %v1545 = vpop.permute.xlu0 %1544
      %1546 = vrot.lane.b32.xlu0 %v1039, 16
      %v1547 = vpop.permute.xlu0 %1546
      %1548 = vrot.lane.b32.xlu0 %v1045, 16
      %v1549 = vpop.permute.xlu0 %1548
      %1550 = vrot.lane.b32.xlu0 %v1051, 16
      %v1551 = vpop.permute.xlu0 %1550
      %vm1552 = vcmask 130048
      %v1553 = vsel %vm1552, %v1521, %v1473
      %v1554 = vsel %vm1552, %v1523, %v1475
      %v1555 = vsel %vm1552, %v1525, %v1477
      %v1556 = vsel %vm1552, %v1527, %v1479
      %v1557 = vsel %vm1552, %v1529, %v1481
      %v1558 = vsel %vm1552, %v1531, %v1483
      %v1559 = vsel %vm1552, %v1533, %v1485
      %v1560 = vsel %vm1552, %v1535, %v1487
      %v1561 = vsel %vm1552, %v1537, %v1489
      %v1562 = vsel %vm1552, %v1539, %v1491
      %v1563 = vsel %vm1552, %v1541, %v1493
      %v1564 = vsel %vm1552, %v1543, %v1495
      %v1565 = vsel %vm1552, %v1545, %v1497
      %v1566 = vsel %vm1552, %v1547, %v1499
      %v1567 = vsel %vm1552, %v1549, %v1501
      %v1568 = vsel %vm1552, %v1551, %v1503
      %v1601 = vsel %vm1552, %v1473, %v1521
      %v1602 = vsel %vm1552, %v1475, %v1523
      %v1603 = vsel %vm1552, %v1477, %v1525
      %v1604 = vsel %vm1552, %v1479, %v1527
      %v1605 = vsel %vm1552, %v1481, %v1529
      %v1606 = vsel %vm1552, %v1483, %v1531
      %v1607 = vsel %vm1552, %v1485, %v1533
      %v1608 = vsel %vm1552, %v1487, %v1535
      %v1609 = vsel %vm1552, %v1489, %v1537
      %v1610 = vsel %vm1552, %v1491, %v1539
      %v1611 = vsel %vm1552, %v1493, %v1541
      %v1612 = vsel %vm1552, %v1495, %v1543
      %v1613 = vsel %vm1552, %v1497, %v1545
      %v1614 = vsel %vm1552, %v1499, %v1547
      %v1615 = vsel %vm1552, %v1501, %v1549
      %v1616 = vsel %vm1552, %v1503, %v1551
      %v1617 = vlaneseq
      %v1618 = vshrl.u32 %v1617, 7
      %v1619 = vsub.s32 1, %v1618
      %v1620 = vrot.slane %v307, %v1619
      %v1621 = vlaneseq
      %v1622 = vshrl.u32 %v1621, 7
      %v1623 = vsub.s32 1, %v1622
      %v1624 = vrot.slane %v308, %v1623
      %v1625 = vmul.f32 %v1620, %v1601
      %v1626 = vmul.f32 %v1624, %v1553
      %v1627 = vmul.f32 %v1620, %v1602
      %v1628 = vmul.f32 %v1624, %v1554
      %v1629 = vmul.f32 %v1620, %v1603
      %v1630 = vmul.f32 %v1624, %v1555
      %v1631 = vmul.f32 %v1620, %v1604
      %v1632 = vmul.f32 %v1624, %v1556
      %v1633 = vmul.f32 %v1620, %v1605
      %v1634 = vmul.f32 %v1624, %v1557
      %v1635 = vmul.f32 %v1620, %v1606
      %v1636 = vmul.f32 %v1624, %v1558
      %v1637 = vmul.f32 %v1620, %v1607
      %v1638 = vmul.f32 %v1624, %v1559
      %v1639 = vmul.f32 %v1620, %v1608
      %v1640 = vmul.f32 %v1624, %v1560
      %v1641 = vmul.f32 %v1620, %v1609
      %v1642 = vmul.f32 %v1624, %v1561
      %v1643 = vmul.f32 %v1620, %v1610
      %v1644 = vmul.f32 %v1624, %v1562
      %v1645 = vmul.f32 %v1620, %v1611
      %v1646 = vmul.f32 %v1624, %v1563
      %v1647 = vmul.f32 %v1620, %v1612
      %v1648 = vmul.f32 %v1624, %v1564
      %v1649 = vmul.f32 %v1620, %v1613
      %v1650 = vmul.f32 %v1624, %v1565
      %v1651 = vmul.f32 %v1620, %v1614
      %v1652 = vmul.f32 %v1624, %v1566
      %v1653 = vmul.f32 %v1620, %v1615
      %v1654 = vmul.f32 %v1624, %v1567
      %v1655 = vmul.f32 %v1620, %v1616
      %v1656 = vmul.f32 %v1624, %v1568
      %v1657 = vadd.f32 %v1440, %v1625
      %v1658 = vadd.f32 %v1441, %v1626
      %v1659 = vadd.f32 %v1442, %v1627
      %v1660 = vadd.f32 %v1443, %v1628
      %v1661 = vadd.f32 %v1444, %v1629
      %v1662 = vadd.f32 %v1445, %v1630
      %v1663 = vadd.f32 %v1446, %v1631
      %v1664 = vadd.f32 %v1447, %v1632
      %v1665 = vadd.f32 %v1448, %v1633
      %v1666 = vadd.f32 %v1449, %v1634
      %v1667 = vadd.f32 %v1450, %v1635
      %v1668 = vadd.f32 %v1451, %v1636
      %v1669 = vadd.f32 %v1452, %v1637
      %v1670 = vadd.f32 %v1453, %v1638
      %v1671 = vadd.f32 %v1454, %v1639
      %v1672 = vadd.f32 %v1455, %v1640
      %v1673 = vadd.f32 %v1456, %v1641
      %v1674 = vadd.f32 %v1457, %v1642
      %v1675 = vadd.f32 %v1458, %v1643
      %v1676 = vadd.f32 %v1459, %v1644
      %v1677 = vadd.f32 %v1460, %v1645
      %v1678 = vadd.f32 %v1461, %v1646
      %v1679 = vadd.f32 %v1462, %v1647
      %v1680 = vadd.f32 %v1463, %v1648
      %v1681 = vadd.f32 %v1464, %v1649
      %v1682 = vadd.f32 %v1465, %v1650
      %v1683 = vadd.f32 %v1466, %v1651
      %v1684 = vadd.f32 %v1467, %v1652
      %v1685 = vadd.f32 %v1468, %v1653
      %v1686 = vadd.f32 %v1469, %v1654
      %v1687 = vadd.f32 %v1470, %v1655
      %v1688 = vadd.f32 %v1471, %v1656
      %1689 = vrot.lane.b32.xlu0 %v963, 15
      %v1690 = vpop.permute.xlu0 %1689
      %1691 = vrot.lane.b32.xlu0 %v969, 15
      %v1692 = vpop.permute.xlu0 %1691
      %1693 = vrot.lane.b32.xlu0 %v975, 15
      %v1694 = vpop.permute.xlu0 %1693
      %1695 = vrot.lane.b32.xlu0 %v981, 15
      %v1696 = vpop.permute.xlu0 %1695
      %1697 = vrot.lane.b32.xlu0 %v987, 15
      %v1698 = vpop.permute.xlu0 %1697
      %1699 = vrot.lane.b32.xlu0 %v993, 15
      %v1700 = vpop.permute.xlu0 %1699
      %1701 = vrot.lane.b32.xlu0 %v999, 15
      %v1702 = vpop.permute.xlu0 %1701
      %1703 = vrot.lane.b32.xlu0 %v1005, 15
      %v1704 = vpop.permute.xlu0 %1703
      %1705 = vrot.lane.b32.xlu0 %v1011, 15
      %v1706 = vpop.permute.xlu0 %1705
      %1707 = vrot.lane.b32.xlu0 %v1017, 15
      %v1708 = vpop.permute.xlu0 %1707
      %1709 = vrot.lane.b32.xlu0 %v1023, 15
      %v1710 = vpop.permute.xlu0 %1709
      %1711 = vrot.lane.b32.xlu0 %v1029, 15
      %v1712 = vpop.permute.xlu0 %1711
      %1713 = vrot.lane.b32.xlu0 %v1035, 15
      %v1714 = vpop.permute.xlu0 %1713
      %1715 = vrot.lane.b32.xlu0 %v1041, 15
      %v1716 = vpop.permute.xlu0 %1715
      %1717 = vrot.lane.b32.xlu0 %v1047, 15
      %v1718 = vpop.permute.xlu0 %1717
      %1719 = vrot.lane.b32.xlu0 %v1053, 15
      %v1720 = vpop.permute.xlu0 %1719
      %1737 = vrot.lane.b32.xlu0 %v961, 15
      %v1738 = vpop.permute.xlu0 %1737
      %1739 = vrot.lane.b32.xlu0 %v967, 15
      %v1740 = vpop.permute.xlu0 %1739
      %1741 = vrot.lane.b32.xlu0 %v973, 15
      %v1742 = vpop.permute.xlu0 %1741
      %1743 = vrot.lane.b32.xlu0 %v979, 15
      %v1744 = vpop.permute.xlu0 %1743
      %1745 = vrot.lane.b32.xlu0 %v985, 15
      %v1746 = vpop.permute.xlu0 %1745
      %1747 = vrot.lane.b32.xlu0 %v991, 15
      %v1748 = vpop.permute.xlu0 %1747
      %1749 = vrot.lane.b32.xlu0 %v997, 15
      %v1750 = vpop.permute.xlu0 %1749
      %1751 = vrot.lane.b32.xlu0 %v1003, 15
      %v1752 = vpop.permute.xlu0 %1751
      %1753 = vrot.lane.b32.xlu0 %v1009, 15
      %v1754 = vpop.permute.xlu0 %1753
      %1755 = vrot.lane.b32.xlu0 %v1015, 15
      %v1756 = vpop.permute.xlu0 %1755
      %1757 = vrot.lane.b32.xlu0 %v1021, 15
      %v1758 = vpop.permute.xlu0 %1757
      %1759 = vrot.lane.b32.xlu0 %v1027, 15
      %v1760 = vpop.permute.xlu0 %1759
      %1761 = vrot.lane.b32.xlu0 %v1033, 15
      %v1762 = vpop.permute.xlu0 %1761
      %1763 = vrot.lane.b32.xlu0 %v1039, 15
      %v1764 = vpop.permute.xlu0 %1763
      %1765 = vrot.lane.b32.xlu0 %v1045, 15
      %v1766 = vpop.permute.xlu0 %1765
      %1767 = vrot.lane.b32.xlu0 %v1051, 15
      %v1768 = vpop.permute.xlu0 %1767
      %vm1769 = vcmask 121856
      %v1770 = vsel %vm1769, %v1738, %v1690
      %v1771 = vsel %vm1769, %v1740, %v1692
      %v1772 = vsel %vm1769, %v1742, %v1694
      %v1773 = vsel %vm1769, %v1744, %v1696
      %v1774 = vsel %vm1769, %v1746, %v1698
      %v1775 = vsel %vm1769, %v1748, %v1700
      %v1776 = vsel %vm1769, %v1750, %v1702
      %v1777 = vsel %vm1769, %v1752, %v1704
      %v1778 = vsel %vm1769, %v1754, %v1706
      %v1779 = vsel %vm1769, %v1756, %v1708
      %v1780 = vsel %vm1769, %v1758, %v1710
      %v1781 = vsel %vm1769, %v1760, %v1712
      %v1782 = vsel %vm1769, %v1762, %v1714
      %v1783 = vsel %vm1769, %v1764, %v1716
      %v1784 = vsel %vm1769, %v1766, %v1718
      %v1785 = vsel %vm1769, %v1768, %v1720
      %v1818 = vsel %vm1769, %v1690, %v1738
      %v1819 = vsel %vm1769, %v1692, %v1740
      %v1820 = vsel %vm1769, %v1694, %v1742
      %v1821 = vsel %vm1769, %v1696, %v1744
      %v1822 = vsel %vm1769, %v1698, %v1746
      %v1823 = vsel %vm1769, %v1700, %v1748
      %v1824 = vsel %vm1769, %v1702, %v1750
      %v1825 = vsel %vm1769, %v1704, %v1752
      %v1826 = vsel %vm1769, %v1706, %v1754
      %v1827 = vsel %vm1769, %v1708, %v1756
      %v1828 = vsel %vm1769, %v1710, %v1758
      %v1829 = vsel %vm1769, %v1712, %v1760
      %v1830 = vsel %vm1769, %v1714, %v1762
      %v1831 = vsel %vm1769, %v1716, %v1764
      %v1832 = vsel %vm1769, %v1718, %v1766
      %v1833 = vsel %vm1769, %v1720, %v1768
      %v1834 = vlaneseq
      %v1835 = vshrl.u32 %v1834, 7
      %v1836 = vsub.s32 2, %v1835
      %v1837 = vrot.slane %v307, %v1836
      %v1838 = vlaneseq
      %v1839 = vshrl.u32 %v1838, 7
      %v1840 = vsub.s32 2, %v1839
      %v1841 = vrot.slane %v308, %v1840
      %v1842 = vmul.f32 %v1837, %v1818
      %v1843 = vmul.f32 %v1841, %v1770
      %v1844 = vmul.f32 %v1837, %v1819
      %v1845 = vmul.f32 %v1841, %v1771
      %v1846 = vmul.f32 %v1837, %v1820
      %v1847 = vmul.f32 %v1841, %v1772
      %v1848 = vmul.f32 %v1837, %v1821
      %v1849 = vmul.f32 %v1841, %v1773
      %v1850 = vmul.f32 %v1837, %v1822
      %v1851 = vmul.f32 %v1841, %v1774
      %v1852 = vmul.f32 %v1837, %v1823
      %v1853 = vmul.f32 %v1841, %v1775
      %v1854 = vmul.f32 %v1837, %v1824
      %v1855 = vmul.f32 %v1841, %v1776
      %v1856 = vmul.f32 %v1837, %v1825
      %v1857 = vmul.f32 %v1841, %v1777
      %v1858 = vmul.f32 %v1837, %v1826
      %v1859 = vmul.f32 %v1841, %v1778
      %v1860 = vmul.f32 %v1837, %v1827
      %v1861 = vmul.f32 %v1841, %v1779
      %v1862 = vmul.f32 %v1837, %v1828
      %v1863 = vmul.f32 %v1841, %v1780
      %v1864 = vmul.f32 %v1837, %v1829
      %v1865 = vmul.f32 %v1841, %v1781
      %v1866 = vmul.f32 %v1837, %v1830
      %v1867 = vmul.f32 %v1841, %v1782
      %v1868 = vmul.f32 %v1837, %v1831
      %v1869 = vmul.f32 %v1841, %v1783
      %v1870 = vmul.f32 %v1837, %v1832
      %v1871 = vmul.f32 %v1841, %v1784
      %v1872 = vmul.f32 %v1837, %v1833
      %v1873 = vmul.f32 %v1841, %v1785
      %v1874 = vadd.f32 %v1657, %v1842
      %v1875 = vadd.f32 %v1658, %v1843
      %v1876 = vadd.f32 %v1659, %v1844
      %v1877 = vadd.f32 %v1660, %v1845
      %v1878 = vadd.f32 %v1661, %v1846
      %v1879 = vadd.f32 %v1662, %v1847
      %v1880 = vadd.f32 %v1663, %v1848
      %v1881 = vadd.f32 %v1664, %v1849
      %v1882 = vadd.f32 %v1665, %v1850
      %v1883 = vadd.f32 %v1666, %v1851
      %v1884 = vadd.f32 %v1667, %v1852
      %v1885 = vadd.f32 %v1668, %v1853
      %v1886 = vadd.f32 %v1669, %v1854
      %v1887 = vadd.f32 %v1670, %v1855
      %v1888 = vadd.f32 %v1671, %v1856
      %v1889 = vadd.f32 %v1672, %v1857
      %v1890 = vadd.f32 %v1673, %v1858
      %v1891 = vadd.f32 %v1674, %v1859
      %v1892 = vadd.f32 %v1675, %v1860
      %v1893 = vadd.f32 %v1676, %v1861
      %v1894 = vadd.f32 %v1677, %v1862
      %v1895 = vadd.f32 %v1678, %v1863
      %v1896 = vadd.f32 %v1679, %v1864
      %v1897 = vadd.f32 %v1680, %v1865
      %v1898 = vadd.f32 %v1681, %v1866
      %v1899 = vadd.f32 %v1682, %v1867
      %v1900 = vadd.f32 %v1683, %v1868
      %v1901 = vadd.f32 %v1684, %v1869
      %v1902 = vadd.f32 %v1685, %v1870
      %v1903 = vadd.f32 %v1686, %v1871
      %v1904 = vadd.f32 %v1687, %v1872
      %v1905 = vadd.f32 %v1688, %v1873
      %1906 = vrot.lane.b32.xlu0 %v963, 1
      %v1907 = vpop.permute.xlu0 %1906
      %1908 = vrot.lane.b32.xlu0 %v969, 1
      %v1909 = vpop.permute.xlu0 %1908
      %1910 = vrot.lane.b32.xlu0 %v975, 1
      %v1911 = vpop.permute.xlu0 %1910
      %1912 = vrot.lane.b32.xlu0 %v981, 1
      %v1913 = vpop.permute.xlu0 %1912
      %1914 = vrot.lane.b32.xlu0 %v987, 1
      %v1915 = vpop.permute.xlu0 %1914
      %1916 = vrot.lane.b32.xlu0 %v993, 1
      %v1917 = vpop.permute.xlu0 %1916
      %1918 = vrot.lane.b32.xlu0 %v999, 1
      %v1919 = vpop.permute.xlu0 %1918
      %1920 = vrot.lane.b32.xlu0 %v1005, 1
      %v1921 = vpop.permute.xlu0 %1920
      %1922 = vrot.lane.b32.xlu0 %v1011, 1
      %v1923 = vpop.permute.xlu0 %1922
      %1924 = vrot.lane.b32.xlu0 %v1017, 1
      %v1925 = vpop.permute.xlu0 %1924
      %1926 = vrot.lane.b32.xlu0 %v1023, 1
      %v1927 = vpop.permute.xlu0 %1926
      %1928 = vrot.lane.b32.xlu0 %v1029, 1
      %v1929 = vpop.permute.xlu0 %1928
      %1930 = vrot.lane.b32.xlu0 %v1035, 1
      %v1931 = vpop.permute.xlu0 %1930
      %1932 = vrot.lane.b32.xlu0 %v1041, 1
      %v1933 = vpop.permute.xlu0 %1932
      %1934 = vrot.lane.b32.xlu0 %v1047, 1
      %v1935 = vpop.permute.xlu0 %1934
      %1936 = vrot.lane.b32.xlu0 %v1053, 1
      %v1937 = vpop.permute.xlu0 %1936
      %1954 = vrot.lane.b32.xlu0 %v961, 1
      %v1955 = vpop.permute.xlu0 %1954
      %1956 = vrot.lane.b32.xlu0 %v967, 1
      %v1957 = vpop.permute.xlu0 %1956
      %1958 = vrot.lane.b32.xlu0 %v973, 1
      %v1959 = vpop.permute.xlu0 %1958
      %1960 = vrot.lane.b32.xlu0 %v979, 1
      %v1961 = vpop.permute.xlu0 %1960
      %1962 = vrot.lane.b32.xlu0 %v985, 1
      %v1963 = vpop.permute.xlu0 %1962
      %1964 = vrot.lane.b32.xlu0 %v991, 1
      %v1965 = vpop.permute.xlu0 %1964
      %1966 = vrot.lane.b32.xlu0 %v997, 1
      %v1967 = vpop.permute.xlu0 %1966
      %1968 = vrot.lane.b32.xlu0 %v1003, 1
      %v1969 = vpop.permute.xlu0 %1968
      %1970 = vrot.lane.b32.xlu0 %v1009, 1
      %v1971 = vpop.permute.xlu0 %1970
      %1972 = vrot.lane.b32.xlu0 %v1015, 1
      %v1973 = vpop.permute.xlu0 %1972
      %1974 = vrot.lane.b32.xlu0 %v1021, 1
      %v1975 = vpop.permute.xlu0 %1974
      %1976 = vrot.lane.b32.xlu0 %v1027, 1
      %v1977 = vpop.permute.xlu0 %1976
      %1978 = vrot.lane.b32.xlu0 %v1033, 1
      %v1979 = vpop.permute.xlu0 %1978
      %1980 = vrot.lane.b32.xlu0 %v1039, 1
      %v1981 = vpop.permute.xlu0 %1980
      %1982 = vrot.lane.b32.xlu0 %v1045, 1
      %v1983 = vpop.permute.xlu0 %1982
      %1984 = vrot.lane.b32.xlu0 %v1051, 1
      %v1985 = vpop.permute.xlu0 %1984
      %vm1986 = vcmask 7168
      %v1987 = vsel %vm1986, %v1955, %v1907
      %v1988 = vsel %vm1986, %v1957, %v1909
      %v1989 = vsel %vm1986, %v1959, %v1911
      %v1990 = vsel %vm1986, %v1961, %v1913
      %v1991 = vsel %vm1986, %v1963, %v1915
      %v1992 = vsel %vm1986, %v1965, %v1917
      %v1993 = vsel %vm1986, %v1967, %v1919
      %v1994 = vsel %vm1986, %v1969, %v1921
      %v1995 = vsel %vm1986, %v1971, %v1923
      %v1996 = vsel %vm1986, %v1973, %v1925
      %v1997 = vsel %vm1986, %v1975, %v1927
      %v1998 = vsel %vm1986, %v1977, %v1929
      %v1999 = vsel %vm1986, %v1979, %v1931
      %v2000 = vsel %vm1986, %v1981, %v1933
      %v2001 = vsel %vm1986, %v1983, %v1935
      %v2002 = vsel %vm1986, %v1985, %v1937
      %v2035 = vsel %vm1986, %v1907, %v1955
      %v2036 = vsel %vm1986, %v1909, %v1957
      %v2037 = vsel %vm1986, %v1911, %v1959
      %v2038 = vsel %vm1986, %v1913, %v1961
      %v2039 = vsel %vm1986, %v1915, %v1963
      %v2040 = vsel %vm1986, %v1917, %v1965
      %v2041 = vsel %vm1986, %v1919, %v1967
      %v2042 = vsel %vm1986, %v1921, %v1969
      %v2043 = vsel %vm1986, %v1923, %v1971
      %v2044 = vsel %vm1986, %v1925, %v1973
      %v2045 = vsel %vm1986, %v1927, %v1975
      %v2046 = vsel %vm1986, %v1929, %v1977
      %v2047 = vsel %vm1986, %v1931, %v1979
      %v2048 = vsel %vm1986, %v1933, %v1981
      %v2049 = vsel %vm1986, %v1935, %v1983
      %v2050 = vsel %vm1986, %v1937, %v1985
      %v2051 = vlaneseq
      %v2052 = vshrl.u32 %v2051, 7
      %v2053 = vsub.s32 3, %v2052
      %v2054 = vrot.slane %v307, %v2053
      %v2055 = vlaneseq
      %v2056 = vshrl.u32 %v2055, 7
      %v2057 = vsub.s32 3, %v2056
      %v2058 = vrot.slane %v308, %v2057
      %v2059 = vmul.f32 %v2054, %v2035
      %v2060 = vmul.f32 %v2058, %v1987
      %v2061 = vmul.f32 %v2054, %v2036
      %v2062 = vmul.f32 %v2058, %v1988
      %v2063 = vmul.f32 %v2054, %v2037
      %v2064 = vmul.f32 %v2058, %v1989
      %v2065 = vmul.f32 %v2054, %v2038
      %v2066 = vmul.f32 %v2058, %v1990
      %v2067 = vmul.f32 %v2054, %v2039
      %v2068 = vmul.f32 %v2058, %v1991
      %v2069 = vmul.f32 %v2054, %v2040
      %v2070 = vmul.f32 %v2058, %v1992
      %v2071 = vmul.f32 %v2054, %v2041
      %v2072 = vmul.f32 %v2058, %v1993
      %v2073 = vmul.f32 %v2054, %v2042
      %v2074 = vmul.f32 %v2058, %v1994
      %v2075 = vmul.f32 %v2054, %v2043
      %v2076 = vmul.f32 %v2058, %v1995
      %v2077 = vmul.f32 %v2054, %v2044
      %v2078 = vmul.f32 %v2058, %v1996
      %v2079 = vmul.f32 %v2054, %v2045
      %v2080 = vmul.f32 %v2058, %v1997
      %v2081 = vmul.f32 %v2054, %v2046
      %v2082 = vmul.f32 %v2058, %v1998
      %v2083 = vmul.f32 %v2054, %v2047
      %v2084 = vmul.f32 %v2058, %v1999
      %v2085 = vmul.f32 %v2054, %v2048
      %v2086 = vmul.f32 %v2058, %v2000
      %v2087 = vmul.f32 %v2054, %v2049
      %v2088 = vmul.f32 %v2058, %v2001
      %v2089 = vmul.f32 %v2054, %v2050
      %v2090 = vmul.f32 %v2058, %v2002
      %v2091 = vadd.f32 %v1874, %v2059
      %v2092 = vadd.f32 %v1875, %v2060
      %v2093 = vadd.f32 %v1876, %v2061
      %v2094 = vadd.f32 %v1877, %v2062
      %v2095 = vadd.f32 %v1878, %v2063
      %v2096 = vadd.f32 %v1879, %v2064
      %v2097 = vadd.f32 %v1880, %v2065
      %v2098 = vadd.f32 %v1881, %v2066
      %v2099 = vadd.f32 %v1882, %v2067
      %v2100 = vadd.f32 %v1883, %v2068
      %v2101 = vadd.f32 %v1884, %v2069
      %v2102 = vadd.f32 %v1885, %v2070
      %v2103 = vadd.f32 %v1886, %v2071
      %v2104 = vadd.f32 %v1887, %v2072
      %v2105 = vadd.f32 %v1888, %v2073
      %v2106 = vadd.f32 %v1889, %v2074
      %v2107 = vadd.f32 %v1890, %v2075
      %v2108 = vadd.f32 %v1891, %v2076
      %v2109 = vadd.f32 %v1892, %v2077
      %v2110 = vadd.f32 %v1893, %v2078
      %v2111 = vadd.f32 %v1894, %v2079
      %v2112 = vadd.f32 %v1895, %v2080
      %v2113 = vadd.f32 %v1896, %v2081
      %v2114 = vadd.f32 %v1897, %v2082
      %v2115 = vadd.f32 %v1898, %v2083
      %v2116 = vadd.f32 %v1899, %v2084
      %v2117 = vadd.f32 %v1900, %v2085
      %v2118 = vadd.f32 %v1901, %v2086
      %v2119 = vadd.f32 %v1902, %v2087
      %v2120 = vadd.f32 %v1903, %v2088
      %v2121 = vadd.f32 %v1904, %v2089
      %v2122 = vadd.f32 %v1905, %v2090
      %2123 = vrot.lane.b32.xlu0 %v961, 127
      %v2124 = vpop.permute.xlu0 %2123
      %2125 = vrot.lane.b32.xlu0 %v963, 127
      %v2126 = vpop.permute.xlu0 %2125
      %2127 = vrot.lane.b32.xlu0 %v967, 127
      %v2128 = vpop.permute.xlu0 %2127
      %2129 = vrot.lane.b32.xlu0 %v969, 127
      %v2130 = vpop.permute.xlu0 %2129
      %2131 = vrot.lane.b32.xlu0 %v973, 127
      %v2132 = vpop.permute.xlu0 %2131
      %2133 = vrot.lane.b32.xlu0 %v975, 127
      %v2134 = vpop.permute.xlu0 %2133
      %2135 = vrot.lane.b32.xlu0 %v979, 127
      %v2136 = vpop.permute.xlu0 %2135
      %2137 = vrot.lane.b32.xlu0 %v981, 127
      %v2138 = vpop.permute.xlu0 %2137
      %2139 = vrot.lane.b32.xlu0 %v985, 127
      %v2140 = vpop.permute.xlu0 %2139
      %2141 = vrot.lane.b32.xlu0 %v987, 127
      %v2142 = vpop.permute.xlu0 %2141
      %2143 = vrot.lane.b32.xlu0 %v991, 127
      %v2144 = vpop.permute.xlu0 %2143
      %2145 = vrot.lane.b32.xlu0 %v993, 127
      %v2146 = vpop.permute.xlu0 %2145
      %2147 = vrot.lane.b32.xlu0 %v997, 127
      %v2148 = vpop.permute.xlu0 %2147
      %2149 = vrot.lane.b32.xlu0 %v999, 127
      %v2150 = vpop.permute.xlu0 %2149
      %2151 = vrot.lane.b32.xlu0 %v1003, 127
      %v2152 = vpop.permute.xlu0 %2151
      %2153 = vrot.lane.b32.xlu0 %v1005, 127
      %v2154 = vpop.permute.xlu0 %2153
      %2155 = vrot.lane.b32.xlu0 %v1009, 127
      %v2156 = vpop.permute.xlu0 %2155
      %2157 = vrot.lane.b32.xlu0 %v1011, 127
      %v2158 = vpop.permute.xlu0 %2157
      %2159 = vrot.lane.b32.xlu0 %v1015, 127
      %v2160 = vpop.permute.xlu0 %2159
      %2161 = vrot.lane.b32.xlu0 %v1017, 127
      %v2162 = vpop.permute.xlu0 %2161
      %2163 = vrot.lane.b32.xlu0 %v1021, 127
      %v2164 = vpop.permute.xlu0 %2163
      %2165 = vrot.lane.b32.xlu0 %v1023, 127
      %v2166 = vpop.permute.xlu0 %2165
      %2167 = vrot.lane.b32.xlu0 %v1027, 127
      %v2168 = vpop.permute.xlu0 %2167
      %2169 = vrot.lane.b32.xlu0 %v1029, 127
      %v2170 = vpop.permute.xlu0 %2169
      %2171 = vrot.lane.b32.xlu0 %v1033, 127
      %v2172 = vpop.permute.xlu0 %2171
      %2173 = vrot.lane.b32.xlu0 %v1035, 127
      %v2174 = vpop.permute.xlu0 %2173
      %2175 = vrot.lane.b32.xlu0 %v1039, 127
      %v2176 = vpop.permute.xlu0 %2175
      %2177 = vrot.lane.b32.xlu0 %v1041, 127
      %v2178 = vpop.permute.xlu0 %2177
      %2179 = vrot.lane.b32.xlu0 %v1045, 127
      %v2180 = vpop.permute.xlu0 %2179
      %2181 = vrot.lane.b32.xlu0 %v1047, 127
      %v2182 = vpop.permute.xlu0 %2181
      %2183 = vrot.lane.b32.xlu0 %v1051, 127
      %v2184 = vpop.permute.xlu0 %2183
      %2185 = vrot.lane.b32.xlu0 %v1053, 127
      %v2186 = vpop.permute.xlu0 %2185
      %vm2187 = vcmask 1039360
      %v2188 = vsel %vm2187, %v2124, %v2126
      %v2189 = vsel %vm2187, %v2128, %v2130
      %v2190 = vsel %vm2187, %v2132, %v2134
      %v2191 = vsel %vm2187, %v2136, %v2138
      %v2192 = vsel %vm2187, %v2140, %v2142
      %v2193 = vsel %vm2187, %v2144, %v2146
      %v2194 = vsel %vm2187, %v2148, %v2150
      %v2195 = vsel %vm2187, %v2152, %v2154
      %v2196 = vsel %vm2187, %v2156, %v2158
      %v2197 = vsel %vm2187, %v2160, %v2162
      %v2198 = vsel %vm2187, %v2164, %v2166
      %v2199 = vsel %vm2187, %v2168, %v2170
      %v2200 = vsel %vm2187, %v2172, %v2174
      %v2201 = vsel %vm2187, %v2176, %v2178
      %v2202 = vsel %vm2187, %v2180, %v2182
      %v2203 = vsel %vm2187, %v2184, %v2186
      %v2252 = vsel %vm2187, %v2126, %v2124
      %v2253 = vsel %vm2187, %v2130, %v2128
      %v2254 = vsel %vm2187, %v2134, %v2132
      %v2255 = vsel %vm2187, %v2138, %v2136
      %v2256 = vsel %vm2187, %v2142, %v2140
      %v2257 = vsel %vm2187, %v2146, %v2144
      %v2258 = vsel %vm2187, %v2150, %v2148
      %v2259 = vsel %vm2187, %v2154, %v2152
      %v2260 = vsel %vm2187, %v2158, %v2156
      %v2261 = vsel %vm2187, %v2162, %v2160
      %v2262 = vsel %vm2187, %v2166, %v2164
      %v2263 = vsel %vm2187, %v2170, %v2168
      %v2264 = vsel %vm2187, %v2174, %v2172
      %v2265 = vsel %vm2187, %v2178, %v2176
      %v2266 = vsel %vm2187, %v2182, %v2180
      %v2267 = vsel %vm2187, %v2186, %v2184
      %v2268 = vlaneseq
      %v2269 = vshrl.u32 %v2268, 7
      %v2270 = vsub.s32 5, %v2269
      %v2271 = vrot.slane %v307, %v2270
      %v2272 = vlaneseq
      %v2273 = vshrl.u32 %v2272, 7
      %v2274 = vsub.s32 5, %v2273
      %v2275 = vrot.slane %v308, %v2274
      %v2276 = vmul.f32 %v2271, %v2188
      %v2277 = vmul.f32 %v2275, %v2252
      %v2278 = vmul.f32 %v2271, %v2189
      %v2279 = vmul.f32 %v2275, %v2253
      %v2280 = vmul.f32 %v2271, %v2190
      %v2281 = vmul.f32 %v2275, %v2254
      %v2282 = vmul.f32 %v2271, %v2191
      %v2283 = vmul.f32 %v2275, %v2255
      %v2284 = vmul.f32 %v2271, %v2192
      %v2285 = vmul.f32 %v2275, %v2256
      %v2286 = vmul.f32 %v2271, %v2193
      %v2287 = vmul.f32 %v2275, %v2257
      %v2288 = vmul.f32 %v2271, %v2194
      %v2289 = vmul.f32 %v2275, %v2258
      %v2290 = vmul.f32 %v2271, %v2195
      %v2291 = vmul.f32 %v2275, %v2259
      %v2292 = vmul.f32 %v2271, %v2196
      %v2293 = vmul.f32 %v2275, %v2260
      %v2294 = vmul.f32 %v2271, %v2197
      %v2295 = vmul.f32 %v2275, %v2261
      %v2296 = vmul.f32 %v2271, %v2198
      %v2297 = vmul.f32 %v2275, %v2262
      %v2298 = vmul.f32 %v2271, %v2199
      %v2299 = vmul.f32 %v2275, %v2263
      %v2300 = vmul.f32 %v2271, %v2200
      %v2301 = vmul.f32 %v2275, %v2264
      %v2302 = vmul.f32 %v2271, %v2201
      %v2303 = vmul.f32 %v2275, %v2265
      %v2304 = vmul.f32 %v2271, %v2202
      %v2305 = vmul.f32 %v2275, %v2266
      %v2306 = vmul.f32 %v2271, %v2203
      %v2307 = vmul.f32 %v2275, %v2267
      %v2308 = vadd.f32 %v2091, %v2276
      %v2309 = vadd.f32 %v2092, %v2277
      %v2310 = vadd.f32 %v2093, %v2278
      %v2311 = vadd.f32 %v2094, %v2279
      %v2312 = vadd.f32 %v2095, %v2280
      %v2313 = vadd.f32 %v2096, %v2281
      %v2314 = vadd.f32 %v2097, %v2282
      %v2315 = vadd.f32 %v2098, %v2283
      %v2316 = vadd.f32 %v2099, %v2284
      %v2317 = vadd.f32 %v2100, %v2285
      %v2318 = vadd.f32 %v2101, %v2286
      %v2319 = vadd.f32 %v2102, %v2287
      %v2320 = vadd.f32 %v2103, %v2288
      %v2321 = vadd.f32 %v2104, %v2289
      %v2322 = vadd.f32 %v2105, %v2290
      %v2323 = vadd.f32 %v2106, %v2291
      %v2324 = vadd.f32 %v2107, %v2292
      %v2325 = vadd.f32 %v2108, %v2293
      %v2326 = vadd.f32 %v2109, %v2294
      %v2327 = vadd.f32 %v2110, %v2295
      %v2328 = vadd.f32 %v2111, %v2296
      %v2329 = vadd.f32 %v2112, %v2297
      %v2330 = vadd.f32 %v2113, %v2298
      %v2331 = vadd.f32 %v2114, %v2299
      %v2332 = vadd.f32 %v2115, %v2300
      %v2333 = vadd.f32 %v2116, %v2301
      %v2334 = vadd.f32 %v2117, %v2302
      %v2335 = vadd.f32 %v2118, %v2303
      %v2336 = vadd.f32 %v2119, %v2304
      %v2337 = vadd.f32 %v2120, %v2305
      %v2338 = vadd.f32 %v2121, %v2306
      %v2339 = vadd.f32 %v2122, %v2307
      %2340 = vrot.lane.b32.xlu0 %v961, 113
      %v2341 = vpop.permute.xlu0 %2340
      %2342 = vrot.lane.b32.xlu0 %v963, 113
      %v2343 = vpop.permute.xlu0 %2342
      %2344 = vrot.lane.b32.xlu0 %v967, 113
      %v2345 = vpop.permute.xlu0 %2344
      %2346 = vrot.lane.b32.xlu0 %v969, 113
      %v2347 = vpop.permute.xlu0 %2346
      %2348 = vrot.lane.b32.xlu0 %v973, 113
      %v2349 = vpop.permute.xlu0 %2348
      %2350 = vrot.lane.b32.xlu0 %v975, 113
      %v2351 = vpop.permute.xlu0 %2350
      %2352 = vrot.lane.b32.xlu0 %v979, 113
      %v2353 = vpop.permute.xlu0 %2352
      %2354 = vrot.lane.b32.xlu0 %v981, 113
      %v2355 = vpop.permute.xlu0 %2354
      %2356 = vrot.lane.b32.xlu0 %v985, 113
      %v2357 = vpop.permute.xlu0 %2356
      %2358 = vrot.lane.b32.xlu0 %v987, 113
      %v2359 = vpop.permute.xlu0 %2358
      %2360 = vrot.lane.b32.xlu0 %v991, 113
      %v2361 = vpop.permute.xlu0 %2360
      %2362 = vrot.lane.b32.xlu0 %v993, 113
      %v2363 = vpop.permute.xlu0 %2362
      %2364 = vrot.lane.b32.xlu0 %v997, 113
      %v2365 = vpop.permute.xlu0 %2364
      %2366 = vrot.lane.b32.xlu0 %v999, 113
      %v2367 = vpop.permute.xlu0 %2366
      %2368 = vrot.lane.b32.xlu0 %v1003, 113
      %v2369 = vpop.permute.xlu0 %2368
      %2370 = vrot.lane.b32.xlu0 %v1005, 113
      %v2371 = vpop.permute.xlu0 %2370
      %2372 = vrot.lane.b32.xlu0 %v1009, 113
      %v2373 = vpop.permute.xlu0 %2372
      %2374 = vrot.lane.b32.xlu0 %v1011, 113
      %v2375 = vpop.permute.xlu0 %2374
      %2376 = vrot.lane.b32.xlu0 %v1015, 113
      %v2377 = vpop.permute.xlu0 %2376
      %2378 = vrot.lane.b32.xlu0 %v1017, 113
      %v2379 = vpop.permute.xlu0 %2378
      %2380 = vrot.lane.b32.xlu0 %v1021, 113
      %v2381 = vpop.permute.xlu0 %2380
      %2382 = vrot.lane.b32.xlu0 %v1023, 113
      %v2383 = vpop.permute.xlu0 %2382
      %2384 = vrot.lane.b32.xlu0 %v1027, 113
      %v2385 = vpop.permute.xlu0 %2384
      %2386 = vrot.lane.b32.xlu0 %v1029, 113
      %v2387 = vpop.permute.xlu0 %2386
      %2388 = vrot.lane.b32.xlu0 %v1033, 113
      %v2389 = vpop.permute.xlu0 %2388
      %2390 = vrot.lane.b32.xlu0 %v1035, 113
      %v2391 = vpop.permute.xlu0 %2390
      %2392 = vrot.lane.b32.xlu0 %v1039, 113
      %v2393 = vpop.permute.xlu0 %2392
      %2394 = vrot.lane.b32.xlu0 %v1041, 113
      %v2395 = vpop.permute.xlu0 %2394
      %2396 = vrot.lane.b32.xlu0 %v1045, 113
      %v2397 = vpop.permute.xlu0 %2396
      %2398 = vrot.lane.b32.xlu0 %v1047, 113
      %v2399 = vpop.permute.xlu0 %2398
      %2400 = vrot.lane.b32.xlu0 %v1051, 113
      %v2401 = vpop.permute.xlu0 %2400
      %2402 = vrot.lane.b32.xlu0 %v1053, 113
      %v2403 = vpop.permute.xlu0 %2402
      %vm2404 = vcmask 924672
      %v2405 = vsel %vm2404, %v2341, %v2343
      %v2406 = vsel %vm2404, %v2345, %v2347
      %v2407 = vsel %vm2404, %v2349, %v2351
      %v2408 = vsel %vm2404, %v2353, %v2355
      %v2409 = vsel %vm2404, %v2357, %v2359
      %v2410 = vsel %vm2404, %v2361, %v2363
      %v2411 = vsel %vm2404, %v2365, %v2367
      %v2412 = vsel %vm2404, %v2369, %v2371
      %v2413 = vsel %vm2404, %v2373, %v2375
      %v2414 = vsel %vm2404, %v2377, %v2379
      %v2415 = vsel %vm2404, %v2381, %v2383
      %v2416 = vsel %vm2404, %v2385, %v2387
      %v2417 = vsel %vm2404, %v2389, %v2391
      %v2418 = vsel %vm2404, %v2393, %v2395
      %v2419 = vsel %vm2404, %v2397, %v2399
      %v2420 = vsel %vm2404, %v2401, %v2403
      %v2469 = vsel %vm2404, %v2343, %v2341
      %v2470 = vsel %vm2404, %v2347, %v2345
      %v2471 = vsel %vm2404, %v2351, %v2349
      %v2472 = vsel %vm2404, %v2355, %v2353
      %v2473 = vsel %vm2404, %v2359, %v2357
      %v2474 = vsel %vm2404, %v2363, %v2361
      %v2475 = vsel %vm2404, %v2367, %v2365
      %v2476 = vsel %vm2404, %v2371, %v2369
      %v2477 = vsel %vm2404, %v2375, %v2373
      %v2478 = vsel %vm2404, %v2379, %v2377
      %v2479 = vsel %vm2404, %v2383, %v2381
      %v2480 = vsel %vm2404, %v2387, %v2385
      %v2481 = vsel %vm2404, %v2391, %v2389
      %v2482 = vsel %vm2404, %v2395, %v2393
      %v2483 = vsel %vm2404, %v2399, %v2397
      %v2484 = vsel %vm2404, %v2403, %v2401
      %v2485 = vlaneseq
      %v2486 = vshrl.u32 %v2485, 7
      %v2487 = vsub.s32 6, %v2486
      %v2488 = vrot.slane %v307, %v2487
      %v2489 = vlaneseq
      %v2490 = vshrl.u32 %v2489, 7
      %v2491 = vsub.s32 6, %v2490
      %v2492 = vrot.slane %v308, %v2491
      %v2493 = vmul.f32 %v2488, %v2405
      %v2494 = vmul.f32 %v2492, %v2469
      %v2495 = vmul.f32 %v2488, %v2406
      %v2496 = vmul.f32 %v2492, %v2470
      %v2497 = vmul.f32 %v2488, %v2407
      %v2498 = vmul.f32 %v2492, %v2471
      %v2499 = vmul.f32 %v2488, %v2408
      %v2500 = vmul.f32 %v2492, %v2472
      %v2501 = vmul.f32 %v2488, %v2409
      %v2502 = vmul.f32 %v2492, %v2473
      %v2503 = vmul.f32 %v2488, %v2410
      %v2504 = vmul.f32 %v2492, %v2474
      %v2505 = vmul.f32 %v2488, %v2411
      %v2506 = vmul.f32 %v2492, %v2475
      %v2507 = vmul.f32 %v2488, %v2412
      %v2508 = vmul.f32 %v2492, %v2476
      %v2509 = vmul.f32 %v2488, %v2413
      %v2510 = vmul.f32 %v2492, %v2477
      %v2511 = vmul.f32 %v2488, %v2414
      %v2512 = vmul.f32 %v2492, %v2478
      %v2513 = vmul.f32 %v2488, %v2415
      %v2514 = vmul.f32 %v2492, %v2479
      %v2515 = vmul.f32 %v2488, %v2416
      %v2516 = vmul.f32 %v2492, %v2480
      %v2517 = vmul.f32 %v2488, %v2417
      %v2518 = vmul.f32 %v2492, %v2481
      %v2519 = vmul.f32 %v2488, %v2418
      %v2520 = vmul.f32 %v2492, %v2482
      %v2521 = vmul.f32 %v2488, %v2419
      %v2522 = vmul.f32 %v2492, %v2483
      %v2523 = vmul.f32 %v2488, %v2420
      %v2524 = vmul.f32 %v2492, %v2484
      %v2525 = vadd.f32 %v2308, %v2493
      %v2526 = vadd.f32 %v2309, %v2494
      %v2527 = vadd.f32 %v2310, %v2495
      %v2528 = vadd.f32 %v2311, %v2496
      %v2529 = vadd.f32 %v2312, %v2497
      %v2530 = vadd.f32 %v2313, %v2498
      %v2531 = vadd.f32 %v2314, %v2499
      %v2532 = vadd.f32 %v2315, %v2500
      %v2533 = vadd.f32 %v2316, %v2501
      %v2534 = vadd.f32 %v2317, %v2502
      %v2535 = vadd.f32 %v2318, %v2503
      %v2536 = vadd.f32 %v2319, %v2504
      %v2537 = vadd.f32 %v2320, %v2505
      %v2538 = vadd.f32 %v2321, %v2506
      %v2539 = vadd.f32 %v2322, %v2507
      %v2540 = vadd.f32 %v2323, %v2508
      %v2541 = vadd.f32 %v2324, %v2509
      %v2542 = vadd.f32 %v2325, %v2510
      %v2543 = vadd.f32 %v2326, %v2511
      %v2544 = vadd.f32 %v2327, %v2512
      %v2545 = vadd.f32 %v2328, %v2513
      %v2546 = vadd.f32 %v2329, %v2514
      %v2547 = vadd.f32 %v2330, %v2515
      %v2548 = vadd.f32 %v2331, %v2516
      %v2549 = vadd.f32 %v2332, %v2517
      %v2550 = vadd.f32 %v2333, %v2518
      %v2551 = vadd.f32 %v2334, %v2519
      %v2552 = vadd.f32 %v2335, %v2520
      %v2553 = vadd.f32 %v2336, %v2521
      %v2554 = vadd.f32 %v2337, %v2522
      %v2555 = vadd.f32 %v2338, %v2523
      %v2556 = vadd.f32 %v2339, %v2524
      %2557 = vrot.lane.b32.xlu0 %v961, 112
      %v2558 = vpop.permute.xlu0 %2557
      %2559 = vrot.lane.b32.xlu0 %v963, 112
      %v2560 = vpop.permute.xlu0 %2559
      %2561 = vrot.lane.b32.xlu0 %v967, 112
      %v2562 = vpop.permute.xlu0 %2561
      %2563 = vrot.lane.b32.xlu0 %v969, 112
      %v2564 = vpop.permute.xlu0 %2563
      %2565 = vrot.lane.b32.xlu0 %v973, 112
      %v2566 = vpop.permute.xlu0 %2565
      %2567 = vrot.lane.b32.xlu0 %v975, 112
      %v2568 = vpop.permute.xlu0 %2567
      %2569 = vrot.lane.b32.xlu0 %v979, 112
      %v2570 = vpop.permute.xlu0 %2569
      %2571 = vrot.lane.b32.xlu0 %v981, 112
      %v2572 = vpop.permute.xlu0 %2571
      %2573 = vrot.lane.b32.xlu0 %v985, 112
      %v2574 = vpop.permute.xlu0 %2573
      %2575 = vrot.lane.b32.xlu0 %v987, 112
      %v2576 = vpop.permute.xlu0 %2575
      %2577 = vrot.lane.b32.xlu0 %v991, 112
      %v2578 = vpop.permute.xlu0 %2577
      %2579 = vrot.lane.b32.xlu0 %v993, 112
      %v2580 = vpop.permute.xlu0 %2579
      %2581 = vrot.lane.b32.xlu0 %v997, 112
      %v2582 = vpop.permute.xlu0 %2581
      %2583 = vrot.lane.b32.xlu0 %v999, 112
      %v2584 = vpop.permute.xlu0 %2583
      %2585 = vrot.lane.b32.xlu0 %v1003, 112
      %v2586 = vpop.permute.xlu0 %2585
      %2587 = vrot.lane.b32.xlu0 %v1005, 112
      %v2588 = vpop.permute.xlu0 %2587
      %2589 = vrot.lane.b32.xlu0 %v1009, 112
      %v2590 = vpop.permute.xlu0 %2589
      %2591 = vrot.lane.b32.xlu0 %v1011, 112
      %v2592 = vpop.permute.xlu0 %2591
      %2593 = vrot.lane.b32.xlu0 %v1015, 112
      %v2594 = vpop.permute.xlu0 %2593
      %2595 = vrot.lane.b32.xlu0 %v1017, 112
      %v2596 = vpop.permute.xlu0 %2595
      %2597 = vrot.lane.b32.xlu0 %v1021, 112
      %v2598 = vpop.permute.xlu0 %2597
      %2599 = vrot.lane.b32.xlu0 %v1023, 112
      %v2600 = vpop.permute.xlu0 %2599
      %2601 = vrot.lane.b32.xlu0 %v1027, 112
      %v2602 = vpop.permute.xlu0 %2601
      %2603 = vrot.lane.b32.xlu0 %v1029, 112
      %v2604 = vpop.permute.xlu0 %2603
      %2605 = vrot.lane.b32.xlu0 %v1033, 112
      %v2606 = vpop.permute.xlu0 %2605
      %2607 = vrot.lane.b32.xlu0 %v1035, 112
      %v2608 = vpop.permute.xlu0 %2607
      %2609 = vrot.lane.b32.xlu0 %v1039, 112
      %v2610 = vpop.permute.xlu0 %2609
      %2611 = vrot.lane.b32.xlu0 %v1041, 112
      %v2612 = vpop.permute.xlu0 %2611
      %2613 = vrot.lane.b32.xlu0 %v1045, 112
      %v2614 = vpop.permute.xlu0 %2613
      %2615 = vrot.lane.b32.xlu0 %v1047, 112
      %v2616 = vpop.permute.xlu0 %2615
      %2617 = vrot.lane.b32.xlu0 %v1051, 112
      %v2618 = vpop.permute.xlu0 %2617
      %2619 = vrot.lane.b32.xlu0 %v1053, 112
      %v2620 = vpop.permute.xlu0 %2619
      %vm2621 = vcmask 916480
      %v2622 = vsel %vm2621, %v2558, %v2560
      %v2623 = vsel %vm2621, %v2562, %v2564
      %v2624 = vsel %vm2621, %v2566, %v2568
      %v2625 = vsel %vm2621, %v2570, %v2572
      %v2626 = vsel %vm2621, %v2574, %v2576
      %v2627 = vsel %vm2621, %v2578, %v2580
      %v2628 = vsel %vm2621, %v2582, %v2584
      %v2629 = vsel %vm2621, %v2586, %v2588
      %v2630 = vsel %vm2621, %v2590, %v2592
      %v2631 = vsel %vm2621, %v2594, %v2596
      %v2632 = vsel %vm2621, %v2598, %v2600
      %v2633 = vsel %vm2621, %v2602, %v2604
      %v2634 = vsel %vm2621, %v2606, %v2608
      %v2635 = vsel %vm2621, %v2610, %v2612
      %v2636 = vsel %vm2621, %v2614, %v2616
      %v2637 = vsel %vm2621, %v2618, %v2620
      %v2686 = vsel %vm2621, %v2560, %v2558
      %v2687 = vsel %vm2621, %v2564, %v2562
      %v2688 = vsel %vm2621, %v2568, %v2566
      %v2689 = vsel %vm2621, %v2572, %v2570
      %v2690 = vsel %vm2621, %v2576, %v2574
      %v2691 = vsel %vm2621, %v2580, %v2578
      %v2692 = vsel %vm2621, %v2584, %v2582
      %v2693 = vsel %vm2621, %v2588, %v2586
      %v2694 = vsel %vm2621, %v2592, %v2590
      %v2695 = vsel %vm2621, %v2596, %v2594
      %v2696 = vsel %vm2621, %v2600, %v2598
      %v2697 = vsel %vm2621, %v2604, %v2602
      %v2698 = vsel %vm2621, %v2608, %v2606
      %v2699 = vsel %vm2621, %v2612, %v2610
      %v2700 = vsel %vm2621, %v2616, %v2614
      %v2701 = vsel %vm2621, %v2620, %v2618
      %v2702 = vlaneseq
      %v2703 = vshrl.u32 %v2702, 7
      %v2704 = vsub.s32 7, %v2703
      %v2705 = vrot.slane %v307, %v2704
      %v2706 = vlaneseq
      %v2707 = vshrl.u32 %v2706, 7
      %v2708 = vsub.s32 7, %v2707
      %v2709 = vrot.slane %v308, %v2708
      %v2710 = vmul.f32 %v2705, %v2622
      %v2711 = vmul.f32 %v2709, %v2686
      %v2712 = vmul.f32 %v2705, %v2623
      %v2713 = vmul.f32 %v2709, %v2687
      %v2714 = vmul.f32 %v2705, %v2624
      %v2715 = vmul.f32 %v2709, %v2688
      %v2716 = vmul.f32 %v2705, %v2625
      %v2717 = vmul.f32 %v2709, %v2689
      %v2718 = vmul.f32 %v2705, %v2626
      %v2719 = vmul.f32 %v2709, %v2690
      %v2720 = vmul.f32 %v2705, %v2627
      %v2721 = vmul.f32 %v2709, %v2691
      %v2722 = vmul.f32 %v2705, %v2628
      %v2723 = vmul.f32 %v2709, %v2692
      %v2724 = vmul.f32 %v2705, %v2629
      %v2725 = vmul.f32 %v2709, %v2693
      %v2726 = vmul.f32 %v2705, %v2630
      %v2727 = vmul.f32 %v2709, %v2694
      %v2728 = vmul.f32 %v2705, %v2631
      %v2729 = vmul.f32 %v2709, %v2695
      %v2730 = vmul.f32 %v2705, %v2632
      %v2731 = vmul.f32 %v2709, %v2696
      %v2732 = vmul.f32 %v2705, %v2633
      %v2733 = vmul.f32 %v2709, %v2697
      %v2734 = vmul.f32 %v2705, %v2634
      %v2735 = vmul.f32 %v2709, %v2698
      %v2736 = vmul.f32 %v2705, %v2635
      %v2737 = vmul.f32 %v2709, %v2699
      %v2738 = vmul.f32 %v2705, %v2636
      %v2739 = vmul.f32 %v2709, %v2700
      %v2740 = vmul.f32 %v2705, %v2637
      %v2741 = vmul.f32 %v2709, %v2701
      %v2742 = vadd.f32 %v2525, %v2710
      %v2743 = vadd.f32 %v2526, %v2711
      %v2744 = vadd.f32 %v2527, %v2712
      %v2745 = vadd.f32 %v2528, %v2713
      %v2746 = vadd.f32 %v2529, %v2714
      %v2747 = vadd.f32 %v2530, %v2715
      %v2748 = vadd.f32 %v2531, %v2716
      %v2749 = vadd.f32 %v2532, %v2717
      %v2750 = vadd.f32 %v2533, %v2718
      %v2751 = vadd.f32 %v2534, %v2719
      %v2752 = vadd.f32 %v2535, %v2720
      %v2753 = vadd.f32 %v2536, %v2721
      %v2754 = vadd.f32 %v2537, %v2722
      %v2755 = vadd.f32 %v2538, %v2723
      %v2756 = vadd.f32 %v2539, %v2724
      %v2757 = vadd.f32 %v2540, %v2725
      %v2758 = vadd.f32 %v2541, %v2726
      %v2759 = vadd.f32 %v2542, %v2727
      %v2760 = vadd.f32 %v2543, %v2728
      %v2761 = vadd.f32 %v2544, %v2729
      %v2762 = vadd.f32 %v2545, %v2730
      %v2763 = vadd.f32 %v2546, %v2731
      %v2764 = vadd.f32 %v2547, %v2732
      %v2765 = vadd.f32 %v2548, %v2733
      %v2766 = vadd.f32 %v2549, %v2734
      %v2767 = vadd.f32 %v2550, %v2735
      %v2768 = vadd.f32 %v2551, %v2736
      %v2769 = vadd.f32 %v2552, %v2737
      %v2770 = vadd.f32 %v2553, %v2738
      %v2771 = vadd.f32 %v2554, %v2739
      %v2772 = vadd.f32 %v2555, %v2740
      %v2773 = vadd.f32 %v2556, %v2741
      %2774 = vrot.lane.b32.xlu0 %v961, 111
      %v2775 = vpop.permute.xlu0 %2774
      %2776 = vrot.lane.b32.xlu0 %v963, 111
      %v2777 = vpop.permute.xlu0 %2776
      %2778 = vrot.lane.b32.xlu0 %v967, 111
      %v2779 = vpop.permute.xlu0 %2778
      %2780 = vrot.lane.b32.xlu0 %v969, 111
      %v2781 = vpop.permute.xlu0 %2780
      %2782 = vrot.lane.b32.xlu0 %v973, 111
      %v2783 = vpop.permute.xlu0 %2782
      %2784 = vrot.lane.b32.xlu0 %v975, 111
      %v2785 = vpop.permute.xlu0 %2784
      %2786 = vrot.lane.b32.xlu0 %v979, 111
      %v2787 = vpop.permute.xlu0 %2786
      %2788 = vrot.lane.b32.xlu0 %v981, 111
      %v2789 = vpop.permute.xlu0 %2788
      %2790 = vrot.lane.b32.xlu0 %v985, 111
      %v2791 = vpop.permute.xlu0 %2790
      %2792 = vrot.lane.b32.xlu0 %v987, 111
      %v2793 = vpop.permute.xlu0 %2792
      %2794 = vrot.lane.b32.xlu0 %v991, 111
      %v2795 = vpop.permute.xlu0 %2794
      %2796 = vrot.lane.b32.xlu0 %v993, 111
      %v2797 = vpop.permute.xlu0 %2796
      %2798 = vrot.lane.b32.xlu0 %v997, 111
      %v2799 = vpop.permute.xlu0 %2798
      %2800 = vrot.lane.b32.xlu0 %v999, 111
      %v2801 = vpop.permute.xlu0 %2800
      %2802 = vrot.lane.b32.xlu0 %v1003, 111
      %v2803 = vpop.permute.xlu0 %2802
      %2804 = vrot.lane.b32.xlu0 %v1005, 111
      %v2805 = vpop.permute.xlu0 %2804
      %2806 = vrot.lane.b32.xlu0 %v1009, 111
      %v2807 = vpop.permute.xlu0 %2806
      %2808 = vrot.lane.b32.xlu0 %v1011, 111
      %v2809 = vpop.permute.xlu0 %2808
      %2810 = vrot.lane.b32.xlu0 %v1015, 111
      %v2811 = vpop.permute.xlu0 %2810
      %2812 = vrot.lane.b32.xlu0 %v1017, 111
      %v2813 = vpop.permute.xlu0 %2812
      %2814 = vrot.lane.b32.xlu0 %v1021, 111
      %v2815 = vpop.permute.xlu0 %2814
      %2816 = vrot.lane.b32.xlu0 %v1023, 111
      %v2817 = vpop.permute.xlu0 %2816
      %2818 = vrot.lane.b32.xlu0 %v1027, 111
      %v2819 = vpop.permute.xlu0 %2818
      %2820 = vrot.lane.b32.xlu0 %v1029, 111
      %v2821 = vpop.permute.xlu0 %2820
      %2822 = vrot.lane.b32.xlu0 %v1033, 111
      %v2823 = vpop.permute.xlu0 %2822
      %2824 = vrot.lane.b32.xlu0 %v1035, 111
      %v2825 = vpop.permute.xlu0 %2824
      %2826 = vrot.lane.b32.xlu0 %v1039, 111
      %v2827 = vpop.permute.xlu0 %2826
      %2828 = vrot.lane.b32.xlu0 %v1041, 111
      %v2829 = vpop.permute.xlu0 %2828
      %2830 = vrot.lane.b32.xlu0 %v1045, 111
      %v2831 = vpop.permute.xlu0 %2830
      %2832 = vrot.lane.b32.xlu0 %v1047, 111
      %v2833 = vpop.permute.xlu0 %2832
      %2834 = vrot.lane.b32.xlu0 %v1051, 111
      %v2835 = vpop.permute.xlu0 %2834
      %2836 = vrot.lane.b32.xlu0 %v1053, 111
      %v2837 = vpop.permute.xlu0 %2836
      %vm2838 = vcmask 908288
      %v2839 = vsel %vm2838, %v2775, %v2777
      %v2840 = vsel %vm2838, %v2779, %v2781
      %v2841 = vsel %vm2838, %v2783, %v2785
      %v2842 = vsel %vm2838, %v2787, %v2789
      %v2843 = vsel %vm2838, %v2791, %v2793
      %v2844 = vsel %vm2838, %v2795, %v2797
      %v2845 = vsel %vm2838, %v2799, %v2801
      %v2846 = vsel %vm2838, %v2803, %v2805
      %v2847 = vsel %vm2838, %v2807, %v2809
      %v2848 = vsel %vm2838, %v2811, %v2813
      %v2849 = vsel %vm2838, %v2815, %v2817
      %v2850 = vsel %vm2838, %v2819, %v2821
      %v2851 = vsel %vm2838, %v2823, %v2825
      %v2852 = vsel %vm2838, %v2827, %v2829
      %v2853 = vsel %vm2838, %v2831, %v2833
      %v2854 = vsel %vm2838, %v2835, %v2837
      %v2903 = vsel %vm2838, %v2777, %v2775
      %v2904 = vsel %vm2838, %v2781, %v2779
      %v2905 = vsel %vm2838, %v2785, %v2783
      %v2906 = vsel %vm2838, %v2789, %v2787
      %v2907 = vsel %vm2838, %v2793, %v2791
      %v2908 = vsel %vm2838, %v2797, %v2795
      %v2909 = vsel %vm2838, %v2801, %v2799
      %v2910 = vsel %vm2838, %v2805, %v2803
      %v2911 = vsel %vm2838, %v2809, %v2807
      %v2912 = vsel %vm2838, %v2813, %v2811
      %v2913 = vsel %vm2838, %v2817, %v2815
      %v2914 = vsel %vm2838, %v2821, %v2819
      %v2915 = vsel %vm2838, %v2825, %v2823
      %v2916 = vsel %vm2838, %v2829, %v2827
      %v2917 = vsel %vm2838, %v2833, %v2831
      %v2918 = vsel %vm2838, %v2837, %v2835
      %v2919 = vlaneseq
      %v2920 = vshrl.u32 %v2919, 7
      %v2921 = vsub.s32 0, %v2920
      %v2922 = vrot.slane %v309, %v2921
      %v2923 = vlaneseq
      %v2924 = vshrl.u32 %v2923, 7
      %v2925 = vsub.s32 0, %v2924
      %v2926 = vrot.slane %v310, %v2925
      %v2927 = vmul.f32 %v2922, %v2839
      %v2928 = vmul.f32 %v2926, %v2903
      %v2929 = vmul.f32 %v2922, %v2840
      %v2930 = vmul.f32 %v2926, %v2904
      %v2931 = vmul.f32 %v2922, %v2841
      %v2932 = vmul.f32 %v2926, %v2905
      %v2933 = vmul.f32 %v2922, %v2842
      %v2934 = vmul.f32 %v2926, %v2906
      %v2935 = vmul.f32 %v2922, %v2843
      %v2936 = vmul.f32 %v2926, %v2907
      %v2937 = vmul.f32 %v2922, %v2844
      %v2938 = vmul.f32 %v2926, %v2908
      %v2939 = vmul.f32 %v2922, %v2845
      %v2940 = vmul.f32 %v2926, %v2909
      %v2941 = vmul.f32 %v2922, %v2846
      %v2942 = vmul.f32 %v2926, %v2910
      %v2943 = vmul.f32 %v2922, %v2847
      %v2944 = vmul.f32 %v2926, %v2911
      %v2945 = vmul.f32 %v2922, %v2848
      %v2946 = vmul.f32 %v2926, %v2912
      %v2947 = vmul.f32 %v2922, %v2849
      %v2948 = vmul.f32 %v2926, %v2913
      %v2949 = vmul.f32 %v2922, %v2850
      %v2950 = vmul.f32 %v2926, %v2914
      %v2951 = vmul.f32 %v2922, %v2851
      %v2952 = vmul.f32 %v2926, %v2915
      %v2953 = vmul.f32 %v2922, %v2852
      %v2954 = vmul.f32 %v2926, %v2916
      %v2955 = vmul.f32 %v2922, %v2853
      %v2956 = vmul.f32 %v2926, %v2917
      %v2957 = vmul.f32 %v2922, %v2854
      %v2958 = vmul.f32 %v2926, %v2918
      %v2959 = vadd.f32 %v2742, %v2927
      %v2960 = vadd.f32 %v2743, %v2928
      %v2961 = vadd.f32 %v2744, %v2929
      %v2962 = vadd.f32 %v2745, %v2930
      %v2963 = vadd.f32 %v2746, %v2931
      %v2964 = vadd.f32 %v2747, %v2932
      %v2965 = vadd.f32 %v2748, %v2933
      %v2966 = vadd.f32 %v2749, %v2934
      %v2967 = vadd.f32 %v2750, %v2935
      %v2968 = vadd.f32 %v2751, %v2936
      %v2969 = vadd.f32 %v2752, %v2937
      %v2970 = vadd.f32 %v2753, %v2938
      %v2971 = vadd.f32 %v2754, %v2939
      %v2972 = vadd.f32 %v2755, %v2940
      %v2973 = vadd.f32 %v2756, %v2941
      %v2974 = vadd.f32 %v2757, %v2942
      %v2975 = vadd.f32 %v2758, %v2943
      %v2976 = vadd.f32 %v2759, %v2944
      %v2977 = vadd.f32 %v2760, %v2945
      %v2978 = vadd.f32 %v2761, %v2946
      %v2979 = vadd.f32 %v2762, %v2947
      %v2980 = vadd.f32 %v2763, %v2948
      %v2981 = vadd.f32 %v2764, %v2949
      %v2982 = vadd.f32 %v2765, %v2950
      %v2983 = vadd.f32 %v2766, %v2951
      %v2984 = vadd.f32 %v2767, %v2952
      %v2985 = vadd.f32 %v2768, %v2953
      %v2986 = vadd.f32 %v2769, %v2954
      %v2987 = vadd.f32 %v2770, %v2955
      %v2988 = vadd.f32 %v2771, %v2956
      %v2989 = vadd.f32 %v2772, %v2957
      %v2990 = vadd.f32 %v2773, %v2958
      %v2991 = vmax.f32 %v2959, 0.0
      %v2992 = vmax.f32 %v2960, 0.0
      %v2993 = vmax.f32 %v2961, 0.0
      %v2994 = vmax.f32 %v2962, 0.0
      %v2995 = vmax.f32 %v2963, 0.0
      %v2996 = vmax.f32 %v2964, 0.0
      %v2997 = vmax.f32 %v2965, 0.0
      %v2998 = vmax.f32 %v2966, 0.0
      %v2999 = vmax.f32 %v2967, 0.0
      %v3000 = vmax.f32 %v2968, 0.0
      %v3001 = vmax.f32 %v2969, 0.0
      %v3002 = vmax.f32 %v2970, 0.0
      %v3003 = vmax.f32 %v2971, 0.0
      %v3004 = vmax.f32 %v2972, 0.0
      %v3005 = vmax.f32 %v2973, 0.0
      %v3006 = vmax.f32 %v2974, 0.0
      %v3007 = vmax.f32 %v2975, 0.0
      %v3008 = vmax.f32 %v2976, 0.0
      %v3009 = vmax.f32 %v2977, 0.0
      %v3010 = vmax.f32 %v2978, 0.0
      %v3011 = vmax.f32 %v2979, 0.0
      %v3012 = vmax.f32 %v2980, 0.0
      %v3013 = vmax.f32 %v2981, 0.0
      %v3014 = vmax.f32 %v2982, 0.0
      %v3015 = vmax.f32 %v2983, 0.0
      %v3016 = vmax.f32 %v2984, 0.0
      %v3017 = vmax.f32 %v2985, 0.0
      %v3018 = vmax.f32 %v2986, 0.0
      %v3019 = vmax.f32 %v2987, 0.0
      %v3020 = vmax.f32 %v2988, 0.0
      %v3021 = vmax.f32 %v2989, 0.0
      %v3022 = vmax.f32 %v2990, 0.0
      %s3023 = scalar_lea.vmem %s4, 128
      %v3024 = vld [vmem:[%s3023] sm:$0xff]
      %v3025 = vld [vmem:[%s3023 + $0x8] sm:$0xff]
      %v3026 = vld [vmem:[%s3023 + $0x10] sm:$0xff]
      %v3027 = vld [vmem:[%s3023 + $0x18] sm:$0xff]
      %v3028 = vld [vmem:[%s3023 + $0x20] sm:$0xff]
      %v3029 = vld [vmem:[%s3023 + $0x28] sm:$0xff]
      %v3030 = vld [vmem:[%s3023 + $0x30] sm:$0xff]
      %v3031 = vld [vmem:[%s3023 + $0x38] sm:$0xff]
      %v3032 = vld [vmem:[%s3023 + $0x40] sm:$0xff]
      %v3033 = vld [vmem:[%s3023 + $0x48] sm:$0xff]
      %v3034 = vld [vmem:[%s3023 + $0x50] sm:$0xff]
      %v3035 = vld [vmem:[%s3023 + $0x58] sm:$0xff]
      %v3036 = vld [vmem:[%s3023 + $0x60] sm:$0xff]
      %v3037 = vld [vmem:[%s3023 + $0x68] sm:$0xff]
      %v3038 = vld [vmem:[%s3023 + $0x70] sm:$0xff]
      %v3039 = vld [vmem:[%s3023 + $0x78] sm:$0xff]
      %3040 = vmatprep.subr.mxu0 %v2992
      %3041 = vmatpush1.msra.mxu0 %v2991
      %3042 = vmatprep.subr.mxu0 %v2994
      %3043 = vmatpush1.msra.mxu0 %v2993
      %3044 = vmatprep.subr.mxu0 %v2996
      %3045 = vmatpush1.msra.mxu0 %v2995
      %3046 = vmatprep.subr.mxu0 %v2998
      %3047 = vmatpush1.msra.mxu0 %v2997
      %3048 = vmatprep.subr.mxu0 %v3000
      %3049 = vmatpush1.msra.mxu0 %v2999
      %3050 = vmatprep.subr.mxu0 %v3002
      %3051 = vmatpush1.msra.mxu0 %v3001
      %3052 = vmatprep.subr.mxu0 %v3004
      %3053 = vmatpush1.msra.mxu0 %v3003
      %3054 = vmatprep.subr.mxu0 %v3006
      %3055 = vmatpush1.msra.mxu0 %v3005
      %3056 = vmatprep.subr.mxu0 %v3008
      %3057 = vmatpush1.msra.mxu0 %v3007
      %3058 = vmatprep.subr.mxu0 %v3010
      %3059 = vmatpush1.msra.mxu0 %v3009
      %3060 = vmatprep.subr.mxu0 %v3012
      %3061 = vmatpush1.msra.mxu0 %v3011
      %3062 = vmatprep.subr.mxu0 %v3014
      %3063 = vmatpush1.msra.mxu0 %v3013
      %3064 = vmatprep.subr.mxu0 %v3016
      %3065 = vmatpush1.msra.mxu0 %v3015
      %3066 = vmatprep.subr.mxu0 %v3018
      %3067 = vmatpush1.msra.mxu0 %v3017
      %3068 = vmatprep.subr.mxu0 %v3020
      %3069 = vmatpush1.msra.mxu0 %v3019
      %3070 = vmatprep.subr.mxu0 %v3022
      %3071 = vmatpush1.msra.mxu0 %v3021
      %3072 = vmatprep.subr.mxu0 0.0
      %3073 = vmatpush1.msra.mxu0 0.0
      %3074 = vmatprep.subr.mxu0 0.0
      %3075 = vmatpush1.msra.mxu0 0.0
      %3076 = vmatprep.subr.mxu0 0.0
      %3077 = vmatpush1.msra.mxu0 0.0
      %3078 = vmatprep.subr.mxu0 0.0
      %3079 = vmatpush1.msra.mxu0 0.0
      %3080 = vmatprep.subr.mxu0 0.0
      %3081 = vmatpush1.msra.mxu0 0.0
      %3082 = vmatprep.subr.mxu0 0.0
      %3083 = vmatpush1.msra.mxu0 0.0
      %3084 = vmatprep.subr.mxu0 0.0
      %3085 = vmatpush1.msra.mxu0 0.0
      %3086 = vmatprep.subr.mxu0 0.0
      %3087 = vmatpush1.msra.mxu0 0.0
      %3088 = vmatprep.subr.mxu0 0.0
      %3089 = vmatpush1.msra.mxu0 0.0
      %3090 = vmatprep.subr.mxu0 0.0
      %3091 = vmatpush1.msra.mxu0 0.0
      %3092 = vmatprep.subr.mxu0 0.0
      %3093 = vmatpush1.msra.mxu0 0.0
      %3094 = vmatprep.subr.mxu0 0.0
      %3095 = vmatpush1.msra.mxu0 0.0
      %3096 = vmatprep.subr.mxu0 0.0
      %3097 = vmatpush1.msra.mxu0 0.0
      %3098 = vmatprep.subr.mxu0 0.0
      %3099 = vmatpush1.msra.mxu0 0.0
      %3100 = vmatprep.subr.mxu0 0.0
      %3101 = vmatpush1.msra.mxu0 0.0
      %3102 = vmatprep.subr.mxu0 0.0
      %3103 = vmatpush1.msra.mxu0 0.0
      %3104 = vmatprep.mubr.f32.mxu0 0.0
      %3105 = vmatmul.mubr.f32.gmra.mrb[0].mxu0 %v3024
      %v3106 = vpop.f32.mrb[0].mxu0
      %v3107 = vadd.f32 0.0, %v3106
      %v3108 = vpop.f32.mrb[0].mxu0
      %v3109 = vadd.f32 0.0, %v3108
      %3110 = vmatprep.mubr.f32.mxu0 0.0
      %3111 = vmatmul.mubr.f32.gmra.mrb[0].mxu0 %v3025
      %v3112 = vpop.f32.mrb[0].mxu0
      %v3113 = vadd.f32 0.0, %v3112
      %v3114 = vpop.f32.mrb[0].mxu0
      %v3115 = vadd.f32 0.0, %v3114
      %3116 = vmatprep.mubr.f32.mxu0 0.0
      %3117 = vmatmul.mubr.f32.gmra.mrb[0].mxu0 %v3026
      %v3118 = vpop.f32.mrb[0].mxu0
      %v3119 = vadd.f32 0.0, %v3118
      %v3120 = vpop.f32.mrb[0].mxu0
      %v3121 = vadd.f32 0.0, %v3120
      %3122 = vmatprep.mubr.f32.mxu0 0.0
      %3123 = vmatmul.mubr.f32.gmra.mrb[0].mxu0 %v3027
      %v3124 = vpop.f32.mrb[0].mxu0
      %v3125 = vadd.f32 0.0, %v3124
      %v3126 = vpop.f32.mrb[0].mxu0
      %v3127 = vadd.f32 0.0, %v3126
      %3128 = vmatprep.mubr.f32.mxu0 0.0
      %3129 = vmatmul.mubr.f32.gmra.mrb[0].mxu0 %v3028
      %v3130 = vpop.f32.mrb[0].mxu0
      %v3131 = vadd.f32 0.0, %v3130
      %v3132 = vpop.f32.mrb[0].mxu0
      %v3133 = vadd.f32 0.0, %v3132
      %3134 = vmatprep.mubr.f32.mxu0 0.0
      %3135 = vmatmul.mubr.f32.gmra.mrb[0].mxu0 %v3029
      %v3136 = vpop.f32.mrb[0].mxu0
      %v3137 = vadd.f32 0.0, %v3136
      %v3138 = vpop.f32.mrb[0].mxu0
      %v3139 = vadd.f32 0.0, %v3138
      %3140 = vmatprep.mubr.f32.mxu0 0.0
      %3141 = vmatmul.mubr.f32.gmra.mrb[0].mxu0 %v3030
      %v3142 = vpop.f32.mrb[0].mxu0
      %v3143 = vadd.f32 0.0, %v3142
      %v3144 = vpop.f32.mrb[0].mxu0
      %v3145 = vadd.f32 0.0, %v3144
      %3146 = vmatprep.mubr.f32.mxu0 0.0
      %3147 = vmatmul.mubr.f32.gmra.mrb[0].mxu0 %v3031
      %v3148 = vpop.f32.mrb[0].mxu0
      %v3149 = vadd.f32 0.0, %v3148
      %v3150 = vpop.f32.mrb[0].mxu0
      %v3151 = vadd.f32 0.0, %v3150
      %3152 = vmatprep.mubr.f32.mxu0 0.0
      %3153 = vmatmul.mubr.f32.gmra.mrb[0].mxu0 %v3032
      %v3154 = vpop.f32.mrb[0].mxu0
      %v3155 = vadd.f32 0.0, %v3154
      %v3156 = vpop.f32.mrb[0].mxu0
      %v3157 = vadd.f32 0.0, %v3156
      %3158 = vmatprep.mubr.f32.mxu0 0.0
      %3159 = vmatmul.mubr.f32.gmra.mrb[0].mxu0 %v3033
      %v3160 = vpop.f32.mrb[0].mxu0
      %v3161 = vadd.f32 0.0, %v3160
      %v3162 = vpop.f32.mrb[0].mxu0
      %v3163 = vadd.f32 0.0, %v3162
      %3164 = vmatprep.mubr.f32.mxu0 0.0
      %3165 = vmatmul.mubr.f32.gmra.mrb[0].mxu0 %v3034
      %v3166 = vpop.f32.mrb[0].mxu0
      %v3167 = vadd.f32 0.0, %v3166
      %v3168 = vpop.f32.mrb[0].mxu0
      %v3169 = vadd.f32 0.0, %v3168
      %3170 = vmatprep.mubr.f32.mxu0 0.0
      %3171 = vmatmul.mubr.f32.gmra.mrb[0].mxu0 %v3035
      %v3172 = vpop.f32.mrb[0].mxu0
      %v3173 = vadd.f32 0.0, %v3172
      %v3174 = vpop.f32.mrb[0].mxu0
      %v3175 = vadd.f32 0.0, %v3174
      %3176 = vmatprep.mubr.f32.mxu0 0.0
      %3177 = vmatmul.mubr.f32.gmra.mrb[0].mxu0 %v3036
      %v3178 = vpop.f32.mrb[0].mxu0
      %v3179 = vadd.f32 0.0, %v3178
      %v3180 = vpop.f32.mrb[0].mxu0
      %v3181 = vadd.f32 0.0, %v3180
      %3182 = vmatprep.mubr.f32.mxu0 0.0
      %3183 = vmatmul.mubr.f32.gmra.mrb[0].mxu0 %v3037
      %v3184 = vpop.f32.mrb[0].mxu0
      %v3185 = vadd.f32 0.0, %v3184
      %v3186 = vpop.f32.mrb[0].mxu0
      %v3187 = vadd.f32 0.0, %v3186
      %3188 = vmatprep.mubr.f32.mxu0 0.0
      %3189 = vmatmul.mubr.f32.gmra.mrb[0].mxu0 %v3038
      %v3190 = vpop.f32.mrb[0].mxu0
      %v3191 = vadd.f32 0.0, %v3190
      %v3192 = vpop.f32.mrb[0].mxu0
      %v3193 = vadd.f32 0.0, %v3192
      %3194 = vmatprep.mubr.f32.mxu0 0.0
      %3195 = vmatmul.mubr.f32.gmra.mrb[0].mxu0 %v3039
      %v3196 = vpop.f32.mrb[0].mxu0
      %v3197 = vadd.f32 0.0, %v3196
      %v3198 = vpop.f32.mrb[0].mxu0
      %v3199 = vadd.f32 0.0, %v3198
      %3200 = vdwg.mxu0
      %v3201 = vmul.f32 %v1058, %v3107
      %v3202 = vmul.f32 %v1062, %v3109
      %v3203 = vmul.f32 %v1058, %v3113
      %v3204 = vmul.f32 %v1062, %v3115
      %v3205 = vmul.f32 %v1058, %v3119
      %v3206 = vmul.f32 %v1062, %v3121
      %v3207 = vmul.f32 %v1058, %v3125
      %v3208 = vmul.f32 %v1062, %v3127
      %v3209 = vmul.f32 %v1058, %v3131
      %v3210 = vmul.f32 %v1062, %v3133
      %v3211 = vmul.f32 %v1058, %v3137
      %v3212 = vmul.f32 %v1062, %v3139
      %v3213 = vmul.f32 %v1058, %v3143
      %v3214 = vmul.f32 %v1062, %v3145
      %v3215 = vmul.f32 %v1058, %v3149
      %v3216 = vmul.f32 %v1062, %v3151
      %v3217 = vmul.f32 %v1058, %v3155
      %v3218 = vmul.f32 %v1062, %v3157
      %v3219 = vmul.f32 %v1058, %v3161
      %v3220 = vmul.f32 %v1062, %v3163
      %v3221 = vmul.f32 %v1058, %v3167
      %v3222 = vmul.f32 %v1062, %v3169
      %v3223 = vmul.f32 %v1058, %v3173
      %v3224 = vmul.f32 %v1062, %v3175
      %v3225 = vmul.f32 %v1058, %v3179
      %v3226 = vmul.f32 %v1062, %v3181
      %v3227 = vmul.f32 %v1058, %v3185
      %v3228 = vmul.f32 %v1062, %v3187
      %v3229 = vmul.f32 %v1058, %v3191
      %v3230 = vmul.f32 %v1062, %v3193
      %v3231 = vmul.f32 %v1058, %v3197
      %v3232 = vmul.f32 %v1062, %v3199
      %s3233 = scalar_lea.vmem %s5, 128
      %v3234 = vld [vmem:[%s3233] sm:$0xff]
      %v3235 = vld [vmem:[%s3233 + $0x8] sm:$0xff]
      %v3236 = vld [vmem:[%s3233 + $0x10] sm:$0xff]
      %v3237 = vld [vmem:[%s3233 + $0x18] sm:$0xff]
      %v3238 = vld [vmem:[%s3233 + $0x20] sm:$0xff]
      %v3239 = vld [vmem:[%s3233 + $0x28] sm:$0xff]
      %v3240 = vld [vmem:[%s3233 + $0x30] sm:$0xff]
      %v3241 = vld [vmem:[%s3233 + $0x38] sm:$0xff]
      %v3242 = vld [vmem:[%s3233 + $0x40] sm:$0xff]
      %v3243 = vld [vmem:[%s3233 + $0x48] sm:$0xff]
      %v3244 = vld [vmem:[%s3233 + $0x50] sm:$0xff]
      %v3245 = vld [vmem:[%s3233 + $0x58] sm:$0xff]
      %v3246 = vld [vmem:[%s3233 + $0x60] sm:$0xff]
      %v3247 = vld [vmem:[%s3233 + $0x68] sm:$0xff]
      %v3248 = vld [vmem:[%s3233 + $0x70] sm:$0xff]
      %v3249 = vld [vmem:[%s3233 + $0x78] sm:$0xff]
      %3251 = vset.pattern.permute.xlu0 0
      %3252 = vperm.xlu0 %3251, %v3234
      %v3253 = vpop.permute.xlu0 %3252
      %3256 = vset.pattern.permute.xlu0 0
      %3257 = vperm.xlu0 %3256, %v3235
      %v3258 = vpop.permute.xlu0 %3257
      %3261 = vset.pattern.permute.xlu0 0
      %3262 = vperm.xlu0 %3261, %v3236
      %v3263 = vpop.permute.xlu0 %3262
      %3266 = vset.pattern.permute.xlu0 0
      %3267 = vperm.xlu0 %3266, %v3237
      %v3268 = vpop.permute.xlu0 %3267
      %3271 = vset.pattern.permute.xlu0 0
      %3272 = vperm.xlu0 %3271, %v3238
      %v3273 = vpop.permute.xlu0 %3272
      %3276 = vset.pattern.permute.xlu0 0
      %3277 = vperm.xlu0 %3276, %v3239
      %v3278 = vpop.permute.xlu0 %3277
      %3281 = vset.pattern.permute.xlu0 0
      %3282 = vperm.xlu0 %3281, %v3240
      %v3283 = vpop.permute.xlu0 %3282
      %3286 = vset.pattern.permute.xlu0 0
      %3287 = vperm.xlu0 %3286, %v3241
      %v3288 = vpop.permute.xlu0 %3287
      %3291 = vset.pattern.permute.xlu0 0
      %3292 = vperm.xlu0 %3291, %v3242
      %v3293 = vpop.permute.xlu0 %3292
      %3296 = vset.pattern.permute.xlu0 0
      %3297 = vperm.xlu0 %3296, %v3243
      %v3298 = vpop.permute.xlu0 %3297
      %3301 = vset.pattern.permute.xlu0 0
      %3302 = vperm.xlu0 %3301, %v3244
      %v3303 = vpop.permute.xlu0 %3302
      %3306 = vset.pattern.permute.xlu0 0
      %3307 = vperm.xlu0 %3306, %v3245
      %v3308 = vpop.permute.xlu0 %3307
      %3311 = vset.pattern.permute.xlu0 0
      %3312 = vperm.xlu0 %3311, %v3246
      %v3313 = vpop.permute.xlu0 %3312
      %3316 = vset.pattern.permute.xlu0 0
      %3317 = vperm.xlu0 %3316, %v3247
      %v3318 = vpop.permute.xlu0 %3317
      %3321 = vset.pattern.permute.xlu0 0
      %3322 = vperm.xlu0 %3321, %v3248
      %v3323 = vpop.permute.xlu0 %3322
      %3326 = vset.pattern.permute.xlu0 0
      %3327 = vperm.xlu0 %3326, %v3249
      %v3328 = vpop.permute.xlu0 %3327
      %v3330 = vadd.f32 %v3201, %v3253
      %v3331 = vadd.f32 %v3202, %v3253
      %v3332 = vadd.f32 %v3203, %v3258
      %v3333 = vadd.f32 %v3204, %v3258
      %v3334 = vadd.f32 %v3205, %v3263
      %v3335 = vadd.f32 %v3206, %v3263
      %v3336 = vadd.f32 %v3207, %v3268
      %v3337 = vadd.f32 %v3208, %v3268
      %v3338 = vadd.f32 %v3209, %v3273
      %v3339 = vadd.f32 %v3210, %v3273
      %v3340 = vadd.f32 %v3211, %v3278
      %v3341 = vadd.f32 %v3212, %v3278
      %v3342 = vadd.f32 %v3213, %v3283
      %v3343 = vadd.f32 %v3214, %v3283
      %v3344 = vadd.f32 %v3215, %v3288
      %v3345 = vadd.f32 %v3216, %v3288
      %v3346 = vadd.f32 %v3217, %v3293
      %v3347 = vadd.f32 %v3218, %v3293
      %v3348 = vadd.f32 %v3219, %v3298
      %v3349 = vadd.f32 %v3220, %v3298
      %v3350 = vadd.f32 %v3221, %v3303
      %v3351 = vadd.f32 %v3222, %v3303
      %v3352 = vadd.f32 %v3223, %v3308
      %v3353 = vadd.f32 %v3224, %v3308
      %v3354 = vadd.f32 %v3225, %v3313
      %v3355 = vadd.f32 %v3226, %v3313
      %v3356 = vadd.f32 %v3227, %v3318
      %v3357 = vadd.f32 %v3228, %v3318
      %v3358 = vadd.f32 %v3229, %v3323
      %v3359 = vadd.f32 %v3230, %v3323
      %v3360 = vadd.f32 %v3231, %v3328
      %v3361 = vadd.f32 %v3232, %v3328
      %3378 = vrot.lane.b32.xlu0 %v3109, 17
      %v3379 = vpop.permute.xlu0 %3378
      %3380 = vrot.lane.b32.xlu0 %v3115, 17
      %v3381 = vpop.permute.xlu0 %3380
      %3382 = vrot.lane.b32.xlu0 %v3121, 17
      %v3383 = vpop.permute.xlu0 %3382
      %3384 = vrot.lane.b32.xlu0 %v3127, 17
      %v3385 = vpop.permute.xlu0 %3384
      %3386 = vrot.lane.b32.xlu0 %v3133, 17
      %v3387 = vpop.permute.xlu0 %3386
      %3388 = vrot.lane.b32.xlu0 %v3139, 17
      %v3389 = vpop.permute.xlu0 %3388
      %3390 = vrot.lane.b32.xlu0 %v3145, 17
      %v3391 = vpop.permute.xlu0 %3390
      %3392 = vrot.lane.b32.xlu0 %v3151, 17
      %v3393 = vpop.permute.xlu0 %3392
      %3394 = vrot.lane.b32.xlu0 %v3157, 17
      %v3395 = vpop.permute.xlu0 %3394
      %3396 = vrot.lane.b32.xlu0 %v3163, 17
      %v3397 = vpop.permute.xlu0 %3396
      %3398 = vrot.lane.b32.xlu0 %v3169, 17
      %v3399 = vpop.permute.xlu0 %3398
      %3400 = vrot.lane.b32.xlu0 %v3175, 17
      %v3401 = vpop.permute.xlu0 %3400
      %3402 = vrot.lane.b32.xlu0 %v3181, 17
      %v3403 = vpop.permute.xlu0 %3402
      %3404 = vrot.lane.b32.xlu0 %v3187, 17
      %v3405 = vpop.permute.xlu0 %3404
      %3406 = vrot.lane.b32.xlu0 %v3193, 17
      %v3407 = vpop.permute.xlu0 %3406
      %3408 = vrot.lane.b32.xlu0 %v3199, 17
      %v3409 = vpop.permute.xlu0 %3408
      %3442 = vrot.lane.b32.xlu0 %v3107, 17
      %v3443 = vpop.permute.xlu0 %3442
      %3444 = vrot.lane.b32.xlu0 %v3113, 17
      %v3445 = vpop.permute.xlu0 %3444
      %3446 = vrot.lane.b32.xlu0 %v3119, 17
      %v3447 = vpop.permute.xlu0 %3446
      %3448 = vrot.lane.b32.xlu0 %v3125, 17
      %v3449 = vpop.permute.xlu0 %3448
      %3450 = vrot.lane.b32.xlu0 %v3131, 17
      %v3451 = vpop.permute.xlu0 %3450
      %3452 = vrot.lane.b32.xlu0 %v3137, 17
      %v3453 = vpop.permute.xlu0 %3452
      %3454 = vrot.lane.b32.xlu0 %v3143, 17
      %v3455 = vpop.permute.xlu0 %3454
      %3456 = vrot.lane.b32.xlu0 %v3149, 17
      %v3457 = vpop.permute.xlu0 %3456
      %3458 = vrot.lane.b32.xlu0 %v3155, 17
      %v3459 = vpop.permute.xlu0 %3458
      %3460 = vrot.lane.b32.xlu0 %v3161, 17
      %v3461 = vpop.permute.xlu0 %3460
      %3462 = vrot.lane.b32.xlu0 %v3167, 17
      %v3463 = vpop.permute.xlu0 %3462
      %3464 = vrot.lane.b32.xlu0 %v3173, 17
      %v3465 = vpop.permute.xlu0 %3464
      %3466 = vrot.lane.b32.xlu0 %v3179, 17
      %v3467 = vpop.permute.xlu0 %3466
      %3468 = vrot.lane.b32.xlu0 %v3185, 17
      %v3469 = vpop.permute.xlu0 %3468
      %3470 = vrot.lane.b32.xlu0 %v3191, 17
      %v3471 = vpop.permute.xlu0 %3470
      %3472 = vrot.lane.b32.xlu0 %v3197, 17
      %v3473 = vpop.permute.xlu0 %3472
      %v3474 = vsel %vm1335, %v3443, %v3379
      %v3475 = vsel %vm1335, %v3445, %v3381
      %v3476 = vsel %vm1335, %v3447, %v3383
      %v3477 = vsel %vm1335, %v3449, %v3385
      %v3478 = vsel %vm1335, %v3451, %v3387
      %v3479 = vsel %vm1335, %v3453, %v3389
      %v3480 = vsel %vm1335, %v3455, %v3391
      %v3481 = vsel %vm1335, %v3457, %v3393
      %v3482 = vsel %vm1335, %v3459, %v3395
      %v3483 = vsel %vm1335, %v3461, %v3397
      %v3484 = vsel %vm1335, %v3463, %v3399
      %v3485 = vsel %vm1335, %v3465, %v3401
      %v3486 = vsel %vm1335, %v3467, %v3403
      %v3487 = vsel %vm1335, %v3469, %v3405
      %v3488 = vsel %vm1335, %v3471, %v3407
      %v3489 = vsel %vm1335, %v3473, %v3409
      %v3522 = vsel %vm1335, %v3379, %v3443
      %v3523 = vsel %vm1335, %v3381, %v3445
      %v3524 = vsel %vm1335, %v3383, %v3447
      %v3525 = vsel %vm1335, %v3385, %v3449
      %v3526 = vsel %vm1335, %v3387, %v3451
      %v3527 = vsel %vm1335, %v3389, %v3453
      %v3528 = vsel %vm1335, %v3391, %v3455
      %v3529 = vsel %vm1335, %v3393, %v3457
      %v3530 = vsel %vm1335, %v3395, %v3459
      %v3531 = vsel %vm1335, %v3397, %v3461
      %v3532 = vsel %vm1335, %v3399, %v3463
      %v3533 = vsel %vm1335, %v3401, %v3465
      %v3534 = vsel %vm1335, %v3403, %v3467
      %v3535 = vsel %vm1335, %v3405, %v3469
      %v3536 = vsel %vm1335, %v3407, %v3471
      %v3537 = vsel %vm1335, %v3409, %v3473
      %v3538 = vmul.f32 %v1403, %v3522
      %v3539 = vmul.f32 %v1407, %v3474
      %v3540 = vmul.f32 %v1403, %v3523
      %v3541 = vmul.f32 %v1407, %v3475
      %v3542 = vmul.f32 %v1403, %v3524
      %v3543 = vmul.f32 %v1407, %v3476
      %v3544 = vmul.f32 %v1403, %v3525
      %v3545 = vmul.f32 %v1407, %v3477
      %v3546 = vmul.f32 %v1403, %v3526
      %v3547 = vmul.f32 %v1407, %v3478
      %v3548 = vmul.f32 %v1403, %v3527
      %v3549 = vmul.f32 %v1407, %v3479
      %v3550 = vmul.f32 %v1403, %v3528
      %v3551 = vmul.f32 %v1407, %v3480
      %v3552 = vmul.f32 %v1403, %v3529
      %v3553 = vmul.f32 %v1407, %v3481
      %v3554 = vmul.f32 %v1403, %v3530
      %v3555 = vmul.f32 %v1407, %v3482
      %v3556 = vmul.f32 %v1403, %v3531
      %v3557 = vmul.f32 %v1407, %v3483
      %v3558 = vmul.f32 %v1403, %v3532
      %v3559 = vmul.f32 %v1407, %v3484
      %v3560 = vmul.f32 %v1403, %v3533
      %v3561 = vmul.f32 %v1407, %v3485
      %v3562 = vmul.f32 %v1403, %v3534
      %v3563 = vmul.f32 %v1407, %v3486
      %v3564 = vmul.f32 %v1403, %v3535
      %v3565 = vmul.f32 %v1407, %v3487
      %v3566 = vmul.f32 %v1403, %v3536
      %v3567 = vmul.f32 %v1407, %v3488
      %v3568 = vmul.f32 %v1403, %v3537
      %v3569 = vmul.f32 %v1407, %v3489
      %v3570 = vadd.f32 %v3330, %v3538
      %v3571 = vadd.f32 %v3331, %v3539
      %v3572 = vadd.f32 %v3332, %v3540
      %v3573 = vadd.f32 %v3333, %v3541
      %v3574 = vadd.f32 %v3334, %v3542
      %v3575 = vadd.f32 %v3335, %v3543
      %v3576 = vadd.f32 %v3336, %v3544
      %v3577 = vadd.f32 %v3337, %v3545
      %v3578 = vadd.f32 %v3338, %v3546
      %v3579 = vadd.f32 %v3339, %v3547
      %v3580 = vadd.f32 %v3340, %v3548
      %v3581 = vadd.f32 %v3341, %v3549
      %v3582 = vadd.f32 %v3342, %v3550
      %v3583 = vadd.f32 %v3343, %v3551
      %v3584 = vadd.f32 %v3344, %v3552
      %v3585 = vadd.f32 %v3345, %v3553
      %v3586 = vadd.f32 %v3346, %v3554
      %v3587 = vadd.f32 %v3347, %v3555
      %v3588 = vadd.f32 %v3348, %v3556
      %v3589 = vadd.f32 %v3349, %v3557
      %v3590 = vadd.f32 %v3350, %v3558
      %v3591 = vadd.f32 %v3351, %v3559
      %v3592 = vadd.f32 %v3352, %v3560
      %v3593 = vadd.f32 %v3353, %v3561
      %v3594 = vadd.f32 %v3354, %v3562
      %v3595 = vadd.f32 %v3355, %v3563
      %v3596 = vadd.f32 %v3356, %v3564
      %v3597 = vadd.f32 %v3357, %v3565
      %v3598 = vadd.f32 %v3358, %v3566
      %v3599 = vadd.f32 %v3359, %v3567
      %v3600 = vadd.f32 %v3360, %v3568
      %v3601 = vadd.f32 %v3361, %v3569
      %3602 = vrot.lane.b32.xlu0 %v3109, 16
      %v3603 = vpop.permute.xlu0 %3602
      %3604 = vrot.lane.b32.xlu0 %v3115, 16
      %v3605 = vpop.permute.xlu0 %3604
      %3606 = vrot.lane.b32.xlu0 %v3121, 16
      %v3607 = vpop.permute.xlu0 %3606
      %3608 = vrot.lane.b32.xlu0 %v3127, 16
      %v3609 = vpop.permute.xlu0 %3608
      %3610 = vrot.lane.b32.xlu0 %v3133, 16
      %v3611 = vpop.permute.xlu0 %3610
      %3612 = vrot.lane.b32.xlu0 %v3139, 16
      %v3613 = vpop.permute.xlu0 %3612
      %3614 = vrot.lane.b32.xlu0 %v3145, 16
      %v3615 = vpop.permute.xlu0 %3614
      %3616 = vrot.lane.b32.xlu0 %v3151, 16
      %v3617 = vpop.permute.xlu0 %3616
      %3618 = vrot.lane.b32.xlu0 %v3157, 16
      %v3619 = vpop.permute.xlu0 %3618
      %3620 = vrot.lane.b32.xlu0 %v3163, 16
      %v3621 = vpop.permute.xlu0 %3620
      %3622 = vrot.lane.b32.xlu0 %v3169, 16
      %v3623 = vpop.permute.xlu0 %3622
      %3624 = vrot.lane.b32.xlu0 %v3175, 16
      %v3625 = vpop.permute.xlu0 %3624
      %3626 = vrot.lane.b32.xlu0 %v3181, 16
      %v3627 = vpop.permute.xlu0 %3626
      %3628 = vrot.lane.b32.xlu0 %v3187, 16
      %v3629 = vpop.permute.xlu0 %3628
      %3630 = vrot.lane.b32.xlu0 %v3193, 16
      %v3631 = vpop.permute.xlu0 %3630
      %3632 = vrot.lane.b32.xlu0 %v3199, 16
      %v3633 = vpop.permute.xlu0 %3632
      %3650 = vrot.lane.b32.xlu0 %v3107, 16
      %v3651 = vpop.permute.xlu0 %3650
      %3652 = vrot.lane.b32.xlu0 %v3113, 16
      %v3653 = vpop.permute.xlu0 %3652
      %3654 = vrot.lane.b32.xlu0 %v3119, 16
      %v3655 = vpop.permute.xlu0 %3654
      %3656 = vrot.lane.b32.xlu0 %v3125, 16
      %v3657 = vpop.permute.xlu0 %3656
      %3658 = vrot.lane.b32.xlu0 %v3131, 16
      %v3659 = vpop.permute.xlu0 %3658
      %3660 = vrot.lane.b32.xlu0 %v3137, 16
      %v3661 = vpop.permute.xlu0 %3660
      %3662 = vrot.lane.b32.xlu0 %v3143, 16
      %v3663 = vpop.permute.xlu0 %3662
      %3664 = vrot.lane.b32.xlu0 %v3149, 16
      %v3665 = vpop.permute.xlu0 %3664
      %3666 = vrot.lane.b32.xlu0 %v3155, 16
      %v3667 = vpop.permute.xlu0 %3666
      %3668 = vrot.lane.b32.xlu0 %v3161, 16
      %v3669 = vpop.permute.xlu0 %3668
      %3670 = vrot.lane.b32.xlu0 %v3167, 16
      %v3671 = vpop.permute.xlu0 %3670
      %3672 = vrot.lane.b32.xlu0 %v3173, 16
      %v3673 = vpop.permute.xlu0 %3672
      %3674 = vrot.lane.b32.xlu0 %v3179, 16
      %v3675 = vpop.permute.xlu0 %3674
      %3676 = vrot.lane.b32.xlu0 %v3185, 16
      %v3677 = vpop.permute.xlu0 %3676
      %3678 = vrot.lane.b32.xlu0 %v3191, 16
      %v3679 = vpop.permute.xlu0 %3678
      %3680 = vrot.lane.b32.xlu0 %v3197, 16
      %v3681 = vpop.permute.xlu0 %3680
      %v3682 = vsel %vm1552, %v3651, %v3603
      %v3683 = vsel %vm1552, %v3653, %v3605
      %v3684 = vsel %vm1552, %v3655, %v3607
      %v3685 = vsel %vm1552, %v3657, %v3609
      %v3686 = vsel %vm1552, %v3659, %v3611
      %v3687 = vsel %vm1552, %v3661, %v3613
      %v3688 = vsel %vm1552, %v3663, %v3615
      %v3689 = vsel %vm1552, %v3665, %v3617
      %v3690 = vsel %vm1552, %v3667, %v3619
      %v3691 = vsel %vm1552, %v3669, %v3621
      %v3692 = vsel %vm1552, %v3671, %v3623
      %v3693 = vsel %vm1552, %v3673, %v3625
      %v3694 = vsel %vm1552, %v3675, %v3627
      %v3695 = vsel %vm1552, %v3677, %v3629
      %v3696 = vsel %vm1552, %v3679, %v3631
      %v3697 = vsel %vm1552, %v3681, %v3633
      %v3730 = vsel %vm1552, %v3603, %v3651
      %v3731 = vsel %vm1552, %v3605, %v3653
      %v3732 = vsel %vm1552, %v3607, %v3655
      %v3733 = vsel %vm1552, %v3609, %v3657
      %v3734 = vsel %vm1552, %v3611, %v3659
      %v3735 = vsel %vm1552, %v3613, %v3661
      %v3736 = vsel %vm1552, %v3615, %v3663
      %v3737 = vsel %vm1552, %v3617, %v3665
      %v3738 = vsel %vm1552, %v3619, %v3667
      %v3739 = vsel %vm1552, %v3621, %v3669
      %v3740 = vsel %vm1552, %v3623, %v3671
      %v3741 = vsel %vm1552, %v3625, %v3673
      %v3742 = vsel %vm1552, %v3627, %v3675
      %v3743 = vsel %vm1552, %v3629, %v3677
      %v3744 = vsel %vm1552, %v3631, %v3679
      %v3745 = vsel %vm1552, %v3633, %v3681
      %v3746 = vmul.f32 %v1620, %v3730
      %v3747 = vmul.f32 %v1624, %v3682
      %v3748 = vmul.f32 %v1620, %v3731
      %v3749 = vmul.f32 %v1624, %v3683
      %v3750 = vmul.f32 %v1620, %v3732
      %v3751 = vmul.f32 %v1624, %v3684
      %v3752 = vmul.f32 %v1620, %v3733
      %v3753 = vmul.f32 %v1624, %v3685
      %v3754 = vmul.f32 %v1620, %v3734
      %v3755 = vmul.f32 %v1624, %v3686
      %v3756 = vmul.f32 %v1620, %v3735
      %v3757 = vmul.f32 %v1624, %v3687
      %v3758 = vmul.f32 %v1620, %v3736
      %v3759 = vmul.f32 %v1624, %v3688
      %v3760 = vmul.f32 %v1620, %v3737
      %v3761 = vmul.f32 %v1624, %v3689
      %v3762 = vmul.f32 %v1620, %v3738
      %v3763 = vmul.f32 %v1624, %v3690
      %v3764 = vmul.f32 %v1620, %v3739
      %v3765 = vmul.f32 %v1624, %v3691
      %v3766 = vmul.f32 %v1620, %v3740
      %v3767 = vmul.f32 %v1624, %v3692
      %v3768 = vmul.f32 %v1620, %v3741
      %v3769 = vmul.f32 %v1624, %v3693
      %v3770 = vmul.f32 %v1620, %v3742
      %v3771 = vmul.f32 %v1624, %v3694
      %v3772 = vmul.f32 %v1620, %v3743
      %v3773 = vmul.f32 %v1624, %v3695
      %v3774 = vmul.f32 %v1620, %v3744
      %v3775 = vmul.f32 %v1624, %v3696
      %v3776 = vmul.f32 %v1620, %v3745
      %v3777 = vmul.f32 %v1624, %v3697
      %v3778 = vadd.f32 %v3570, %v3746
      %v3779 = vadd.f32 %v3571, %v3747
      %v3780 = vadd.f32 %v3572, %v3748
      %v3781 = vadd.f32 %v3573, %v3749
      %v3782 = vadd.f32 %v3574, %v3750
      %v3783 = vadd.f32 %v3575, %v3751
      %v3784 = vadd.f32 %v3576, %v3752
      %v3785 = vadd.f32 %v3577, %v3753
      %v3786 = vadd.f32 %v3578, %v3754
      %v3787 = vadd.f32 %v3579, %v3755
      %v3788 = vadd.f32 %v3580, %v3756
      %v3789 = vadd.f32 %v3581, %v3757
      %v3790 = vadd.f32 %v3582, %v3758
      %v3791 = vadd.f32 %v3583, %v3759
      %v3792 = vadd.f32 %v3584, %v3760
      %v3793 = vadd.f32 %v3585, %v3761
      %v3794 = vadd.f32 %v3586, %v3762
      %v3795 = vadd.f32 %v3587, %v3763
      %v3796 = vadd.f32 %v3588, %v3764
      %v3797 = vadd.f32 %v3589, %v3765
      %v3798 = vadd.f32 %v3590, %v3766
      %v3799 = vadd.f32 %v3591, %v3767
      %v3800 = vadd.f32 %v3592, %v3768
      %v3801 = vadd.f32 %v3593, %v3769
      %v3802 = vadd.f32 %v3594, %v3770
      %v3803 = vadd.f32 %v3595, %v3771
      %v3804 = vadd.f32 %v3596, %v3772
      %v3805 = vadd.f32 %v3597, %v3773
      %v3806 = vadd.f32 %v3598, %v3774
      %v3807 = vadd.f32 %v3599, %v3775
      %v3808 = vadd.f32 %v3600, %v3776
      %v3809 = vadd.f32 %v3601, %v3777
      %3810 = vrot.lane.b32.xlu0 %v3109, 15
      %v3811 = vpop.permute.xlu0 %3810
      %3812 = vrot.lane.b32.xlu0 %v3115, 15
      %v3813 = vpop.permute.xlu0 %3812
      %3814 = vrot.lane.b32.xlu0 %v3121, 15
      %v3815 = vpop.permute.xlu0 %3814
      %3816 = vrot.lane.b32.xlu0 %v3127, 15
      %v3817 = vpop.permute.xlu0 %3816
      %3818 = vrot.lane.b32.xlu0 %v3133, 15
      %v3819 = vpop.permute.xlu0 %3818
      %3820 = vrot.lane.b32.xlu0 %v3139, 15
      %v3821 = vpop.permute.xlu0 %3820
      %3822 = vrot.lane.b32.xlu0 %v3145, 15
      %v3823 = vpop.permute.xlu0 %3822
      %3824 = vrot.lane.b32.xlu0 %v3151, 15
      %v3825 = vpop.permute.xlu0 %3824
      %3826 = vrot.lane.b32.xlu0 %v3157, 15
      %v3827 = vpop.permute.xlu0 %3826
      %3828 = vrot.lane.b32.xlu0 %v3163, 15
      %v3829 = vpop.permute.xlu0 %3828
      %3830 = vrot.lane.b32.xlu0 %v3169, 15
      %v3831 = vpop.permute.xlu0 %3830
      %3832 = vrot.lane.b32.xlu0 %v3175, 15
      %v3833 = vpop.permute.xlu0 %3832
      %3834 = vrot.lane.b32.xlu0 %v3181, 15
      %v3835 = vpop.permute.xlu0 %3834
      %3836 = vrot.lane.b32.xlu0 %v3187, 15
      %v3837 = vpop.permute.xlu0 %3836
      %3838 = vrot.lane.b32.xlu0 %v3193, 15
      %v3839 = vpop.permute.xlu0 %3838
      %3840 = vrot.lane.b32.xlu0 %v3199, 15
      %v3841 = vpop.permute.xlu0 %3840
      %3858 = vrot.lane.b32.xlu0 %v3107, 15
      %v3859 = vpop.permute.xlu0 %3858
      %3860 = vrot.lane.b32.xlu0 %v3113, 15
      %v3861 = vpop.permute.xlu0 %3860
      %3862 = vrot.lane.b32.xlu0 %v3119, 15
      %v3863 = vpop.permute.xlu0 %3862
      %3864 = vrot.lane.b32.xlu0 %v3125, 15
      %v3865 = vpop.permute.xlu0 %3864
      %3866 = vrot.lane.b32.xlu0 %v3131, 15
      %v3867 = vpop.permute.xlu0 %3866
      %3868 = vrot.lane.b32.xlu0 %v3137, 15
      %v3869 = vpop.permute.xlu0 %3868
      %3870 = vrot.lane.b32.xlu0 %v3143, 15
      %v3871 = vpop.permute.xlu0 %3870
      %3872 = vrot.lane.b32.xlu0 %v3149, 15
      %v3873 = vpop.permute.xlu0 %3872
      %3874 = vrot.lane.b32.xlu0 %v3155, 15
      %v3875 = vpop.permute.xlu0 %3874
      %3876 = vrot.lane.b32.xlu0 %v3161, 15
      %v3877 = vpop.permute.xlu0 %3876
      %3878 = vrot.lane.b32.xlu0 %v3167, 15
      %v3879 = vpop.permute.xlu0 %3878
      %3880 = vrot.lane.b32.xlu0 %v3173, 15
      %v3881 = vpop.permute.xlu0 %3880
      %3882 = vrot.lane.b32.xlu0 %v3179, 15
      %v3883 = vpop.permute.xlu0 %3882
      %3884 = vrot.lane.b32.xlu0 %v3185, 15
      %v3885 = vpop.permute.xlu0 %3884
      %3886 = vrot.lane.b32.xlu0 %v3191, 15
      %v3887 = vpop.permute.xlu0 %3886
      %3888 = vrot.lane.b32.xlu0 %v3197, 15
      %v3889 = vpop.permute.xlu0 %3888
      %v3890 = vsel %vm1769, %v3859, %v3811
      %v3891 = vsel %vm1769, %v3861, %v3813
      %v3892 = vsel %vm1769, %v3863, %v3815
      %v3893 = vsel %vm1769, %v3865, %v3817
      %v3894 = vsel %vm1769, %v3867, %v3819
      %v3895 = vsel %vm1769, %v3869, %v3821
      %v3896 = vsel %vm1769, %v3871, %v3823
      %v3897 = vsel %vm1769, %v3873, %v3825
      %v3898 = vsel %vm1769, %v3875, %v3827
      %v3899 = vsel %vm1769, %v3877, %v3829
      %v3900 = vsel %vm1769, %v3879, %v3831
      %v3901 = vsel %vm1769, %v3881, %v3833
      %v3902 = vsel %vm1769, %v3883, %v3835
      %v3903 = vsel %vm1769, %v3885, %v3837
      %v3904 = vsel %vm1769, %v3887, %v3839
      %v3905 = vsel %vm1769, %v3889, %v3841
      %v3938 = vsel %vm1769, %v3811, %v3859
      %v3939 = vsel %vm1769, %v3813, %v3861
      %v3940 = vsel %vm1769, %v3815, %v3863
      %v3941 = vsel %vm1769, %v3817, %v3865
      %v3942 = vsel %vm1769, %v3819, %v3867
      %v3943 = vsel %vm1769, %v3821, %v3869
      %v3944 = vsel %vm1769, %v3823, %v3871
      %v3945 = vsel %vm1769, %v3825, %v3873
      %v3946 = vsel %vm1769, %v3827, %v3875
      %v3947 = vsel %vm1769, %v3829, %v3877
      %v3948 = vsel %vm1769, %v3831, %v3879
      %v3949 = vsel %vm1769, %v3833, %v3881
      %v3950 = vsel %vm1769, %v3835, %v3883
      %v3951 = vsel %vm1769, %v3837, %v3885
      %v3952 = vsel %vm1769, %v3839, %v3887
      %v3953 = vsel %vm1769, %v3841, %v3889
      %v3954 = vmul.f32 %v1837, %v3938
      %v3955 = vmul.f32 %v1841, %v3890
      %v3956 = vmul.f32 %v1837, %v3939
      %v3957 = vmul.f32 %v1841, %v3891
      %v3958 = vmul.f32 %v1837, %v3940
      %v3959 = vmul.f32 %v1841, %v3892
      %v3960 = vmul.f32 %v1837, %v3941
      %v3961 = vmul.f32 %v1841, %v3893
      %v3962 = vmul.f32 %v1837, %v3942
      %v3963 = vmul.f32 %v1841, %v3894
      %v3964 = vmul.f32 %v1837, %v3943
      %v3965 = vmul.f32 %v1841, %v3895
      %v3966 = vmul.f32 %v1837, %v3944
      %v3967 = vmul.f32 %v1841, %v3896
      %v3968 = vmul.f32 %v1837, %v3945
      %v3969 = vmul.f32 %v1841, %v3897
      %v3970 = vmul.f32 %v1837, %v3946
      %v3971 = vmul.f32 %v1841, %v3898
      %v3972 = vmul.f32 %v1837, %v3947
      %v3973 = vmul.f32 %v1841, %v3899
      %v3974 = vmul.f32 %v1837, %v3948
      %v3975 = vmul.f32 %v1841, %v3900
      %v3976 = vmul.f32 %v1837, %v3949
      %v3977 = vmul.f32 %v1841, %v3901
      %v3978 = vmul.f32 %v1837, %v3950
      %v3979 = vmul.f32 %v1841, %v3902
      %v3980 = vmul.f32 %v1837, %v3951
      %v3981 = vmul.f32 %v1841, %v3903
      %v3982 = vmul.f32 %v1837, %v3952
      %v3983 = vmul.f32 %v1841, %v3904
      %v3984 = vmul.f32 %v1837, %v3953
      %v3985 = vmul.f32 %v1841, %v3905
      %v3986 = vadd.f32 %v3778, %v3954
      %v3987 = vadd.f32 %v3779, %v3955
      %v3988 = vadd.f32 %v3780, %v3956
      %v3989 = vadd.f32 %v3781, %v3957
      %v3990 = vadd.f32 %v3782, %v3958
      %v3991 = vadd.f32 %v3783, %v3959
      %v3992 = vadd.f32 %v3784, %v3960
      %v3993 = vadd.f32 %v3785, %v3961
      %v3994 = vadd.f32 %v3786, %v3962
      %v3995 = vadd.f32 %v3787, %v3963
      %v3996 = vadd.f32 %v3788, %v3964
      %v3997 = vadd.f32 %v3789, %v3965
      %v3998 = vadd.f32 %v3790, %v3966
      %v3999 = vadd.f32 %v3791, %v3967
      %v4000 = vadd.f32 %v3792, %v3968
      %v4001 = vadd.f32 %v3793, %v3969
      %v4002 = vadd.f32 %v3794, %v3970
      %v4003 = vadd.f32 %v3795, %v3971
      %v4004 = vadd.f32 %v3796, %v3972
      %v4005 = vadd.f32 %v3797, %v3973
      %v4006 = vadd.f32 %v3798, %v3974
      %v4007 = vadd.f32 %v3799, %v3975
      %v4008 = vadd.f32 %v3800, %v3976
      %v4009 = vadd.f32 %v3801, %v3977
      %v4010 = vadd.f32 %v3802, %v3978
      %v4011 = vadd.f32 %v3803, %v3979
      %v4012 = vadd.f32 %v3804, %v3980
      %v4013 = vadd.f32 %v3805, %v3981
      %v4014 = vadd.f32 %v3806, %v3982
      %v4015 = vadd.f32 %v3807, %v3983
      %v4016 = vadd.f32 %v3808, %v3984
      %v4017 = vadd.f32 %v3809, %v3985
      %4018 = vrot.lane.b32.xlu0 %v3109, 1
      %v4019 = vpop.permute.xlu0 %4018
      %4020 = vrot.lane.b32.xlu0 %v3115, 1
      %v4021 = vpop.permute.xlu0 %4020
      %4022 = vrot.lane.b32.xlu0 %v3121, 1
      %v4023 = vpop.permute.xlu0 %4022
      %4024 = vrot.lane.b32.xlu0 %v3127, 1
      %v4025 = vpop.permute.xlu0 %4024
      %4026 = vrot.lane.b32.xlu0 %v3133, 1
      %v4027 = vpop.permute.xlu0 %4026
      %4028 = vrot.lane.b32.xlu0 %v3139, 1
      %v4029 = vpop.permute.xlu0 %4028
      %4030 = vrot.lane.b32.xlu0 %v3145, 1
      %v4031 = vpop.permute.xlu0 %4030
      %4032 = vrot.lane.b32.xlu0 %v3151, 1
      %v4033 = vpop.permute.xlu0 %4032
      %4034 = vrot.lane.b32.xlu0 %v3157, 1
      %v4035 = vpop.permute.xlu0 %4034
      %4036 = vrot.lane.b32.xlu0 %v3163, 1
      %v4037 = vpop.permute.xlu0 %4036
      %4038 = vrot.lane.b32.xlu0 %v3169, 1
      %v4039 = vpop.permute.xlu0 %4038
      %4040 = vrot.lane.b32.xlu0 %v3175, 1
      %v4041 = vpop.permute.xlu0 %4040
      %4042 = vrot.lane.b32.xlu0 %v3181, 1
      %v4043 = vpop.permute.xlu0 %4042
      %4044 = vrot.lane.b32.xlu0 %v3187, 1
      %v4045 = vpop.permute.xlu0 %4044
      %4046 = vrot.lane.b32.xlu0 %v3193, 1
      %v4047 = vpop.permute.xlu0 %4046
      %4048 = vrot.lane.b32.xlu0 %v3199, 1
      %v4049 = vpop.permute.xlu0 %4048
      %4066 = vrot.lane.b32.xlu0 %v3107, 1
      %v4067 = vpop.permute.xlu0 %4066
      %4068 = vrot.lane.b32.xlu0 %v3113, 1
      %v4069 = vpop.permute.xlu0 %4068
      %4070 = vrot.lane.b32.xlu0 %v3119, 1
      %v4071 = vpop.permute.xlu0 %4070
      %4072 = vrot.lane.b32.xlu0 %v3125, 1
      %v4073 = vpop.permute.xlu0 %4072
      %4074 = vrot.lane.b32.xlu0 %v3131, 1
      %v4075 = vpop.permute.xlu0 %4074
      %4076 = vrot.lane.b32.xlu0 %v3137, 1
      %v4077 = vpop.permute.xlu0 %4076
      %4078 = vrot.lane.b32.xlu0 %v3143, 1
      %v4079 = vpop.permute.xlu0 %4078
      %4080 = vrot.lane.b32.xlu0 %v3149, 1
      %v4081 = vpop.permute.xlu0 %4080
      %4082 = vrot.lane.b32.xlu0 %v3155, 1
      %v4083 = vpop.permute.xlu0 %4082
      %4084 = vrot.lane.b32.xlu0 %v3161, 1
      %v4085 = vpop.permute.xlu0 %4084
      %4086 = vrot.lane.b32.xlu0 %v3167, 1
      %v4087 = vpop.permute.xlu0 %4086
      %4088 = vrot.lane.b32.xlu0 %v3173, 1
      %v4089 = vpop.permute.xlu0 %4088
      %4090 = vrot.lane.b32.xlu0 %v3179, 1
      %v4091 = vpop.permute.xlu0 %4090
      %4092 = vrot.lane.b32.xlu0 %v3185, 1
      %v4093 = vpop.permute.xlu0 %4092
      %4094 = vrot.lane.b32.xlu0 %v3191, 1
      %v4095 = vpop.permute.xlu0 %4094
      %4096 = vrot.lane.b32.xlu0 %v3197, 1
      %v4097 = vpop.permute.xlu0 %4096
      %v4098 = vsel %vm1986, %v4067, %v4019
      %v4099 = vsel %vm1986, %v4069, %v4021
      %v4100 = vsel %vm1986, %v4071, %v4023
      %v4101 = vsel %vm1986, %v4073, %v4025
      %v4102 = vsel %vm1986, %v4075, %v4027
      %v4103 = vsel %vm1986, %v4077, %v4029
      %v4104 = vsel %vm1986, %v4079, %v4031
      %v4105 = vsel %vm1986, %v4081, %v4033
      %v4106 = vsel %vm1986, %v4083, %v4035
      %v4107 = vsel %vm1986, %v4085, %v4037
      %v4108 = vsel %vm1986, %v4087, %v4039
      %v4109 = vsel %vm1986, %v4089, %v4041
      %v4110 = vsel %vm1986, %v4091, %v4043
      %v4111 = vsel %vm1986, %v4093, %v4045
      %v4112 = vsel %vm1986, %v4095, %v4047
      %v4113 = vsel %vm1986, %v4097, %v4049
      %v4146 = vsel %vm1986, %v4019, %v4067
      %v4147 = vsel %vm1986, %v4021, %v4069
      %v4148 = vsel %vm1986, %v4023, %v4071
      %v4149 = vsel %vm1986, %v4025, %v4073
      %v4150 = vsel %vm1986, %v4027, %v4075
      %v4151 = vsel %vm1986, %v4029, %v4077
      %v4152 = vsel %vm1986, %v4031, %v4079
      %v4153 = vsel %vm1986, %v4033, %v4081
      %v4154 = vsel %vm1986, %v4035, %v4083
      %v4155 = vsel %vm1986, %v4037, %v4085
      %v4156 = vsel %vm1986, %v4039, %v4087
      %v4157 = vsel %vm1986, %v4041, %v4089
      %v4158 = vsel %vm1986, %v4043, %v4091
      %v4159 = vsel %vm1986, %v4045, %v4093
      %v4160 = vsel %vm1986, %v4047, %v4095
      %v4161 = vsel %vm1986, %v4049, %v4097
      %v4162 = vmul.f32 %v2054, %v4146
      %v4163 = vmul.f32 %v2058, %v4098
      %v4164 = vmul.f32 %v2054, %v4147
      %v4165 = vmul.f32 %v2058, %v4099
      %v4166 = vmul.f32 %v2054, %v4148
      %v4167 = vmul.f32 %v2058, %v4100
      %v4168 = vmul.f32 %v2054, %v4149
      %v4169 = vmul.f32 %v2058, %v4101
      %v4170 = vmul.f32 %v2054, %v4150
      %v4171 = vmul.f32 %v2058, %v4102
      %v4172 = vmul.f32 %v2054, %v4151
      %v4173 = vmul.f32 %v2058, %v4103
      %v4174 = vmul.f32 %v2054, %v4152
      %v4175 = vmul.f32 %v2058, %v4104
      %v4176 = vmul.f32 %v2054, %v4153
      %v4177 = vmul.f32 %v2058, %v4105
      %v4178 = vmul.f32 %v2054, %v4154
      %v4179 = vmul.f32 %v2058, %v4106
      %v4180 = vmul.f32 %v2054, %v4155
      %v4181 = vmul.f32 %v2058, %v4107
      %v4182 = vmul.f32 %v2054, %v4156
      %v4183 = vmul.f32 %v2058, %v4108
      %v4184 = vmul.f32 %v2054, %v4157
      %v4185 = vmul.f32 %v2058, %v4109
      %v4186 = vmul.f32 %v2054, %v4158
      %v4187 = vmul.f32 %v2058, %v4110
      %v4188 = vmul.f32 %v2054, %v4159
      %v4189 = vmul.f32 %v2058, %v4111
      %v4190 = vmul.f32 %v2054, %v4160
      %v4191 = vmul.f32 %v2058, %v4112
      %v4192 = vmul.f32 %v2054, %v4161
      %v4193 = vmul.f32 %v2058, %v4113
      %v4194 = vadd.f32 %v3986, %v4162
      %v4195 = vadd.f32 %v3987, %v4163
      %v4196 = vadd.f32 %v3988, %v4164
      %v4197 = vadd.f32 %v3989, %v4165
      %v4198 = vadd.f32 %v3990, %v4166
      %v4199 = vadd.f32 %v3991, %v4167
      %v4200 = vadd.f32 %v3992, %v4168
      %v4201 = vadd.f32 %v3993, %v4169
      %v4202 = vadd.f32 %v3994, %v4170
      %v4203 = vadd.f32 %v3995, %v4171
      %v4204 = vadd.f32 %v3996, %v4172
      %v4205 = vadd.f32 %v3997, %v4173
      %v4206 = vadd.f32 %v3998, %v4174
      %v4207 = vadd.f32 %v3999, %v4175
      %v4208 = vadd.f32 %v4000, %v4176
      %v4209 = vadd.f32 %v4001, %v4177
      %v4210 = vadd.f32 %v4002, %v4178
      %v4211 = vadd.f32 %v4003, %v4179
      %v4212 = vadd.f32 %v4004, %v4180
      %v4213 = vadd.f32 %v4005, %v4181
      %v4214 = vadd.f32 %v4006, %v4182
      %v4215 = vadd.f32 %v4007, %v4183
      %v4216 = vadd.f32 %v4008, %v4184
      %v4217 = vadd.f32 %v4009, %v4185
      %v4218 = vadd.f32 %v4010, %v4186
      %v4219 = vadd.f32 %v4011, %v4187
      %v4220 = vadd.f32 %v4012, %v4188
      %v4221 = vadd.f32 %v4013, %v4189
      %v4222 = vadd.f32 %v4014, %v4190
      %v4223 = vadd.f32 %v4015, %v4191
      %v4224 = vadd.f32 %v4016, %v4192
      %v4225 = vadd.f32 %v4017, %v4193
      %4226 = vrot.lane.b32.xlu0 %v3107, 127
      %v4227 = vpop.permute.xlu0 %4226
      %4228 = vrot.lane.b32.xlu0 %v3109, 127
      %v4229 = vpop.permute.xlu0 %4228
      %4230 = vrot.lane.b32.xlu0 %v3113, 127
      %v4231 = vpop.permute.xlu0 %4230
      %4232 = vrot.lane.b32.xlu0 %v3115, 127
      %v4233 = vpop.permute.xlu0 %4232
      %4234 = vrot.lane.b32.xlu0 %v3119, 127
      %v4235 = vpop.permute.xlu0 %4234
      %4236 = vrot.lane.b32.xlu0 %v3121, 127
      %v4237 = vpop.permute.xlu0 %4236
      %4238 = vrot.lane.b32.xlu0 %v3125, 127
      %v4239 = vpop.permute.xlu0 %4238
      %4240 = vrot.lane.b32.xlu0 %v3127, 127
      %v4241 = vpop.permute.xlu0 %4240
      %4242 = vrot.lane.b32.xlu0 %v3131, 127
      %v4243 = vpop.permute.xlu0 %4242
      %4244 = vrot.lane.b32.xlu0 %v3133, 127
      %v4245 = vpop.permute.xlu0 %4244
      %4246 = vrot.lane.b32.xlu0 %v3137, 127
      %v4247 = vpop.permute.xlu0 %4246
      %4248 = vrot.lane.b32.xlu0 %v3139, 127
      %v4249 = vpop.permute.xlu0 %4248
      %4250 = vrot.lane.b32.xlu0 %v3143, 127
      %v4251 = vpop.permute.xlu0 %4250
      %4252 = vrot.lane.b32.xlu0 %v3145, 127
      %v4253 = vpop.permute.xlu0 %4252
      %4254 = vrot.lane.b32.xlu0 %v3149, 127
      %v4255 = vpop.permute.xlu0 %4254
      %4256 = vrot.lane.b32.xlu0 %v3151, 127
      %v4257 = vpop.permute.xlu0 %4256
      %4258 = vrot.lane.b32.xlu0 %v3155, 127
      %v4259 = vpop.permute.xlu0 %4258
      %4260 = vrot.lane.b32.xlu0 %v3157, 127
      %v4261 = vpop.permute.xlu0 %4260
      %4262 = vrot.lane.b32.xlu0 %v3161, 127
      %v4263 = vpop.permute.xlu0 %4262
      %4264 = vrot.lane.b32.xlu0 %v3163, 127
      %v4265 = vpop.permute.xlu0 %4264
      %4266 = vrot.lane.b32.xlu0 %v3167, 127
      %v4267 = vpop.permute.xlu0 %4266
      %4268 = vrot.lane.b32.xlu0 %v3169, 127
      %v4269 = vpop.permute.xlu0 %4268
      %4270 = vrot.lane.b32.xlu0 %v3173, 127
      %v4271 = vpop.permute.xlu0 %4270
      %4272 = vrot.lane.b32.xlu0 %v3175, 127
      %v4273 = vpop.permute.xlu0 %4272
      %4274 = vrot.lane.b32.xlu0 %v3179, 127
      %v4275 = vpop.permute.xlu0 %4274
      %4276 = vrot.lane.b32.xlu0 %v3181, 127
      %v4277 = vpop.permute.xlu0 %4276
      %4278 = vrot.lane.b32.xlu0 %v3185, 127
      %v4279 = vpop.permute.xlu0 %4278
      %4280 = vrot.lane.b32.xlu0 %v3187, 127
      %v4281 = vpop.permute.xlu0 %4280
      %4282 = vrot.lane.b32.xlu0 %v3191, 127
      %v4283 = vpop.permute.xlu0 %4282
      %4284 = vrot.lane.b32.xlu0 %v3193, 127
      %v4285 = vpop.permute.xlu0 %4284
      %4286 = vrot.lane.b32.xlu0 %v3197, 127
      %v4287 = vpop.permute.xlu0 %4286
      %4288 = vrot.lane.b32.xlu0 %v3199, 127
      %v4289 = vpop.permute.xlu0 %4288
      %v4290 = vsel %vm2187, %v4227, %v4229
      %v4291 = vsel %vm2187, %v4231, %v4233
      %v4292 = vsel %vm2187, %v4235, %v4237
      %v4293 = vsel %vm2187, %v4239, %v4241
      %v4294 = vsel %vm2187, %v4243, %v4245
      %v4295 = vsel %vm2187, %v4247, %v4249
      %v4296 = vsel %vm2187, %v4251, %v4253
      %v4297 = vsel %vm2187, %v4255, %v4257
      %v4298 = vsel %vm2187, %v4259, %v4261
      %v4299 = vsel %vm2187, %v4263, %v4265
      %v4300 = vsel %vm2187, %v4267, %v4269
      %v4301 = vsel %vm2187, %v4271, %v4273
      %v4302 = vsel %vm2187, %v4275, %v4277
      %v4303 = vsel %vm2187, %v4279, %v4281
      %v4304 = vsel %vm2187, %v4283, %v4285
      %v4305 = vsel %vm2187, %v4287, %v4289
      %v4354 = vsel %vm2187, %v4229, %v4227
      %v4355 = vsel %vm2187, %v4233, %v4231
      %v4356 = vsel %vm2187, %v4237, %v4235
      %v4357 = vsel %vm2187, %v4241, %v4239
      %v4358 = vsel %vm2187, %v4245, %v4243
      %v4359 = vsel %vm2187, %v4249, %v4247
      %v4360 = vsel %vm2187, %v4253, %v4251
      %v4361 = vsel %vm2187, %v4257, %v4255
      %v4362 = vsel %vm2187, %v4261, %v4259
      %v4363 = vsel %vm2187, %v4265, %v4263
      %v4364 = vsel %vm2187, %v4269, %v4267
      %v4365 = vsel %vm2187, %v4273, %v4271
      %v4366 = vsel %vm2187, %v4277, %v4275
      %v4367 = vsel %vm2187, %v4281, %v4279
      %v4368 = vsel %vm2187, %v4285, %v4283
      %v4369 = vsel %vm2187, %v4289, %v4287
      %v4370 = vmul.f32 %v2271, %v4290
      %v4371 = vmul.f32 %v2275, %v4354
      %v4372 = vmul.f32 %v2271, %v4291
      %v4373 = vmul.f32 %v2275, %v4355
      %v4374 = vmul.f32 %v2271, %v4292
      %v4375 = vmul.f32 %v2275, %v4356
      %v4376 = vmul.f32 %v2271, %v4293
      %v4377 = vmul.f32 %v2275, %v4357
      %v4378 = vmul.f32 %v2271, %v4294
      %v4379 = vmul.f32 %v2275, %v4358
      %v4380 = vmul.f32 %v2271, %v4295
      %v4381 = vmul.f32 %v2275, %v4359
      %v4382 = vmul.f32 %v2271, %v4296
      %v4383 = vmul.f32 %v2275, %v4360
      %v4384 = vmul.f32 %v2271, %v4297
      %v4385 = vmul.f32 %v2275, %v4361
      %v4386 = vmul.f32 %v2271, %v4298
      %v4387 = vmul.f32 %v2275, %v4362
      %v4388 = vmul.f32 %v2271, %v4299
      %v4389 = vmul.f32 %v2275, %v4363
      %v4390 = vmul.f32 %v2271, %v4300
      %v4391 = vmul.f32 %v2275, %v4364
      %v4392 = vmul.f32 %v2271, %v4301
      %v4393 = vmul.f32 %v2275, %v4365
      %v4394 = vmul.f32 %v2271, %v4302
      %v4395 = vmul.f32 %v2275, %v4366
      %v4396 = vmul.f32 %v2271, %v4303
      %v4397 = vmul.f32 %v2275, %v4367
      %v4398 = vmul.f32 %v2271, %v4304
      %v4399 = vmul.f32 %v2275, %v4368
      %v4400 = vmul.f32 %v2271, %v4305
      %v4401 = vmul.f32 %v2275, %v4369
      %v4402 = vadd.f32 %v4194, %v4370
      %v4403 = vadd.f32 %v4195, %v4371
      %v4404 = vadd.f32 %v4196, %v4372
      %v4405 = vadd.f32 %v4197, %v4373
      %v4406 = vadd.f32 %v4198, %v4374
      %v4407 = vadd.f32 %v4199, %v4375
      %v4408 = vadd.f32 %v4200, %v4376
      %v4409 = vadd.f32 %v4201, %v4377
      %v4410 = vadd.f32 %v4202, %v4378
      %v4411 = vadd.f32 %v4203, %v4379
      %v4412 = vadd.f32 %v4204, %v4380
      %v4413 = vadd.f32 %v4205, %v4381
      %v4414 = vadd.f32 %v4206, %v4382
      %v4415 = vadd.f32 %v4207, %v4383
      %v4416 = vadd.f32 %v4208, %v4384
      %v4417 = vadd.f32 %v4209, %v4385
      %v4418 = vadd.f32 %v4210, %v4386
      %v4419 = vadd.f32 %v4211, %v4387
      %v4420 = vadd.f32 %v4212, %v4388
      %v4421 = vadd.f32 %v4213, %v4389
      %v4422 = vadd.f32 %v4214, %v4390
      %v4423 = vadd.f32 %v4215, %v4391
      %v4424 = vadd.f32 %v4216, %v4392
      %v4425 = vadd.f32 %v4217, %v4393
      %v4426 = vadd.f32 %v4218, %v4394
      %v4427 = vadd.f32 %v4219, %v4395
      %v4428 = vadd.f32 %v4220, %v4396
      %v4429 = vadd.f32 %v4221, %v4397
      %v4430 = vadd.f32 %v4222, %v4398
      %v4431 = vadd.f32 %v4223, %v4399
      %v4432 = vadd.f32 %v4224, %v4400
      %v4433 = vadd.f32 %v4225, %v4401
      %4434 = vrot.lane.b32.xlu0 %v3107, 113
      %v4435 = vpop.permute.xlu0 %4434
      %4436 = vrot.lane.b32.xlu0 %v3109, 113
      %v4437 = vpop.permute.xlu0 %4436
      %4438 = vrot.lane.b32.xlu0 %v3113, 113
      %v4439 = vpop.permute.xlu0 %4438
      %4440 = vrot.lane.b32.xlu0 %v3115, 113
      %v4441 = vpop.permute.xlu0 %4440
      %4442 = vrot.lane.b32.xlu0 %v3119, 113
      %v4443 = vpop.permute.xlu0 %4442
      %4444 = vrot.lane.b32.xlu0 %v3121, 113
      %v4445 = vpop.permute.xlu0 %4444
      %4446 = vrot.lane.b32.xlu0 %v3125, 113
      %v4447 = vpop.permute.xlu0 %4446
      %4448 = vrot.lane.b32.xlu0 %v3127, 113
      %v4449 = vpop.permute.xlu0 %4448
      %4450 = vrot.lane.b32.xlu0 %v3131, 113
      %v4451 = vpop.permute.xlu0 %4450
      %4452 = vrot.lane.b32.xlu0 %v3133, 113
      %v4453 = vpop.permute.xlu0 %4452
      %4454 = vrot.lane.b32.xlu0 %v3137, 113
      %v4455 = vpop.permute.xlu0 %4454
      %4456 = vrot.lane.b32.xlu0 %v3139, 113
      %v4457 = vpop.permute.xlu0 %4456
      %4458 = vrot.lane.b32.xlu0 %v3143, 113
      %v4459 = vpop.permute.xlu0 %4458
      %4460 = vrot.lane.b32.xlu0 %v3145, 113
      %v4461 = vpop.permute.xlu0 %4460
      %4462 = vrot.lane.b32.xlu0 %v3149, 113
      %v4463 = vpop.permute.xlu0 %4462
      %4464 = vrot.lane.b32.xlu0 %v3151, 113
      %v4465 = vpop.permute.xlu0 %4464
      %4466 = vrot.lane.b32.xlu0 %v3155, 113
      %v4467 = vpop.permute.xlu0 %4466
      %4468 = vrot.lane.b32.xlu0 %v3157, 113
      %v4469 = vpop.permute.xlu0 %4468
      %4470 = vrot.lane.b32.xlu0 %v3161, 113
      %v4471 = vpop.permute.xlu0 %4470
      %4472 = vrot.lane.b32.xlu0 %v3163, 113
      %v4473 = vpop.permute.xlu0 %4472
      %4474 = vrot.lane.b32.xlu0 %v3167, 113
      %v4475 = vpop.permute.xlu0 %4474
      %4476 = vrot.lane.b32.xlu0 %v3169, 113
      %v4477 = vpop.permute.xlu0 %4476
      %4478 = vrot.lane.b32.xlu0 %v3173, 113
      %v4479 = vpop.permute.xlu0 %4478
      %4480 = vrot.lane.b32.xlu0 %v3175, 113
      %v4481 = vpop.permute.xlu0 %4480
      %4482 = vrot.lane.b32.xlu0 %v3179, 113
      %v4483 = vpop.permute.xlu0 %4482
      %4484 = vrot.lane.b32.xlu0 %v3181, 113
      %v4485 = vpop.permute.xlu0 %4484
      %4486 = vrot.lane.b32.xlu0 %v3185, 113
      %v4487 = vpop.permute.xlu0 %4486
      %4488 = vrot.lane.b32.xlu0 %v3187, 113
      %v4489 = vpop.permute.xlu0 %4488
      %4490 = vrot.lane.b32.xlu0 %v3191, 113
      %v4491 = vpop.permute.xlu0 %4490
      %4492 = vrot.lane.b32.xlu0 %v3193, 113
      %v4493 = vpop.permute.xlu0 %4492
      %4494 = vrot.lane.b32.xlu0 %v3197, 113
      %v4495 = vpop.permute.xlu0 %4494
      %4496 = vrot.lane.b32.xlu0 %v3199, 113
      %v4497 = vpop.permute.xlu0 %4496
      %v4498 = vsel %vm2404, %v4435, %v4437
      %v4499 = vsel %vm2404, %v4439, %v4441
      %v4500 = vsel %vm2404, %v4443, %v4445
      %v4501 = vsel %vm2404, %v4447, %v4449
      %v4502 = vsel %vm2404, %v4451, %v4453
      %v4503 = vsel %vm2404, %v4455, %v4457
      %v4504 = vsel %vm2404, %v4459, %v4461
      %v4505 = vsel %vm2404, %v4463, %v4465
      %v4506 = vsel %vm2404, %v4467, %v4469
      %v4507 = vsel %vm2404, %v4471, %v4473
      %v4508 = vsel %vm2404, %v4475, %v4477
      %v4509 = vsel %vm2404, %v4479, %v4481
      %v4510 = vsel %vm2404, %v4483, %v4485
      %v4511 = vsel %vm2404, %v4487, %v4489
      %v4512 = vsel %vm2404, %v4491, %v4493
      %v4513 = vsel %vm2404, %v4495, %v4497
      %v4562 = vsel %vm2404, %v4437, %v4435
      %v4563 = vsel %vm2404, %v4441, %v4439
      %v4564 = vsel %vm2404, %v4445, %v4443
      %v4565 = vsel %vm2404, %v4449, %v4447
      %v4566 = vsel %vm2404, %v4453, %v4451
      %v4567 = vsel %vm2404, %v4457, %v4455
      %v4568 = vsel %vm2404, %v4461, %v4459
      %v4569 = vsel %vm2404, %v4465, %v4463
      %v4570 = vsel %vm2404, %v4469, %v4467
      %v4571 = vsel %vm2404, %v4473, %v4471
      %v4572 = vsel %vm2404, %v4477, %v4475
      %v4573 = vsel %vm2404, %v4481, %v4479
      %v4574 = vsel %vm2404, %v4485, %v4483
      %v4575 = vsel %vm2404, %v4489, %v4487
      %v4576 = vsel %vm2404, %v4493, %v4491
      %v4577 = vsel %vm2404, %v4497, %v4495
      %v4578 = vmul.f32 %v2488, %v4498
      %v4579 = vmul.f32 %v2492, %v4562
      %v4580 = vmul.f32 %v2488, %v4499
      %v4581 = vmul.f32 %v2492, %v4563
      %v4582 = vmul.f32 %v2488, %v4500
      %v4583 = vmul.f32 %v2492, %v4564
      %v4584 = vmul.f32 %v2488, %v4501
      %v4585 = vmul.f32 %v2492, %v4565
      %v4586 = vmul.f32 %v2488, %v4502
      %v4587 = vmul.f32 %v2492, %v4566
      %v4588 = vmul.f32 %v2488, %v4503
      %v4589 = vmul.f32 %v2492, %v4567
      %v4590 = vmul.f32 %v2488, %v4504
      %v4591 = vmul.f32 %v2492, %v4568
      %v4592 = vmul.f32 %v2488, %v4505
      %v4593 = vmul.f32 %v2492, %v4569
      %v4594 = vmul.f32 %v2488, %v4506
      %v4595 = vmul.f32 %v2492, %v4570
      %v4596 = vmul.f32 %v2488, %v4507
      %v4597 = vmul.f32 %v2492, %v4571
      %v4598 = vmul.f32 %v2488, %v4508
      %v4599 = vmul.f32 %v2492, %v4572
      %v4600 = vmul.f32 %v2488, %v4509
      %v4601 = vmul.f32 %v2492, %v4573
      %v4602 = vmul.f32 %v2488, %v4510
      %v4603 = vmul.f32 %v2492, %v4574
      %v4604 = vmul.f32 %v2488, %v4511
      %v4605 = vmul.f32 %v2492, %v4575
      %v4606 = vmul.f32 %v2488, %v4512
      %v4607 = vmul.f32 %v2492, %v4576
      %v4608 = vmul.f32 %v2488, %v4513
      %v4609 = vmul.f32 %v2492, %v4577
      %v4610 = vadd.f32 %v4402, %v4578
      %v4611 = vadd.f32 %v4403, %v4579
      %v4612 = vadd.f32 %v4404, %v4580
      %v4613 = vadd.f32 %v4405, %v4581
      %v4614 = vadd.f32 %v4406, %v4582
      %v4615 = vadd.f32 %v4407, %v4583
      %v4616 = vadd.f32 %v4408, %v4584
      %v4617 = vadd.f32 %v4409, %v4585
      %v4618 = vadd.f32 %v4410, %v4586
      %v4619 = vadd.f32 %v4411, %v4587
      %v4620 = vadd.f32 %v4412, %v4588
      %v4621 = vadd.f32 %v4413, %v4589
      %v4622 = vadd.f32 %v4414, %v4590
      %v4623 = vadd.f32 %v4415, %v4591
      %v4624 = vadd.f32 %v4416, %v4592
      %v4625 = vadd.f32 %v4417, %v4593
      %v4626 = vadd.f32 %v4418, %v4594
      %v4627 = vadd.f32 %v4419, %v4595
      %v4628 = vadd.f32 %v4420, %v4596
      %v4629 = vadd.f32 %v4421, %v4597
      %v4630 = vadd.f32 %v4422, %v4598
      %v4631 = vadd.f32 %v4423, %v4599
      %v4632 = vadd.f32 %v4424, %v4600
      %v4633 = vadd.f32 %v4425, %v4601
      %v4634 = vadd.f32 %v4426, %v4602
      %v4635 = vadd.f32 %v4427, %v4603
      %v4636 = vadd.f32 %v4428, %v4604
      %v4637 = vadd.f32 %v4429, %v4605
      %v4638 = vadd.f32 %v4430, %v4606
      %v4639 = vadd.f32 %v4431, %v4607
      %v4640 = vadd.f32 %v4432, %v4608
      %v4641 = vadd.f32 %v4433, %v4609
      %4642 = vrot.lane.b32.xlu0 %v3107, 112
      %v4643 = vpop.permute.xlu0 %4642
      %4644 = vrot.lane.b32.xlu0 %v3109, 112
      %v4645 = vpop.permute.xlu0 %4644
      %4646 = vrot.lane.b32.xlu0 %v3113, 112
      %v4647 = vpop.permute.xlu0 %4646
      %4648 = vrot.lane.b32.xlu0 %v3115, 112
      %v4649 = vpop.permute.xlu0 %4648
      %4650 = vrot.lane.b32.xlu0 %v3119, 112
      %v4651 = vpop.permute.xlu0 %4650
      %4652 = vrot.lane.b32.xlu0 %v3121, 112
      %v4653 = vpop.permute.xlu0 %4652
      %4654 = vrot.lane.b32.xlu0 %v3125, 112
      %v4655 = vpop.permute.xlu0 %4654
      %4656 = vrot.lane.b32.xlu0 %v3127, 112
      %v4657 = vpop.permute.xlu0 %4656
      %4658 = vrot.lane.b32.xlu0 %v3131, 112
      %v4659 = vpop.permute.xlu0 %4658
      %4660 = vrot.lane.b32.xlu0 %v3133, 112
      %v4661 = vpop.permute.xlu0 %4660
      %4662 = vrot.lane.b32.xlu0 %v3137, 112
      %v4663 = vpop.permute.xlu0 %4662
      %4664 = vrot.lane.b32.xlu0 %v3139, 112
      %v4665 = vpop.permute.xlu0 %4664
      %4666 = vrot.lane.b32.xlu0 %v3143, 112
      %v4667 = vpop.permute.xlu0 %4666
      %4668 = vrot.lane.b32.xlu0 %v3145, 112
      %v4669 = vpop.permute.xlu0 %4668
      %4670 = vrot.lane.b32.xlu0 %v3149, 112
      %v4671 = vpop.permute.xlu0 %4670
      %4672 = vrot.lane.b32.xlu0 %v3151, 112
      %v4673 = vpop.permute.xlu0 %4672
      %4674 = vrot.lane.b32.xlu0 %v3155, 112
      %v4675 = vpop.permute.xlu0 %4674
      %4676 = vrot.lane.b32.xlu0 %v3157, 112
      %v4677 = vpop.permute.xlu0 %4676
      %4678 = vrot.lane.b32.xlu0 %v3161, 112
      %v4679 = vpop.permute.xlu0 %4678
      %4680 = vrot.lane.b32.xlu0 %v3163, 112
      %v4681 = vpop.permute.xlu0 %4680
      %4682 = vrot.lane.b32.xlu0 %v3167, 112
      %v4683 = vpop.permute.xlu0 %4682
      %4684 = vrot.lane.b32.xlu0 %v3169, 112
      %v4685 = vpop.permute.xlu0 %4684
      %4686 = vrot.lane.b32.xlu0 %v3173, 112
      %v4687 = vpop.permute.xlu0 %4686
      %4688 = vrot.lane.b32.xlu0 %v3175, 112
      %v4689 = vpop.permute.xlu0 %4688
      %4690 = vrot.lane.b32.xlu0 %v3179, 112
      %v4691 = vpop.permute.xlu0 %4690
      %4692 = vrot.lane.b32.xlu0 %v3181, 112
      %v4693 = vpop.permute.xlu0 %4692
      %4694 = vrot.lane.b32.xlu0 %v3185, 112
      %v4695 = vpop.permute.xlu0 %4694
      %4696 = vrot.lane.b32.xlu0 %v3187, 112
      %v4697 = vpop.permute.xlu0 %4696
      %4698 = vrot.lane.b32.xlu0 %v3191, 112
      %v4699 = vpop.permute.xlu0 %4698
      %4700 = vrot.lane.b32.xlu0 %v3193, 112
      %v4701 = vpop.permute.xlu0 %4700
      %4702 = vrot.lane.b32.xlu0 %v3197, 112
      %v4703 = vpop.permute.xlu0 %4702
      %4704 = vrot.lane.b32.xlu0 %v3199, 112
      %v4705 = vpop.permute.xlu0 %4704
      %v4706 = vsel %vm2621, %v4643, %v4645
      %v4707 = vsel %vm2621, %v4647, %v4649
      %v4708 = vsel %vm2621, %v4651, %v4653
      %v4709 = vsel %vm2621, %v4655, %v4657
      %v4710 = vsel %vm2621, %v4659, %v4661
      %v4711 = vsel %vm2621, %v4663, %v4665
      %v4712 = vsel %vm2621, %v4667, %v4669
      %v4713 = vsel %vm2621, %v4671, %v4673
      %v4714 = vsel %vm2621, %v4675, %v4677
      %v4715 = vsel %vm2621, %v4679, %v4681
      %v4716 = vsel %vm2621, %v4683, %v4685
      %v4717 = vsel %vm2621, %v4687, %v4689
      %v4718 = vsel %vm2621, %v4691, %v4693
      %v4719 = vsel %vm2621, %v4695, %v4697
      %v4720 = vsel %vm2621, %v4699, %v4701
      %v4721 = vsel %vm2621, %v4703, %v4705
      %v4770 = vsel %vm2621, %v4645, %v4643
      %v4771 = vsel %vm2621, %v4649, %v4647
      %v4772 = vsel %vm2621, %v4653, %v4651
      %v4773 = vsel %vm2621, %v4657, %v4655
      %v4774 = vsel %vm2621, %v4661, %v4659
      %v4775 = vsel %vm2621, %v4665, %v4663
      %v4776 = vsel %vm2621, %v4669, %v4667
      %v4777 = vsel %vm2621, %v4673, %v4671
      %v4778 = vsel %vm2621, %v4677, %v4675
      %v4779 = vsel %vm2621, %v4681, %v4679
      %v4780 = vsel %vm2621, %v4685, %v4683
      %v4781 = vsel %vm2621, %v4689, %v4687
      %v4782 = vsel %vm2621, %v4693, %v4691
      %v4783 = vsel %vm2621, %v4697, %v4695
      %v4784 = vsel %vm2621, %v4701, %v4699
      %v4785 = vsel %vm2621, %v4705, %v4703
      %v4786 = vmul.f32 %v2705, %v4706
      %v4787 = vmul.f32 %v2709, %v4770
      %v4788 = vmul.f32 %v2705, %v4707
      %v4789 = vmul.f32 %v2709, %v4771
      %v4790 = vmul.f32 %v2705, %v4708
      %v4791 = vmul.f32 %v2709, %v4772
      %v4792 = vmul.f32 %v2705, %v4709
      %v4793 = vmul.f32 %v2709, %v4773
      %v4794 = vmul.f32 %v2705, %v4710
      %v4795 = vmul.f32 %v2709, %v4774
      %v4796 = vmul.f32 %v2705, %v4711
      %v4797 = vmul.f32 %v2709, %v4775
      %v4798 = vmul.f32 %v2705, %v4712
      %v4799 = vmul.f32 %v2709, %v4776
      %v4800 = vmul.f32 %v2705, %v4713
      %v4801 = vmul.f32 %v2709, %v4777
      %v4802 = vmul.f32 %v2705, %v4714
      %v4803 = vmul.f32 %v2709, %v4778
      %v4804 = vmul.f32 %v2705, %v4715
      %v4805 = vmul.f32 %v2709, %v4779
      %v4806 = vmul.f32 %v2705, %v4716
      %v4807 = vmul.f32 %v2709, %v4780
      %v4808 = vmul.f32 %v2705, %v4717
      %v4809 = vmul.f32 %v2709, %v4781
      %v4810 = vmul.f32 %v2705, %v4718
      %v4811 = vmul.f32 %v2709, %v4782
      %v4812 = vmul.f32 %v2705, %v4719
      %v4813 = vmul.f32 %v2709, %v4783
      %v4814 = vmul.f32 %v2705, %v4720
      %v4815 = vmul.f32 %v2709, %v4784
      %v4816 = vmul.f32 %v2705, %v4721
      %v4817 = vmul.f32 %v2709, %v4785
      %v4818 = vadd.f32 %v4610, %v4786
      %v4819 = vadd.f32 %v4611, %v4787
      %v4820 = vadd.f32 %v4612, %v4788
      %v4821 = vadd.f32 %v4613, %v4789
      %v4822 = vadd.f32 %v4614, %v4790
      %v4823 = vadd.f32 %v4615, %v4791
      %v4824 = vadd.f32 %v4616, %v4792
      %v4825 = vadd.f32 %v4617, %v4793
      %v4826 = vadd.f32 %v4618, %v4794
      %v4827 = vadd.f32 %v4619, %v4795
      %v4828 = vadd.f32 %v4620, %v4796
      %v4829 = vadd.f32 %v4621, %v4797
      %v4830 = vadd.f32 %v4622, %v4798
      %v4831 = vadd.f32 %v4623, %v4799
      %v4832 = vadd.f32 %v4624, %v4800
      %v4833 = vadd.f32 %v4625, %v4801
      %v4834 = vadd.f32 %v4626, %v4802
      %v4835 = vadd.f32 %v4627, %v4803
      %v4836 = vadd.f32 %v4628, %v4804
      %v4837 = vadd.f32 %v4629, %v4805
      %v4838 = vadd.f32 %v4630, %v4806
      %v4839 = vadd.f32 %v4631, %v4807
      %v4840 = vadd.f32 %v4632, %v4808
      %v4841 = vadd.f32 %v4633, %v4809
      %v4842 = vadd.f32 %v4634, %v4810
      %v4843 = vadd.f32 %v4635, %v4811
      %v4844 = vadd.f32 %v4636, %v4812
      %v4845 = vadd.f32 %v4637, %v4813
      %v4846 = vadd.f32 %v4638, %v4814
      %v4847 = vadd.f32 %v4639, %v4815
      %v4848 = vadd.f32 %v4640, %v4816
      %v4849 = vadd.f32 %v4641, %v4817
      %4850 = vrot.lane.b32.xlu0 %v3107, 111
      %v4851 = vpop.permute.xlu0 %4850
      %4852 = vrot.lane.b32.xlu0 %v3109, 111
      %v4853 = vpop.permute.xlu0 %4852
      %4854 = vrot.lane.b32.xlu0 %v3113, 111
      %v4855 = vpop.permute.xlu0 %4854
      %4856 = vrot.lane.b32.xlu0 %v3115, 111
      %v4857 = vpop.permute.xlu0 %4856
      %4858 = vrot.lane.b32.xlu0 %v3119, 111
      %v4859 = vpop.permute.xlu0 %4858
      %4860 = vrot.lane.b32.xlu0 %v3121, 111
      %v4861 = vpop.permute.xlu0 %4860
      %4862 = vrot.lane.b32.xlu0 %v3125, 111
      %v4863 = vpop.permute.xlu0 %4862
      %4864 = vrot.lane.b32.xlu0 %v3127, 111
      %v4865 = vpop.permute.xlu0 %4864
      %4866 = vrot.lane.b32.xlu0 %v3131, 111
      %v4867 = vpop.permute.xlu0 %4866
      %4868 = vrot.lane.b32.xlu0 %v3133, 111
      %v4869 = vpop.permute.xlu0 %4868
      %4870 = vrot.lane.b32.xlu0 %v3137, 111
      %v4871 = vpop.permute.xlu0 %4870
      %4872 = vrot.lane.b32.xlu0 %v3139, 111
      %v4873 = vpop.permute.xlu0 %4872
      %4874 = vrot.lane.b32.xlu0 %v3143, 111
      %v4875 = vpop.permute.xlu0 %4874
      %4876 = vrot.lane.b32.xlu0 %v3145, 111
      %v4877 = vpop.permute.xlu0 %4876
      %4878 = vrot.lane.b32.xlu0 %v3149, 111
      %v4879 = vpop.permute.xlu0 %4878
      %4880 = vrot.lane.b32.xlu0 %v3151, 111
      %v4881 = vpop.permute.xlu0 %4880
      %4882 = vrot.lane.b32.xlu0 %v3155, 111
      %v4883 = vpop.permute.xlu0 %4882
      %4884 = vrot.lane.b32.xlu0 %v3157, 111
      %v4885 = vpop.permute.xlu0 %4884
      %4886 = vrot.lane.b32.xlu0 %v3161, 111
      %v4887 = vpop.permute.xlu0 %4886
      %4888 = vrot.lane.b32.xlu0 %v3163, 111
      %v4889 = vpop.permute.xlu0 %4888
      %4890 = vrot.lane.b32.xlu0 %v3167, 111
      %v4891 = vpop.permute.xlu0 %4890
      %4892 = vrot.lane.b32.xlu0 %v3169, 111
      %v4893 = vpop.permute.xlu0 %4892
      %4894 = vrot.lane.b32.xlu0 %v3173, 111
      %v4895 = vpop.permute.xlu0 %4894
      %4896 = vrot.lane.b32.xlu0 %v3175, 111
      %v4897 = vpop.permute.xlu0 %4896
      %4898 = vrot.lane.b32.xlu0 %v3179, 111
      %v4899 = vpop.permute.xlu0 %4898
      %4900 = vrot.lane.b32.xlu0 %v3181, 111
      %v4901 = vpop.permute.xlu0 %4900
      %4902 = vrot.lane.b32.xlu0 %v3185, 111
      %v4903 = vpop.permute.xlu0 %4902
      %4904 = vrot.lane.b32.xlu0 %v3187, 111
      %v4905 = vpop.permute.xlu0 %4904
      %4906 = vrot.lane.b32.xlu0 %v3191, 111
      %v4907 = vpop.permute.xlu0 %4906
      %4908 = vrot.lane.b32.xlu0 %v3193, 111
      %v4909 = vpop.permute.xlu0 %4908
      %4910 = vrot.lane.b32.xlu0 %v3197, 111
      %v4911 = vpop.permute.xlu0 %4910
      %4912 = vrot.lane.b32.xlu0 %v3199, 111
      %v4913 = vpop.permute.xlu0 %4912
      %v4914 = vsel %vm2838, %v4851, %v4853
      %v4915 = vsel %vm2838, %v4855, %v4857
      %v4916 = vsel %vm2838, %v4859, %v4861
      %v4917 = vsel %vm2838, %v4863, %v4865
      %v4918 = vsel %vm2838, %v4867, %v4869
      %v4919 = vsel %vm2838, %v4871, %v4873
      %v4920 = vsel %vm2838, %v4875, %v4877
      %v4921 = vsel %vm2838, %v4879, %v4881
      %v4922 = vsel %vm2838, %v4883, %v4885
      %v4923 = vsel %vm2838, %v4887, %v4889
      %v4924 = vsel %vm2838, %v4891, %v4893
      %v4925 = vsel %vm2838, %v4895, %v4897
      %v4926 = vsel %vm2838, %v4899, %v4901
      %v4927 = vsel %vm2838, %v4903, %v4905
      %v4928 = vsel %vm2838, %v4907, %v4909
      %v4929 = vsel %vm2838, %v4911, %v4913
      %v4978 = vsel %vm2838, %v4853, %v4851
      %v4979 = vsel %vm2838, %v4857, %v4855
      %v4980 = vsel %vm2838, %v4861, %v4859
      %v4981 = vsel %vm2838, %v4865, %v4863
      %v4982 = vsel %vm2838, %v4869, %v4867
      %v4983 = vsel %vm2838, %v4873, %v4871
      %v4984 = vsel %vm2838, %v4877, %v4875
      %v4985 = vsel %vm2838, %v4881, %v4879
      %v4986 = vsel %vm2838, %v4885, %v4883
      %v4987 = vsel %vm2838, %v4889, %v4887
      %v4988 = vsel %vm2838, %v4893, %v4891
      %v4989 = vsel %vm2838, %v4897, %v4895
      %v4990 = vsel %vm2838, %v4901, %v4899
      %v4991 = vsel %vm2838, %v4905, %v4903
      %v4992 = vsel %vm2838, %v4909, %v4907
      %v4993 = vsel %vm2838, %v4913, %v4911
      %v4994 = vmul.f32 %v2922, %v4914
      %v4995 = vmul.f32 %v2926, %v4978
      %v4996 = vmul.f32 %v2922, %v4915
      %v4997 = vmul.f32 %v2926, %v4979
      %v4998 = vmul.f32 %v2922, %v4916
      %v4999 = vmul.f32 %v2926, %v4980
      %v5000 = vmul.f32 %v2922, %v4917
      %v5001 = vmul.f32 %v2926, %v4981
      %v5002 = vmul.f32 %v2922, %v4918
      %v5003 = vmul.f32 %v2926, %v4982
      %v5004 = vmul.f32 %v2922, %v4919
      %v5005 = vmul.f32 %v2926, %v4983
      %v5006 = vmul.f32 %v2922, %v4920
      %v5007 = vmul.f32 %v2926, %v4984
      %v5008 = vmul.f32 %v2922, %v4921
      %v5009 = vmul.f32 %v2926, %v4985
      %v5010 = vmul.f32 %v2922, %v4922
      %v5011 = vmul.f32 %v2926, %v4986
      %v5012 = vmul.f32 %v2922, %v4923
      %v5013 = vmul.f32 %v2926, %v4987
      %v5014 = vmul.f32 %v2922, %v4924
      %v5015 = vmul.f32 %v2926, %v4988
      %v5016 = vmul.f32 %v2922, %v4925
      %v5017 = vmul.f32 %v2926, %v4989
      %v5018 = vmul.f32 %v2922, %v4926
      %v5019 = vmul.f32 %v2926, %v4990
      %v5020 = vmul.f32 %v2922, %v4927
      %v5021 = vmul.f32 %v2926, %v4991
      %v5022 = vmul.f32 %v2922, %v4928
      %v5023 = vmul.f32 %v2926, %v4992
      %v5024 = vmul.f32 %v2922, %v4929
      %v5025 = vmul.f32 %v2926, %v4993
      %v5026 = vadd.f32 %v4818, %v4994
      %v5027 = vadd.f32 %v4819, %v4995
      %v5028 = vadd.f32 %v4820, %v4996
      %v5029 = vadd.f32 %v4821, %v4997
      %v5030 = vadd.f32 %v4822, %v4998
      %v5031 = vadd.f32 %v4823, %v4999
      %v5032 = vadd.f32 %v4824, %v5000
      %v5033 = vadd.f32 %v4825, %v5001
      %v5034 = vadd.f32 %v4826, %v5002
      %v5035 = vadd.f32 %v4827, %v5003
      %v5036 = vadd.f32 %v4828, %v5004
      %v5037 = vadd.f32 %v4829, %v5005
      %v5038 = vadd.f32 %v4830, %v5006
      %v5039 = vadd.f32 %v4831, %v5007
      %v5040 = vadd.f32 %v4832, %v5008
      %v5041 = vadd.f32 %v4833, %v5009
      %v5042 = vadd.f32 %v4834, %v5010
      %v5043 = vadd.f32 %v4835, %v5011
      %v5044 = vadd.f32 %v4836, %v5012
      %v5045 = vadd.f32 %v4837, %v5013
      %v5046 = vadd.f32 %v4838, %v5014
      %v5047 = vadd.f32 %v4839, %v5015
      %v5048 = vadd.f32 %v4840, %v5016
      %v5049 = vadd.f32 %v4841, %v5017
      %v5050 = vadd.f32 %v4842, %v5018
      %v5051 = vadd.f32 %v4843, %v5019
      %v5052 = vadd.f32 %v4844, %v5020
      %v5053 = vadd.f32 %v4845, %v5021
      %v5054 = vadd.f32 %v4846, %v5022
      %v5055 = vadd.f32 %v4847, %v5023
      %v5056 = vadd.f32 %v4848, %v5024
      %v5057 = vadd.f32 %v4849, %v5025
      %v5058 = vmax.f32 %v5026, 0.0
      %v5059 = vmax.f32 %v5027, 0.0
      %v5060 = vmax.f32 %v5028, 0.0
      %v5061 = vmax.f32 %v5029, 0.0
      %v5062 = vmax.f32 %v5030, 0.0
      %v5063 = vmax.f32 %v5031, 0.0
      %v5064 = vmax.f32 %v5032, 0.0
      %v5065 = vmax.f32 %v5033, 0.0
      %v5066 = vmax.f32 %v5034, 0.0
      %v5067 = vmax.f32 %v5035, 0.0
      %v5068 = vmax.f32 %v5036, 0.0
      %v5069 = vmax.f32 %v5037, 0.0
      %v5070 = vmax.f32 %v5038, 0.0
      %v5071 = vmax.f32 %v5039, 0.0
      %v5072 = vmax.f32 %v5040, 0.0
      %v5073 = vmax.f32 %v5041, 0.0
      %v5074 = vmax.f32 %v5042, 0.0
      %v5075 = vmax.f32 %v5043, 0.0
      %v5076 = vmax.f32 %v5044, 0.0
      %v5077 = vmax.f32 %v5045, 0.0
      %v5078 = vmax.f32 %v5046, 0.0
      %v5079 = vmax.f32 %v5047, 0.0
      %v5080 = vmax.f32 %v5048, 0.0
      %v5081 = vmax.f32 %v5049, 0.0
      %v5082 = vmax.f32 %v5050, 0.0
      %v5083 = vmax.f32 %v5051, 0.0
      %v5084 = vmax.f32 %v5052, 0.0
      %v5085 = vmax.f32 %v5053, 0.0
      %v5086 = vmax.f32 %v5054, 0.0
      %v5087 = vmax.f32 %v5055, 0.0
      %v5088 = vmax.f32 %v5056, 0.0
      %v5089 = vmax.f32 %v5057, 0.0
      %v5090 = vld [vmem:[%s6] sm:$0x7]
      %v5091 = vld [vmem:[%s7] sm:$0x7]
      %5093 = vset.pattern.permute.xlu0 0
      %5094 = vperm.xlu0 %5093, %v5091
      %v5095 = vpop.permute.xlu0 %5094
      %5097 = vmatprep.subr.mxu0 %v5059
      %5098 = vmatpush1.msra.mxu0 %v5058
      %5099 = vmatprep.subr.mxu0 %v5061
      %5100 = vmatpush1.msra.mxu0 %v5060
      %5101 = vmatprep.subr.mxu0 %v5063
      %5102 = vmatpush1.msra.mxu0 %v5062
      %5103 = vmatprep.subr.mxu0 %v5065
      %5104 = vmatpush1.msra.mxu0 %v5064
      %5105 = vmatprep.subr.mxu0 %v5067
      %5106 = vmatpush1.msra.mxu0 %v5066
      %5107 = vmatprep.subr.mxu0 %v5069
      %5108 = vmatpush1.msra.mxu0 %v5068
      %5109 = vmatprep.subr.mxu0 %v5071
      %5110 = vmatpush1.msra.mxu0 %v5070
      %5111 = vmatprep.subr.mxu0 %v5073
      %5112 = vmatpush1.msra.mxu0 %v5072
      %5113 = vmatprep.subr.mxu0 %v5075
      %5114 = vmatpush1.msra.mxu0 %v5074
      %5115 = vmatprep.subr.mxu0 %v5077
      %5116 = vmatpush1.msra.mxu0 %v5076
      %5117 = vmatprep.subr.mxu0 %v5079
      %5118 = vmatpush1.msra.mxu0 %v5078
      %5119 = vmatprep.subr.mxu0 %v5081
      %5120 = vmatpush1.msra.mxu0 %v5080
      %5121 = vmatprep.subr.mxu0 %v5083
      %5122 = vmatpush1.msra.mxu0 %v5082
      %5123 = vmatprep.subr.mxu0 %v5085
      %5124 = vmatpush1.msra.mxu0 %v5084
      %5125 = vmatprep.subr.mxu0 %v5087
      %5126 = vmatpush1.msra.mxu0 %v5086
      %5127 = vmatprep.subr.mxu0 %v5089
      %5128 = vmatpush1.msra.mxu0 %v5088
      %5129 = vmatprep.subr.mxu0 0.0
      %5130 = vmatpush1.msra.mxu0 0.0
      %5131 = vmatprep.subr.mxu0 0.0
      %5132 = vmatpush1.msra.mxu0 0.0
      %5133 = vmatprep.subr.mxu0 0.0
      %5134 = vmatpush1.msra.mxu0 0.0
      %5135 = vmatprep.subr.mxu0 0.0
      %5136 = vmatpush1.msra.mxu0 0.0
      %5137 = vmatprep.subr.mxu0 0.0
      %5138 = vmatpush1.msra.mxu0 0.0
      %5139 = vmatprep.subr.mxu0 0.0
      %5140 = vmatpush1.msra.mxu0 0.0
      %5141 = vmatprep.subr.mxu0 0.0
      %5142 = vmatpush1.msra.mxu0 0.0
      %5143 = vmatprep.subr.mxu0 0.0
      %5144 = vmatpush1.msra.mxu0 0.0
      %5145 = vmatprep.subr.mxu0 0.0
      %5146 = vmatpush1.msra.mxu0 0.0
      %5147 = vmatprep.subr.mxu0 0.0
      %5148 = vmatpush1.msra.mxu0 0.0
      %5149 = vmatprep.subr.mxu0 0.0
      %5150 = vmatpush1.msra.mxu0 0.0
      %5151 = vmatprep.subr.mxu0 0.0
      %5152 = vmatpush1.msra.mxu0 0.0
      %5153 = vmatprep.subr.mxu0 0.0
      %5154 = vmatpush1.msra.mxu0 0.0
      %5155 = vmatprep.subr.mxu0 0.0
      %5156 = vmatpush1.msra.mxu0 0.0
      %5157 = vmatprep.subr.mxu0 0.0
      %5158 = vmatpush1.msra.mxu0 0.0
      %5159 = vmatprep.subr.mxu0 0.0
      %5160 = vmatpush1.msra.mxu0 0.0
      %5161 = vmatprep.mubr.f32.mxu0 0.0
      %5162 = vmatmul.mubr.f32.gmra.mrb[0].mxu0 %v5090
      %v5163 = vpop.f32.mrb[0].mxu0
      %v5164 = vadd.f32 %v5095, %v5163
      %v5165 = vpop.f32.mrb[0].mxu0
      %v5166 = vadd.f32 %v5095, %v5165
      %5167 = vdwg.mxu0
      %v5170 = vcombine.low %v5164, %v5166
      %5172 = vst [vmem:[%s305] sm:$0x77] %v5170
      %p5173 = scmp.lt.s32.totalorder %s19, 1
      %s5174 = scalar_select %p5173, %s19, 1
      %s5175 = smul.addr %s5174, 2
      %s5176 = smul.addr %s5175, 4
      %s5177 = scalar_lea.vmem %s8, %s5176
      // Predicated region
      $region53: #{tpu_custom_call.1} parent=51 // pred_check
        %p5178 = pneg %p210
      $region54: #{tpu_custom_call.1} parent=51 // pred_check_branch
        %5180 = sbr.rel (%p5178) target = $region56
      $region55: #{tpu_custom_call.1} parent=51 // pred_region
        _
      $region56: #{tpu_custom_call.1} parent=51 // pred_fallthru
        _
    $region52: #{tpu_custom_call.1} parent=5 // pred_fallthru
      _
    %p5181 = scmp.le.s32.totalorder 2, %s14
    // Predicated region
    $region57: #{tpu_custom_call.1} parent=5 // pred_check
      %p5182 = pneg %p5181
    $region58: #{tpu_custom_call.1} parent=5 // pred_check_branch
      %5184 = sbr.rel (%p5182) target = $region60
    $region59: #{tpu_custom_call.1} parent=5 // pred_region
      %s5185 = ssub.s32 %s14, 2
      // Predicated region
      $region61: #{tpu_custom_call.1} parent=59 // pred_check
        %p5186 = pneg %p216
      $region62: #{tpu_custom_call.1} parent=59 // pred_check_branch
        %5188 = sbr.rel (%p5186) target = $region64
      $region63: #{tpu_custom_call.1} parent=59 // pred_region
        %p5189 = scmp.lt.s32.totalorder %s20, 1
        %s5190 = scalar_select %p5189, %s20, 1
        %s5191 = smul.addr %s5190, 2
        %s5192 = smul.addr %s5191, 4
        %s5193 = scalar_lea.vmem %s8, %s5192
      $region64: #{tpu_custom_call.1} parent=59 // pred_fallthru
        _
    $region60: #{tpu_custom_call.1} parent=5 // pred_fallthru
      _
  $region6: #{tpu_custom_call.1} parent=0 // loop_footer
    %s18 = sadd.s32 1, %s14
  $region7: #{tpu_custom_call.1} parent=0 // loop_footer_branch
    %13 = sbr.rel target = $region3
  $region8: #{tpu_custom_call.1} parent=0 // loop_exit
    _

</llo_original>
